<compile_context>
chip_gen: v7x
topology: tpu7x:2x2x1
jax: 0.10.0
libtpu: 0.0.40
codegen_flags: <defaults>
</compile_context>

<pallas_src>
import numpy as np

import jax
import jax.numpy as jnp
from jax.experimental import pallas as pl
from jax.experimental.pallas import tpu as pltpu  # noqa: F401  (TPU backend)

# ----------------------------- configuration --------------------------------
B = 2                  # batch of graphs
N_NODES = 16           # padded nodes per graph (== max_len of the reference)
INPUT_DIM = 16
OUTPUT_DIM = 32
MAX_EDGE_TYPES = 3
NUM_STEPS = 6
CONCAT_DIM = INPUT_DIM + OUTPUT_DIM       # 48
PACK_DIM = OUTPUT_DIM + CONCAT_DIM        # 80 : [y-pipeline | z-pipeline] slab

# PyTorch Conv1d / MaxPool1d output lengths (no padding), per graph
L1 = N_NODES - 2                      # Conv1d(k=3)               -> 14
LP1 = (L1 - 3) // 2 + 1               # MaxPool1d(3, stride=2)    -> 6
LP2 = (LP1 - 2) // 2 + 1              # MaxPool1d(2, stride=2)    -> 3


# --------------------------- fused forward kernel ---------------------------
def devign_fused_kernel(feat_ref, adj_ref, mask_ref,
                        we_ref, be_ref, wga_ref, wgh_ref, bgru_ref,
                        w1_ref, b1_ref, w2_ref, b2_ref,
                        wh_ref, bh_ref, s1_ref, s2_ref, msum_ref,
                        res_ref, avg_ref, temp_ref):
    f32 = jnp.float32
    D = OUTPUT_DIM
    E = MAX_EDGE_TYPES
    N = N_NODES
    BN = B * N

    mask = mask_ref[...]                                   # (BN, 1) node validity
    x = feat_ref[...] * mask                               # (BN, input_dim)

    # ---------------- GGNN (DGL GatedGraphConv semantics) -------------------
    # initial hidden state: features zero-padded to out_feats
    h = jnp.concatenate([x, jnp.zeros((BN, D - INPUT_DIM), f32)], axis=1)

    # batch-block-diagonal adjacency per edge type, built once (outside the
    # step loop).  adj[b, e, dst, src] -> A_e (BN, BN); aggregation is then a
    # plain matmul over the whole batch.
    zero_blk = jnp.zeros((N, N), f32)
    a_bd = []
    for e in range(E):
        rows = []
        for b in range(B):
            blocks = [adj_ref[b, e] if bb == b else zero_blk for bb in range(B)]
            rows.append(jnp.concatenate(blocks, axis=1))
        a_bd.append(jnp.concatenate(rows, axis=0))         # (BN, BN)

    we = we_ref[...]        # (D, E*D)  columns e*D:(e+1)*D hold W_e^T
    be = be_ref[...]        # (1, E*D)
    wga = wga_ref[...]      # (D, 4D)   a @ wga -> [r_i | z_i | n_i | 0]
    wgh = wgh_ref[...]      # (D, 4D)   h @ wgh -> [r_h | z_h | 0 | n_h]
    bg = bgru_ref[...]      # (1, 4D)

    def ggnn_step(_, hc):
        # messages for every edge type in a single MXU dot
        msg = jnp.dot(hc, we, preferred_element_type=f32) + be        # (BN, E*D)
        # aggregate over in-edges; batch folded into the block-diag adjacency
        a = jnp.dot(a_bd[0], msg[:, 0:D], preferred_element_type=f32)
        for e in range(1, E):
            a = a + jnp.dot(a_bd[e], msg[:, e * D:(e + 1) * D],
                            preferred_element_type=f32)
        # fused torch.nn.GRUCell: two dots (no per-step concat), 128-lane out
        g = (jnp.dot(a, wga, preferred_element_type=f32)
             + jnp.dot(hc, wgh, preferred_element_type=f32) + bg)     # (BN, 4D)
        r = jax.nn.sigmoid(g[:, 0:D])
        z = jax.nn.sigmoid(g[:, D:2 * D])
        n = jnp.tanh(g[:, 2 * D:3 * D] + r * g[:, 3 * D:4 * D])
        return (1.0 - z) * n + z * hc

    h = jax.lax.fori_loop(0, NUM_STEPS, ggnn_step, h, unroll=True)
    # padded node rows become exact zeros (matches dgl.unbatch + zero-pad)
    h = h * mask

    # -------- conv/pool readout: y and z pipelines packed side-by-side ------
    # packed columns [0:D)       -> h   (conv_l1 / conv_l2, output_dim channels)
    # packed columns [D:D+Dc)    -> c=[h|x] (conv_*_for_concat, concat_dim ch.)
    packed = jnp.concatenate([h, h, x], axis=1)                        # (BN, 80)

    # Conv1d(k=3) + ReLU as three shifted matmuls over the flattened batch.
    lc = BN - 2
    c1 = (jnp.dot(packed[0:lc], w1_ref[0], preferred_element_type=f32)
          + jnp.dot(packed[1:lc + 1], w1_ref[1], preferred_element_type=f32)
          + jnp.dot(packed[2:lc + 2], w1_ref[2], preferred_element_type=f32)
          + b1_ref[...])
    c1 = jnp.maximum(c1, 0.0)                                          # ReLU

    # MaxPool1d(3, stride=2): running max at full rate (VPU), then stride-2 /
    # per-graph row selection as a constant 0/1 matmul (rows crossing graph
    # boundaries are never selected).
    m1 = jnp.maximum(jnp.maximum(c1[0:lc - 2], c1[1:lc - 1]), c1[2:lc])
    p1 = jnp.dot(s1_ref[...], m1, preferred_element_type=f32)          # (B*LP1, 80)

    # Conv1d(k=1) + ReLU
    c2 = jnp.maximum(
        jnp.dot(p1, w2_ref[...], preferred_element_type=f32) + b2_ref[...], 0.0)

    # MaxPool1d(2, stride=2)
    lm2 = B * LP1 - 1
    m2 = jnp.maximum(c2[0:lm2], c2[1:lm2 + 1])
    p2 = jnp.dot(s2_ref[...], m2, preferred_element_type=f32)          # (B*LP2, 80)

    # ------------------- head: mlp_y * mlp_z, mean, sums --------------------
    yz = jnp.dot(p2, wh_ref[...], preferred_element_type=f32) + bh_ref[...]  # (B*LP2, 2)
    before_avg = yz[:, 0:1] * yz[:, 1:2]                               # (B*LP2, 1)

    msum = msum_ref[...]                                               # (B, B*LP2)
    temp_ref[...] = jnp.dot(msum, p2, preferred_element_type=f32)      # (B, 80)
    avg = jnp.dot(msum, before_avg, preferred_element_type=f32) * (1.0 / LP2)
    avg_ref[...] = avg
    res_ref[...] = jax.nn.sigmoid(avg)


# ------------------------------ forward wrapper ------------------------------
@jax.jit
def devign_forward(features, adj, node_mask, q):
    # features: (B, N, input_dim); adj: (B, E, N, N) with adj[b, e, dst, src];
    # node_mask: (B*N, 1). The reshape below is a layout-preserving bitcast.
    feat2d = features.reshape(B * N_NODES, INPUT_DIM)
    out_shapes = (
        jax.ShapeDtypeStruct((B, 1), jnp.float32),                        # sigmoid(avg)
        jax.ShapeDtypeStruct((B, 1), jnp.float32),                        # avg
        jax.ShapeDtypeStruct((B, OUTPUT_DIM + CONCAT_DIM), jnp.float32),  # temp
    )
    res, avg, temp = pl.pallas_call(
        devign_fused_kernel,
        out_shape=out_shapes,
    )(feat2d, adj, node_mask,
      q["we_all"], q["be_all"], q["w_gru_a"], q["w_gru_h"], q["b_gru"],
      q["w1p"], q["b1p"], q["w2p"], q["b2p"],
      q["wh"], q["bh"], q["s1"], q["s2"], q["msum"])
    result = res[:, 0]                      # sigmoid(avg).squeeze(-1)
    return result, avg, temp


# ----------------------- parameters (PyTorch layouts) ------------------------
def init_params_torch_layout(key):
    """Synthetic parameters with the same layouts as the nn.Module state_dict."""
    D, E, Din, Dc = OUTPUT_DIM, MAX_EDGE_TYPES, INPUT_DIM, CONCAT_DIM
    ks = iter(jax.random.split(key, 18))
    s = 0.05
    f32 = jnp.float32
    p = {}
    p["ggnn_linears_w"] = jax.random.normal(next(ks), (E, D, D), f32) * s   # (out,in)
    p["ggnn_linears_b"] = jax.random.normal(next(ks), (E, D), f32) * s
    p["gru_w_ih"] = jax.random.normal(next(ks), (3 * D, D), f32) * s        # rows [r|z|n]
    p["gru_w_hh"] = jax.random.normal(next(ks), (3 * D, D), f32) * s
    p["gru_b_ih"] = jax.random.normal(next(ks), (3 * D,), f32) * s
    p["gru_b_hh"] = jax.random.normal(next(ks), (3 * D,), f32) * s
    p["conv_l1_w"] = jax.random.normal(next(ks), (D, D, 3), f32) * s        # (out,in,k)
    p["conv_l1_b"] = jax.random.normal(next(ks), (D,), f32) * s
    p["conv_l2_w"] = jax.random.normal(next(ks), (D, D, 1), f32) * s
    p["conv_l2_b"] = jax.random.normal(next(ks), (D,), f32) * s
    p["conv_l1c_w"] = jax.random.normal(next(ks), (Dc, Dc, 3), f32) * s
    p["conv_l1c_b"] = jax.random.normal(next(ks), (Dc,), f32) * s
    p["conv_l2c_w"] = jax.random.normal(next(ks), (Dc, Dc, 1), f32) * s
    p["conv_l2c_b"] = jax.random.normal(next(ks), (Dc,), f32) * s
    p["mlp_y_w"] = jax.random.normal(next(ks), (1, D), f32) * s
    p["mlp_y_b"] = jax.random.normal(next(ks), (1,), f32) * s
    p["mlp_z_w"] = jax.random.normal(next(ks), (1, Dc), f32) * s
    p["mlp_z_b"] = jax.random.normal(next(ks), (1,), f32) * s
    return p


def make_selectors():
    """Constant 0/1 selection matrices (stride-2 pooling + per-graph reductions)."""
    lm1 = B * N_NODES - 4
    s1 = np.zeros((B * LP1, lm1), np.float32)
    for b in range(B):
        for i in range(LP1):
            s1[b * LP1 + i, b * N_NODES + 2 * i] = 1.0
    lm2 = B * LP1 - 1
    s2 = np.zeros((B * LP2, lm2), np.float32)
    for b in range(B):
        for i in range(LP2):
            s2[b * LP2 + i, b * LP1 + 2 * i] = 1.0
    msum = np.zeros((B, B * LP2), np.float32)
    for b in range(B):
        msum[b, b * LP2:(b + 1) * LP2] = 1.0
    return jnp.asarray(s1), jnp.asarray(s2), jnp.asarray(msum)


def pack_params(p):
    """Pack PyTorch-layout params into the fused kernel layouts (done once)."""
    D, E, Dc = OUTPUT_DIM, MAX_EDGE_TYPES, CONCAT_DIM
    f32 = jnp.float32
    q = {}
    # GGNN edge-type linears -> one (D, E*D) weight: msg = h @ we_all + be_all
    q["we_all"] = jnp.concatenate([p["ggnn_linears_w"][e].T for e in range(E)], axis=1)
    q["be_all"] = p["ggnn_linears_b"].reshape(1, E * D)
    # GRUCell -> two (D, 4D) gate weights (no in-kernel concat needed):
    #   a @ w_gru_a + h @ w_gru_h + b_gru = [r_pre | z_pre | gi_n | gh_n]
    wih, whh = p["gru_w_ih"], p["gru_w_hh"]
    zdd = jnp.zeros((D, D), f32)
    q["w_gru_a"] = jnp.concatenate(
        [wih[0:D].T, wih[D:2 * D].T, wih[2 * D:3 * D].T, zdd], axis=1)
    q["w_gru_h"] = jnp.concatenate(
        [whh[0:D].T, whh[D:2 * D].T, zdd, whh[2 * D:3 * D].T], axis=1)
    bih, bhh = p["gru_b_ih"], p["gru_b_hh"]
    q["b_gru"] = jnp.concatenate(
        [bih[0:2 * D] + bhh[0:2 * D], bih[2 * D:3 * D], bhh[2 * D:3 * D]])[None, :]

    # conv pipelines packed side-by-side: block-diagonal per-tap (in, out) weights
    def blockdiag(wy, wz):
        top = jnp.concatenate([wy, jnp.zeros((D, Dc), f32)], axis=1)
        bot = jnp.concatenate([jnp.zeros((Dc, D), f32), wz], axis=1)
        return jnp.concatenate([top, bot], axis=0)

    q["w1p"] = jnp.stack(
        [blockdiag(p["conv_l1_w"][:, :, k].T, p["conv_l1c_w"][:, :, k].T)
         for k in range(3)], axis=0)                                   # (3, 80, 80)
    q["b1p"] = jnp.concatenate([p["conv_l1_b"], p["conv_l1c_b"]])[None, :]
    q["w2p"] = blockdiag(p["conv_l2_w"][:, :, 0].T, p["conv_l2c_w"][:, :, 0].T)
    q["b2p"] = jnp.concatenate([p["conv_l2_b"], p["conv_l2c_b"]])[None, :]

    # mlp_y / mlp_z folded into one (80, 2) matmul
    wh = jnp.zeros((PACK_DIM, 2), f32)
    wh = wh.at[0:D, 0].set(p["mlp_y_w"][0])
    wh = wh.at[D:PACK_DIM, 1].set(p["mlp_z_w"][0])
    q["wh"] = wh
    q["bh"] = jnp.concatenate([p["mlp_y_b"], p["mlp_z_b"]])[None, :]

    q["s1"], q["s2"], q["msum"] = make_selectors()
    return q


# ---------------------------------- main -------------------------------------
if __name__ == "__main__":
    key = jax.random.PRNGKey(0)
    k_feat, k_adj, k_param = jax.random.split(key, 3)

    # per-graph real node counts (graph 1 is shorter -> exercises the mask)
    num_nodes = jnp.array([N_NODES, N_NODES - 4], dtype=jnp.int32)
    node_mask_bn = (jnp.arange(N_NODES)[None, :] < num_nodes[:, None]).astype(jnp.float32)

    features = jax.random.normal(k_feat, (B, N_NODES, INPUT_DIM), jnp.float32)
    features = features * node_mask_bn[:, :, None]        # padded nodes have no features

    # dense per-edge-type adjacency: adj[b, e, dst, src] = 1.0 iff graph b has a
    # type-e edge src -> dst (dense stand-in for the DGL batched graph)
    adj = jax.random.bernoulli(
        k_adj, 0.25, (B, MAX_EDGE_TYPES, N_NODES, N_NODES)).astype(jnp.float32)
    adj = adj * node_mask_bn[:, None, :, None] * node_mask_bn[:, None, None, :]

    params_torch = init_params_torch_layout(k_param)
    q = pack_params(params_torch)
    node_mask = node_mask_bn.reshape(B * N_NODES, 1)

    result, avg, temp = devign_forward(features, adj, node_mask, q)
    jax.block_until_ready((result, avg, temp))

    assert result.shape == (B,)
    assert avg.shape == (B, 1)
    assert temp.shape == (B, OUTPUT_DIM + CONCAT_DIM)
    assert bool(jnp.all(jnp.isfinite(result)))
    assert bool(jnp.all(jnp.isfinite(avg)))
    assert bool(jnp.all(jnp.isfinite(temp)))
    assert bool(jnp.all((result > 0.0) & (result < 1.0)))   # sigmoid range
    print("KERNEL_OK")
</pallas_src>

<mosaic_0001>
module attributes {stable_mosaic.version = 11 : i64} {
  func.func @devign_fused_kernel(%arg0: memref<32x16xf32, #tpu.memory_space<vmem>>, %arg1: memref<2x3x16x16xf32, #tpu.memory_space<vmem>>, %arg2: memref<32x1xf32, #tpu.memory_space<vmem>>, %arg3: memref<32x96xf32, #tpu.memory_space<vmem>>, %arg4: memref<1x96xf32, #tpu.memory_space<vmem>>, %arg5: memref<32x128xf32, #tpu.memory_space<vmem>>, %arg6: memref<32x128xf32, #tpu.memory_space<vmem>>, %arg7: memref<1x128xf32, #tpu.memory_space<vmem>>, %arg8: memref<3x80x80xf32, #tpu.memory_space<vmem>>, %arg9: memref<1x80xf32, #tpu.memory_space<vmem>>, %arg10: memref<80x80xf32, #tpu.memory_space<vmem>>, %arg11: memref<1x80xf32, #tpu.memory_space<vmem>>, %arg12: memref<80x2xf32, #tpu.memory_space<vmem>>, %arg13: memref<1x2xf32, #tpu.memory_space<vmem>>, %arg14: memref<12x28xf32, #tpu.memory_space<vmem>>, %arg15: memref<6x11xf32, #tpu.memory_space<vmem>>, %arg16: memref<2x6xf32, #tpu.memory_space<vmem>>, %arg17: memref<2x1xf32, #tpu.memory_space<vmem>>, %arg18: memref<2x1xf32, #tpu.memory_space<vmem>>, %arg19: memref<2x80xf32, #tpu.memory_space<vmem>>) attributes {dimension_semantics = [], scalar_prefetch = 0 : i64, scratch_operands = 0 : i64, tpu.core_type = #tpu.core_type<tc>} {
    %c0 = arith.constant 0 : index
    %c0_0 = arith.constant 0 : index
    %0 = vector.load %arg2[%c0, %c0_0] : memref<32x1xf32, #tpu.memory_space<vmem>>, vector<32x1xf32>
    %c0_1 = arith.constant 0 : index
    %c0_2 = arith.constant 0 : index
    %1 = vector.load %arg0[%c0_1, %c0_2] : memref<32x16xf32, #tpu.memory_space<vmem>>, vector<32x16xf32>
    %2 = vector.broadcast %0 : vector<32x1xf32> to vector<32x16xf32>
    %3 = arith.mulf %1, %2 : vector<32x16xf32>
    %cst = arith.constant 0.000000e+00 : f32
    %4 = vector.broadcast %cst : f32 to vector<32x16xf32>
    %5 = tpu.concatenate %3, %4 in 1 : vector<32x16xf32>, vector<32x16xf32> -> vector<32x32xf32>
    %cst_3 = arith.constant 0.000000e+00 : f32
    %6 = vector.broadcast %cst_3 : f32 to vector<16x16xf32>
    %c0_4 = arith.constant 0 : index
    %c0_5 = arith.constant 0 : index
    %c0_6 = arith.constant 0 : index
    %c0_7 = arith.constant 0 : index
    %7 = vector.load %arg1[%c0_4, %c0_5, %c0_6, %c0_7] : memref<2x3x16x16xf32, #tpu.memory_space<vmem>>, vector<1x1x16x16xf32>
    %8 = vector.shape_cast %7 : vector<1x1x16x16xf32> to vector<16x16xf32>
    %9 = tpu.concatenate %8, %6 in 1 : vector<16x16xf32>, vector<16x16xf32> -> vector<16x32xf32>
    %c1 = arith.constant 1 : index
    %c0_8 = arith.constant 0 : index
    %c0_9 = arith.constant 0 : index
    %c0_10 = arith.constant 0 : index
    %10 = vector.load %arg1[%c1, %c0_8, %c0_9, %c0_10] : memref<2x3x16x16xf32, #tpu.memory_space<vmem>>, vector<1x1x16x16xf32>
    %11 = vector.shape_cast %10 : vector<1x1x16x16xf32> to vector<16x16xf32>
    %12 = tpu.concatenate %6, %11 in 1 : vector<16x16xf32>, vector<16x16xf32> -> vector<16x32xf32>
    %13 = tpu.concatenate %9, %12 in 0 : vector<16x32xf32>, vector<16x32xf32> -> vector<32x32xf32>
    %c0_11 = arith.constant 0 : index
    %c1_12 = arith.constant 1 : index
    %c0_13 = arith.constant 0 : index
    %c0_14 = arith.constant 0 : index
    %14 = vector.load %arg1[%c0_11, %c1_12, %c0_13, %c0_14] : memref<2x3x16x16xf32, #tpu.memory_space<vmem>>, vector<1x1x16x16xf32>
    %15 = vector.shape_cast %14 : vector<1x1x16x16xf32> to vector<16x16xf32>
    %16 = tpu.concatenate %15, %6 in 1 : vector<16x16xf32>, vector<16x16xf32> -> vector<16x32xf32>
    %c1_15 = arith.constant 1 : index
    %c1_16 = arith.constant 1 : index
    %c0_17 = arith.constant 0 : index
    %c0_18 = arith.constant 0 : index
    %17 = vector.load %arg1[%c1_15, %c1_16, %c0_17, %c0_18] : memref<2x3x16x16xf32, #tpu.memory_space<vmem>>, vector<1x1x16x16xf32>
    %18 = vector.shape_cast %17 : vector<1x1x16x16xf32> to vector<16x16xf32>
    %19 = tpu.concatenate %6, %18 in 1 : vector<16x16xf32>, vector<16x16xf32> -> vector<16x32xf32>
    %20 = tpu.concatenate %16, %19 in 0 : vector<16x32xf32>, vector<16x32xf32> -> vector<32x32xf32>
    %c0_19 = arith.constant 0 : index
    %c2 = arith.constant 2 : index
    %c0_20 = arith.constant 0 : index
    %c0_21 = arith.constant 0 : index
    %21 = vector.load %arg1[%c0_19, %c2, %c0_20, %c0_21] : memref<2x3x16x16xf32, #tpu.memory_space<vmem>>, vector<1x1x16x16xf32>
    %22 = vector.shape_cast %21 : vector<1x1x16x16xf32> to vector<16x16xf32>
    %23 = tpu.concatenate %22, %6 in 1 : vector<16x16xf32>, vector<16x16xf32> -> vector<16x32xf32>
    %c1_22 = arith.constant 1 : index
    %c2_23 = arith.constant 2 : index
    %c0_24 = arith.constant 0 : index
    %c0_25 = arith.constant 0 : index
    %24 = vector.load %arg1[%c1_22, %c2_23, %c0_24, %c0_25] : memref<2x3x16x16xf32, #tpu.memory_space<vmem>>, vector<1x1x16x16xf32>
    %25 = vector.shape_cast %24 : vector<1x1x16x16xf32> to vector<16x16xf32>
    %26 = tpu.concatenate %6, %25 in 1 : vector<16x16xf32>, vector<16x16xf32> -> vector<16x32xf32>
    %27 = tpu.concatenate %23, %26 in 0 : vector<16x32xf32>, vector<16x32xf32> -> vector<32x32xf32>
    %c0_26 = arith.constant 0 : index
    %c0_27 = arith.constant 0 : index
    %28 = vector.load %arg3[%c0_26, %c0_27] : memref<32x96xf32, #tpu.memory_space<vmem>>, vector<32x96xf32>
    %c0_28 = arith.constant 0 : index
    %c0_29 = arith.constant 0 : index
    %29 = vector.load %arg4[%c0_28, %c0_29] : memref<1x96xf32, #tpu.memory_space<vmem>>, vector<1x96xf32>
    %c0_30 = arith.constant 0 : index
    %c0_31 = arith.constant 0 : index
    %30 = vector.load %arg5[%c0_30, %c0_31] : memref<32x128xf32, #tpu.memory_space<vmem>>, vector<32x128xf32>
    %c0_32 = arith.constant 0 : index
    %c0_33 = arith.constant 0 : index
    %31 = vector.load %arg6[%c0_32, %c0_33] : memref<32x128xf32, #tpu.memory_space<vmem>>, vector<32x128xf32>
    %c0_34 = arith.constant 0 : index
    %c0_35 = arith.constant 0 : index
    %32 = vector.load %arg7[%c0_34, %c0_35] : memref<1x128xf32, #tpu.memory_space<vmem>>, vector<1x128xf32>
    %c0_i32 = arith.constant 0 : i32
    %cst_36 = arith.constant dense<0.000000e+00> : vector<32x96xf32>
    %33 = tpu.matmul %5, %28, %cst_36 {dimension_numbers = #tpu.dot_dimension_numbers<[1], [0], [0], [1], [0, 0, 1, 1], [], []>} : vector<32x32xf32>, vector<32x96xf32>, vector<32x96xf32> -> vector<32x96xf32>
    %34 = vector.broadcast %29 : vector<1x96xf32> to vector<32x96xf32>
    %35 = arith.addf %33, %34 : vector<32x96xf32>
    %36 = vector.extract_strided_slice %35 {offsets = [0, 0], sizes = [32, 32], strides = [1, 1]} : vector<32x96xf32> to vector<32x32xf32>
    %cst_37 = arith.constant dense<0.000000e+00> : vector<32x32xf32>
    %37 = tpu.matmul %13, %36, %cst_37 {dimension_numbers = #tpu.dot_dimension_numbers<[1], [0], [0], [1], [0, 0, 1, 1], [], []>} : vector<32x32xf32>, vector<32x32xf32>, vector<32x32xf32> -> vector<32x32xf32>
    %38 = vector.extract_strided_slice %35 {offsets = [0, 32], sizes = [32, 32], strides = [1, 1]} : vector<32x96xf32> to vector<32x32xf32>
    %cst_38 = arith.constant dense<0.000000e+00> : vector<32x32xf32>
    %39 = tpu.matmul %20, %38, %cst_38 {dimension_numbers = #tpu.dot_dimension_numbers<[1], [0], [0], [1], [0, 0, 1, 1], [], []>} : vector<32x32xf32>, vector<32x32xf32>, vector<32x32xf32> -> vector<32x32xf32>
    %40 = arith.addf %37, %39 : vector<32x32xf32>
    %41 = vector.extract_strided_slice %35 {offsets = [0, 64], sizes = [32, 32], strides = [1, 1]} : vector<32x96xf32> to vector<32x32xf32>
    %cst_39 = arith.constant dense<0.000000e+00> : vector<32x32xf32>
    %42 = tpu.matmul %27, %41, %cst_39 {dimension_numbers = #tpu.dot_dimension_numbers<[1], [0], [0], [1], [0, 0, 1, 1], [], []>} : vector<32x32xf32>, vector<32x32xf32>, vector<32x32xf32> -> vector<32x32xf32>
    %43 = arith.addf %40, %42 : vector<32x32xf32>
    %cst_40 = arith.constant dense<0.000000e+00> : vector<32x128xf32>
    %44 = tpu.matmul %43, %30, %cst_40 {dimension_numbers = #tpu.dot_dimension_numbers<[1], [0], [0], [1], [0, 0, 1, 1], [], []>} : vector<32x32xf32>, vector<32x128xf32>, vector<32x128xf32> -> vector<32x128xf32>
    %cst_41 = arith.constant dense<0.000000e+00> : vector<32x128xf32>
    %45 = tpu.matmul %5, %31, %cst_41 {dimension_numbers = #tpu.dot_dimension_numbers<[1], [0], [0], [1], [0, 0, 1, 1], [], []>} : vector<32x32xf32>, vector<32x128xf32>, vector<32x128xf32> -> vector<32x128xf32>
    %46 = arith.addf %44, %45 : vector<32x128xf32>
    %47 = vector.broadcast %32 : vector<1x128xf32> to vector<32x128xf32>
    %48 = arith.addf %46, %47 : vector<32x128xf32>
    %49 = vector.extract_strided_slice %48 {offsets = [0, 0], sizes = [32, 32], strides = [1, 1]} : vector<32x128xf32> to vector<32x32xf32>
    %50 = arith.negf %49 : vector<32x32xf32>
    %51 = math.exp %50 : vector<32x32xf32>
    %cst_42 = arith.constant 1.000000e+00 : f32
    %52 = vector.broadcast %cst_42 : f32 to vector<32x32xf32>
    %53 = arith.addf %52, %51 : vector<32x32xf32>
    %54 = arith.divf %52, %53 : vector<32x32xf32>
    %55 = vector.extract_strided_slice %48 {offsets = [0, 32], sizes = [32, 32], strides = [1, 1]} : vector<32x128xf32> to vector<32x32xf32>
    %56 = arith.negf %55 : vector<32x32xf32>
    %57 = math.exp %56 : vector<32x32xf32>
    %cst_43 = arith.constant 1.000000e+00 : f32
    %58 = vector.broadcast %cst_43 : f32 to vector<32x32xf32>
    %59 = arith.addf %58, %57 : vector<32x32xf32>
    %60 = arith.divf %58, %59 : vector<32x32xf32>
    %61 = vector.extract_strided_slice %48 {offsets = [0, 64], sizes = [32, 32], strides = [1, 1]} : vector<32x128xf32> to vector<32x32xf32>
    %62 = vector.extract_strided_slice %48 {offsets = [0, 96], sizes = [32, 32], strides = [1, 1]} : vector<32x128xf32> to vector<32x32xf32>
    %63 = arith.mulf %54, %62 : vector<32x32xf32>
    %64 = arith.addf %61, %63 : vector<32x32xf32>
    %65 = math.tanh %64 : vector<32x32xf32>
    %cst_44 = arith.constant 1.000000e+00 : f32
    %66 = vector.broadcast %cst_44 : f32 to vector<32x32xf32>
    %67 = arith.subf %66, %60 : vector<32x32xf32>
    %68 = arith.mulf %67, %65 : vector<32x32xf32>
    %69 = arith.mulf %60, %5 : vector<32x32xf32>
    %70 = arith.addf %68, %69 : vector<32x32xf32>
    %c1_i32 = arith.constant 1 : i32
    %cst_45 = arith.constant dense<0.000000e+00> : vector<32x96xf32>
    %71 = tpu.matmul %70, %28, %cst_45 {dimension_numbers = #tpu.dot_dimension_numbers<[1], [0], [0], [1], [0, 0, 1, 1], [], []>} : vector<32x32xf32>, vector<32x96xf32>, vector<32x96xf32> -> vector<32x96xf32>
    %72 = vector.broadcast %29 : vector<1x96xf32> to vector<32x96xf32>
    %73 = arith.addf %71, %72 : vector<32x96xf32>
    %74 = vector.extract_strided_slice %73 {offsets = [0, 0], sizes = [32, 32], strides = [1, 1]} : vector<32x96xf32> to vector<32x32xf32>
    %cst_46 = arith.constant dense<0.000000e+00> : vector<32x32xf32>
    %75 = tpu.matmul %13, %74, %cst_46 {dimension_numbers = #tpu.dot_dimension_numbers<[1], [0], [0], [1], [0, 0, 1, 1], [], []>} : vector<32x32xf32>, vector<32x32xf32>, vector<32x32xf32> -> vector<32x32xf32>
    %76 = vector.extract_strided_slice %73 {offsets = [0, 32], sizes = [32, 32], strides = [1, 1]} : vector<32x96xf32> to vector<32x32xf32>
    %cst_47 = arith.constant dense<0.000000e+00> : vector<32x32xf32>
    %77 = tpu.matmul %20, %76, %cst_47 {dimension_numbers = #tpu.dot_dimension_numbers<[1], [0], [0], [1], [0, 0, 1, 1], [], []>} : vector<32x32xf32>, vector<32x32xf32>, vector<32x32xf32> -> vector<32x32xf32>
    %78 = arith.addf %75, %77 : vector<32x32xf32>
    %79 = vector.extract_strided_slice %73 {offsets = [0, 64], sizes = [32, 32], strides = [1, 1]} : vector<32x96xf32> to vector<32x32xf32>
    %cst_48 = arith.constant dense<0.000000e+00> : vector<32x32xf32>
    %80 = tpu.matmul %27, %79, %cst_48 {dimension_numbers = #tpu.dot_dimension_numbers<[1], [0], [0], [1], [0, 0, 1, 1], [], []>} : vector<32x32xf32>, vector<32x32xf32>, vector<32x32xf32> -> vector<32x32xf32>
    %81 = arith.addf %78, %80 : vector<32x32xf32>
    %cst_49 = arith.constant dense<0.000000e+00> : vector<32x128xf32>
    %82 = tpu.matmul %81, %30, %cst_49 {dimension_numbers = #tpu.dot_dimension_numbers<[1], [0], [0], [1], [0, 0, 1, 1], [], []>} : vector<32x32xf32>, vector<32x128xf32>, vector<32x128xf32> -> vector<32x128xf32>
    %cst_50 = arith.constant dense<0.000000e+00> : vector<32x128xf32>
    %83 = tpu.matmul %70, %31, %cst_50 {dimension_numbers = #tpu.dot_dimension_numbers<[1], [0], [0], [1], [0, 0, 1, 1], [], []>} : vector<32x32xf32>, vector<32x128xf32>, vector<32x128xf32> -> vector<32x128xf32>
    %84 = arith.addf %82, %83 : vector<32x128xf32>
    %85 = vector.broadcast %32 : vector<1x128xf32> to vector<32x128xf32>
    %86 = arith.addf %84, %85 : vector<32x128xf32>
    %87 = vector.extract_strided_slice %86 {offsets = [0, 0], sizes = [32, 32], strides = [1, 1]} : vector<32x128xf32> to vector<32x32xf32>
    %88 = arith.negf %87 : vector<32x32xf32>
    %89 = math.exp %88 : vector<32x32xf32>
    %cst_51 = arith.constant 1.000000e+00 : f32
    %90 = vector.broadcast %cst_51 : f32 to vector<32x32xf32>
    %91 = arith.addf %90, %89 : vector<32x32xf32>
    %92 = arith.divf %90, %91 : vector<32x32xf32>
    %93 = vector.extract_strided_slice %86 {offsets = [0, 32], sizes = [32, 32], strides = [1, 1]} : vector<32x128xf32> to vector<32x32xf32>
    %94 = arith.negf %93 : vector<32x32xf32>
    %95 = math.exp %94 : vector<32x32xf32>
    %cst_52 = arith.constant 1.000000e+00 : f32
    %96 = vector.broadcast %cst_52 : f32 to vector<32x32xf32>
    %97 = arith.addf %96, %95 : vector<32x32xf32>
    %98 = arith.divf %96, %97 : vector<32x32xf32>
    %99 = vector.extract_strided_slice %86 {offsets = [0, 64], sizes = [32, 32], strides = [1, 1]} : vector<32x128xf32> to vector<32x32xf32>
    %100 = vector.extract_strided_slice %86 {offsets = [0, 96], sizes = [32, 32], strides = [1, 1]} : vector<32x128xf32> to vector<32x32xf32>
    %101 = arith.mulf %92, %100 : vector<32x32xf32>
    %102 = arith.addf %99, %101 : vector<32x32xf32>
    %103 = math.tanh %102 : vector<32x32xf32>
    %cst_53 = arith.constant 1.000000e+00 : f32
    %104 = vector.broadcast %cst_53 : f32 to vector<32x32xf32>
    %105 = arith.subf %104, %98 : vector<32x32xf32>
    %106 = arith.mulf %105, %103 : vector<32x32xf32>
    %107 = arith.mulf %98, %70 : vector<32x32xf32>
    %108 = arith.addf %106, %107 : vector<32x32xf32>
    %c2_i32 = arith.constant 2 : i32
    %cst_54 = arith.constant dense<0.000000e+00> : vector<32x96xf32>
    %109 = tpu.matmul %108, %28, %cst_54 {dimension_numbers = #tpu.dot_dimension_numbers<[1], [0], [0], [1], [0, 0, 1, 1], [], []>} : vector<32x32xf32>, vector<32x96xf32>, vector<32x96xf32> -> vector<32x96xf32>
    %110 = vector.broadcast %29 : vector<1x96xf32> to vector<32x96xf32>
    %111 = arith.addf %109, %110 : vector<32x96xf32>
    %112 = vector.extract_strided_slice %111 {offsets = [0, 0], sizes = [32, 32], strides = [1, 1]} : vector<32x96xf32> to vector<32x32xf32>
    %cst_55 = arith.constant dense<0.000000e+00> : vector<32x32xf32>
    %113 = tpu.matmul %13, %112, %cst_55 {dimension_numbers = #tpu.dot_dimension_numbers<[1], [0], [0], [1], [0, 0, 1, 1], [], []>} : vector<32x32xf32>, vector<32x32xf32>, vector<32x32xf32> -> vector<32x32xf32>
    %114 = vector.extract_strided_slice %111 {offsets = [0, 32], sizes = [32, 32], strides = [1, 1]} : vector<32x96xf32> to vector<32x32xf32>
    %cst_56 = arith.constant dense<0.000000e+00> : vector<32x32xf32>
    %115 = tpu.matmul %20, %114, %cst_56 {dimension_numbers = #tpu.dot_dimension_numbers<[1], [0], [0], [1], [0, 0, 1, 1], [], []>} : vector<32x32xf32>, vector<32x32xf32>, vector<32x32xf32> -> vector<32x32xf32>
    %116 = arith.addf %113, %115 : vector<32x32xf32>
    %117 = vector.extract_strided_slice %111 {offsets = [0, 64], sizes = [32, 32], strides = [1, 1]} : vector<32x96xf32> to vector<32x32xf32>
    %cst_57 = arith.constant dense<0.000000e+00> : vector<32x32xf32>
    %118 = tpu.matmul %27, %117, %cst_57 {dimension_numbers = #tpu.dot_dimension_numbers<[1], [0], [0], [1], [0, 0, 1, 1], [], []>} : vector<32x32xf32>, vector<32x32xf32>, vector<32x32xf32> -> vector<32x32xf32>
    %119 = arith.addf %116, %118 : vector<32x32xf32>
    %cst_58 = arith.constant dense<0.000000e+00> : vector<32x128xf32>
    %120 = tpu.matmul %119, %30, %cst_58 {dimension_numbers = #tpu.dot_dimension_numbers<[1], [0], [0], [1], [0, 0, 1, 1], [], []>} : vector<32x32xf32>, vector<32x128xf32>, vector<32x128xf32> -> vector<32x128xf32>
    %cst_59 = arith.constant dense<0.000000e+00> : vector<32x128xf32>
    %121 = tpu.matmul %108, %31, %cst_59 {dimension_numbers = #tpu.dot_dimension_numbers<[1], [0], [0], [1], [0, 0, 1, 1], [], []>} : vector<32x32xf32>, vector<32x128xf32>, vector<32x128xf32> -> vector<32x128xf32>
    %122 = arith.addf %120, %121 : vector<32x128xf32>
    %123 = vector.broadcast %32 : vector<1x128xf32> to vector<32x128xf32>
    %124 = arith.addf %122, %123 : vector<32x128xf32>
    %125 = vector.extract_strided_slice %124 {offsets = [0, 0], sizes = [32, 32], strides = [1, 1]} : vector<32x128xf32> to vector<32x32xf32>
    %126 = arith.negf %125 : vector<32x32xf32>
    %127 = math.exp %126 : vector<32x32xf32>
    %cst_60 = arith.constant 1.000000e+00 : f32
    %128 = vector.broadcast %cst_60 : f32 to vector<32x32xf32>
    %129 = arith.addf %128, %127 : vector<32x32xf32>
    %130 = arith.divf %128, %129 : vector<32x32xf32>
    %131 = vector.extract_strided_slice %124 {offsets = [0, 32], sizes = [32, 32], strides = [1, 1]} : vector<32x128xf32> to vector<32x32xf32>
    %132 = arith.negf %131 : vector<32x32xf32>
    %133 = math.exp %132 : vector<32x32xf32>
    %cst_61 = arith.constant 1.000000e+00 : f32
    %134 = vector.broadcast %cst_61 : f32 to vector<32x32xf32>
    %135 = arith.addf %134, %133 : vector<32x32xf32>
    %136 = arith.divf %134, %135 : vector<32x32xf32>
    %137 = vector.extract_strided_slice %124 {offsets = [0, 64], sizes = [32, 32], strides = [1, 1]} : vector<32x128xf32> to vector<32x32xf32>
    %138 = vector.extract_strided_slice %124 {offsets = [0, 96], sizes = [32, 32], strides = [1, 1]} : vector<32x128xf32> to vector<32x32xf32>
    %139 = arith.mulf %130, %138 : vector<32x32xf32>
    %140 = arith.addf %137, %139 : vector<32x32xf32>
    %141 = math.tanh %140 : vector<32x32xf32>
    %cst_62 = arith.constant 1.000000e+00 : f32
    %142 = vector.broadcast %cst_62 : f32 to vector<32x32xf32>
    %143 = arith.subf %142, %136 : vector<32x32xf32>
    %144 = arith.mulf %143, %141 : vector<32x32xf32>
    %145 = arith.mulf %136, %108 : vector<32x32xf32>
    %146 = arith.addf %144, %145 : vector<32x32xf32>
    %c3_i32 = arith.constant 3 : i32
    %cst_63 = arith.constant dense<0.000000e+00> : vector<32x96xf32>
    %147 = tpu.matmul %146, %28, %cst_63 {dimension_numbers = #tpu.dot_dimension_numbers<[1], [0], [0], [1], [0, 0, 1, 1], [], []>} : vector<32x32xf32>, vector<32x96xf32>, vector<32x96xf32> -> vector<32x96xf32>
    %148 = vector.broadcast %29 : vector<1x96xf32> to vector<32x96xf32>
    %149 = arith.addf %147, %148 : vector<32x96xf32>
    %150 = vector.extract_strided_slice %149 {offsets = [0, 0], sizes = [32, 32], strides = [1, 1]} : vector<32x96xf32> to vector<32x32xf32>
    %cst_64 = arith.constant dense<0.000000e+00> : vector<32x32xf32>
    %151 = tpu.matmul %13, %150, %cst_64 {dimension_numbers = #tpu.dot_dimension_numbers<[1], [0], [0], [1], [0, 0, 1, 1], [], []>} : vector<32x32xf32>, vector<32x32xf32>, vector<32x32xf32> -> vector<32x32xf32>
    %152 = vector.extract_strided_slice %149 {offsets = [0, 32], sizes = [32, 32], strides = [1, 1]} : vector<32x96xf32> to vector<32x32xf32>
    %cst_65 = arith.constant dense<0.000000e+00> : vector<32x32xf32>
    %153 = tpu.matmul %20, %152, %cst_65 {dimension_numbers = #tpu.dot_dimension_numbers<[1], [0], [0], [1], [0, 0, 1, 1], [], []>} : vector<32x32xf32>, vector<32x32xf32>, vector<32x32xf32> -> vector<32x32xf32>
    %154 = arith.addf %151, %153 : vector<32x32xf32>
    %155 = vector.extract_strided_slice %149 {offsets = [0, 64], sizes = [32, 32], strides = [1, 1]} : vector<32x96xf32> to vector<32x32xf32>
    %cst_66 = arith.constant dense<0.000000e+00> : vector<32x32xf32>
    %156 = tpu.matmul %27, %155, %cst_66 {dimension_numbers = #tpu.dot_dimension_numbers<[1], [0], [0], [1], [0, 0, 1, 1], [], []>} : vector<32x32xf32>, vector<32x32xf32>, vector<32x32xf32> -> vector<32x32xf32>
    %157 = arith.addf %154, %156 : vector<32x32xf32>
    %cst_67 = arith.constant dense<0.000000e+00> : vector<32x128xf32>
    %158 = tpu.matmul %157, %30, %cst_67 {dimension_numbers = #tpu.dot_dimension_numbers<[1], [0], [0], [1], [0, 0, 1, 1], [], []>} : vector<32x32xf32>, vector<32x128xf32>, vector<32x128xf32> -> vector<32x128xf32>
    %cst_68 = arith.constant dense<0.000000e+00> : vector<32x128xf32>
    %159 = tpu.matmul %146, %31, %cst_68 {dimension_numbers = #tpu.dot_dimension_numbers<[1], [0], [0], [1], [0, 0, 1, 1], [], []>} : vector<32x32xf32>, vector<32x128xf32>, vector<32x128xf32> -> vector<32x128xf32>
    %160 = arith.addf %158, %159 : vector<32x128xf32>
    %161 = vector.broadcast %32 : vector<1x128xf32> to vector<32x128xf32>
    %162 = arith.addf %160, %161 : vector<32x128xf32>
    %163 = vector.extract_strided_slice %162 {offsets = [0, 0], sizes = [32, 32], strides = [1, 1]} : vector<32x128xf32> to vector<32x32xf32>
    %164 = arith.negf %163 : vector<32x32xf32>
    %165 = math.exp %164 : vector<32x32xf32>
    %cst_69 = arith.constant 1.000000e+00 : f32
    %166 = vector.broadcast %cst_69 : f32 to vector<32x32xf32>
    %167 = arith.addf %166, %165 : vector<32x32xf32>
    %168 = arith.divf %166, %167 : vector<32x32xf32>
    %169 = vector.extract_strided_slice %162 {offsets = [0, 32], sizes = [32, 32], strides = [1, 1]} : vector<32x128xf32> to vector<32x32xf32>
    %170 = arith.negf %169 : vector<32x32xf32>
    %171 = math.exp %170 : vector<32x32xf32>
    %cst_70 = arith.constant 1.000000e+00 : f32
    %172 = vector.broadcast %cst_70 : f32 to vector<32x32xf32>
    %173 = arith.addf %172, %171 : vector<32x32xf32>
    %174 = arith.divf %172, %173 : vector<32x32xf32>
    %175 = vector.extract_strided_slice %162 {offsets = [0, 64], sizes = [32, 32], strides = [1, 1]} : vector<32x128xf32> to vector<32x32xf32>
    %176 = vector.extract_strided_slice %162 {offsets = [0, 96], sizes = [32, 32], strides = [1, 1]} : vector<32x128xf32> to vector<32x32xf32>
    %177 = arith.mulf %168, %176 : vector<32x32xf32>
    %178 = arith.addf %175, %177 : vector<32x32xf32>
    %179 = math.tanh %178 : vector<32x32xf32>
    %cst_71 = arith.constant 1.000000e+00 : f32
    %180 = vector.broadcast %cst_71 : f32 to vector<32x32xf32>
    %181 = arith.subf %180, %174 : vector<32x32xf32>
    %182 = arith.mulf %181, %179 : vector<32x32xf32>
    %183 = arith.mulf %174, %146 : vector<32x32xf32>
    %184 = arith.addf %182, %183 : vector<32x32xf32>
    %c4_i32 = arith.constant 4 : i32
    %cst_72 = arith.constant dense<0.000000e+00> : vector<32x96xf32>
    %185 = tpu.matmul %184, %28, %cst_72 {dimension_numbers = #tpu.dot_dimension_numbers<[1], [0], [0], [1], [0, 0, 1, 1], [], []>} : vector<32x32xf32>, vector<32x96xf32>, vector<32x96xf32> -> vector<32x96xf32>
    %186 = vector.broadcast %29 : vector<1x96xf32> to vector<32x96xf32>
    %187 = arith.addf %185, %186 : vector<32x96xf32>
    %188 = vector.extract_strided_slice %187 {offsets = [0, 0], sizes = [32, 32], strides = [1, 1]} : vector<32x96xf32> to vector<32x32xf32>
    %cst_73 = arith.constant dense<0.000000e+00> : vector<32x32xf32>
    %189 = tpu.matmul %13, %188, %cst_73 {dimension_numbers = #tpu.dot_dimension_numbers<[1], [0], [0], [1], [0, 0, 1, 1], [], []>} : vector<32x32xf32>, vector<32x32xf32>, vector<32x32xf32> -> vector<32x32xf32>
    %190 = vector.extract_strided_slice %187 {offsets = [0, 32], sizes = [32, 32], strides = [1, 1]} : vector<32x96xf32> to vector<32x32xf32>
    %cst_74 = arith.constant dense<0.000000e+00> : vector<32x32xf32>
    %191 = tpu.matmul %20, %190, %cst_74 {dimension_numbers = #tpu.dot_dimension_numbers<[1], [0], [0], [1], [0, 0, 1, 1], [], []>} : vector<32x32xf32>, vector<32x32xf32>, vector<32x32xf32> -> vector<32x32xf32>
    %192 = arith.addf %189, %191 : vector<32x32xf32>
    %193 = vector.extract_strided_slice %187 {offsets = [0, 64], sizes = [32, 32], strides = [1, 1]} : vector<32x96xf32> to vector<32x32xf32>
    %cst_75 = arith.constant dense<0.000000e+00> : vector<32x32xf32>
    %194 = tpu.matmul %27, %193, %cst_75 {dimension_numbers = #tpu.dot_dimension_numbers<[1], [0], [0], [1], [0, 0, 1, 1], [], []>} : vector<32x32xf32>, vector<32x32xf32>, vector<32x32xf32> -> vector<32x32xf32>
    %195 = arith.addf %192, %194 : vector<32x32xf32>
    %cst_76 = arith.constant dense<0.000000e+00> : vector<32x128xf32>
    %196 = tpu.matmul %195, %30, %cst_76 {dimension_numbers = #tpu.dot_dimension_numbers<[1], [0], [0], [1], [0, 0, 1, 1], [], []>} : vector<32x32xf32>, vector<32x128xf32>, vector<32x128xf32> -> vector<32x128xf32>
    %cst_77 = arith.constant dense<0.000000e+00> : vector<32x128xf32>
    %197 = tpu.matmul %184, %31, %cst_77 {dimension_numbers = #tpu.dot_dimension_numbers<[1], [0], [0], [1], [0, 0, 1, 1], [], []>} : vector<32x32xf32>, vector<32x128xf32>, vector<32x128xf32> -> vector<32x128xf32>
    %198 = arith.addf %196, %197 : vector<32x128xf32>
    %199 = vector.broadcast %32 : vector<1x128xf32> to vector<32x128xf32>
    %200 = arith.addf %198, %199 : vector<32x128xf32>
    %201 = vector.extract_strided_slice %200 {offsets = [0, 0], sizes = [32, 32], strides = [1, 1]} : vector<32x128xf32> to vector<32x32xf32>
    %202 = arith.negf %201 : vector<32x32xf32>
    %203 = math.exp %202 : vector<32x32xf32>
    %cst_78 = arith.constant 1.000000e+00 : f32
    %204 = vector.broadcast %cst_78 : f32 to vector<32x32xf32>
    %205 = arith.addf %204, %203 : vector<32x32xf32>
    %206 = arith.divf %204, %205 : vector<32x32xf32>
    %207 = vector.extract_strided_slice %200 {offsets = [0, 32], sizes = [32, 32], strides = [1, 1]} : vector<32x128xf32> to vector<32x32xf32>
    %208 = arith.negf %207 : vector<32x32xf32>
    %209 = math.exp %208 : vector<32x32xf32>
    %cst_79 = arith.constant 1.000000e+00 : f32
    %210 = vector.broadcast %cst_79 : f32 to vector<32x32xf32>
    %211 = arith.addf %210, %209 : vector<32x32xf32>
    %212 = arith.divf %210, %211 : vector<32x32xf32>
    %213 = vector.extract_strided_slice %200 {offsets = [0, 64], sizes = [32, 32], strides = [1, 1]} : vector<32x128xf32> to vector<32x32xf32>
    %214 = vector.extract_strided_slice %200 {offsets = [0, 96], sizes = [32, 32], strides = [1, 1]} : vector<32x128xf32> to vector<32x32xf32>
    %215 = arith.mulf %206, %214 : vector<32x32xf32>
    %216 = arith.addf %213, %215 : vector<32x32xf32>
    %217 = math.tanh %216 : vector<32x32xf32>
    %cst_80 = arith.constant 1.000000e+00 : f32
    %218 = vector.broadcast %cst_80 : f32 to vector<32x32xf32>
    %219 = arith.subf %218, %212 : vector<32x32xf32>
    %220 = arith.mulf %219, %217 : vector<32x32xf32>
    %221 = arith.mulf %212, %184 : vector<32x32xf32>
    %222 = arith.addf %220, %221 : vector<32x32xf32>
    %c5_i32 = arith.constant 5 : i32
    %cst_81 = arith.constant dense<0.000000e+00> : vector<32x96xf32>
    %223 = tpu.matmul %222, %28, %cst_81 {dimension_numbers = #tpu.dot_dimension_numbers<[1], [0], [0], [1], [0, 0, 1, 1], [], []>} : vector<32x32xf32>, vector<32x96xf32>, vector<32x96xf32> -> vector<32x96xf32>
    %224 = vector.broadcast %29 : vector<1x96xf32> to vector<32x96xf32>
    %225 = arith.addf %223, %224 : vector<32x96xf32>
    %226 = vector.extract_strided_slice %225 {offsets = [0, 0], sizes = [32, 32], strides = [1, 1]} : vector<32x96xf32> to vector<32x32xf32>
    %cst_82 = arith.constant dense<0.000000e+00> : vector<32x32xf32>
    %227 = tpu.matmul %13, %226, %cst_82 {dimension_numbers = #tpu.dot_dimension_numbers<[1], [0], [0], [1], [0, 0, 1, 1], [], []>} : vector<32x32xf32>, vector<32x32xf32>, vector<32x32xf32> -> vector<32x32xf32>
    %228 = vector.extract_strided_slice %225 {offsets = [0, 32], sizes = [32, 32], strides = [1, 1]} : vector<32x96xf32> to vector<32x32xf32>
    %cst_83 = arith.constant dense<0.000000e+00> : vector<32x32xf32>
    %229 = tpu.matmul %20, %228, %cst_83 {dimension_numbers = #tpu.dot_dimension_numbers<[1], [0], [0], [1], [0, 0, 1, 1], [], []>} : vector<32x32xf32>, vector<32x32xf32>, vector<32x32xf32> -> vector<32x32xf32>
    %230 = arith.addf %227, %229 : vector<32x32xf32>
    %231 = vector.extract_strided_slice %225 {offsets = [0, 64], sizes = [32, 32], strides = [1, 1]} : vector<32x96xf32> to vector<32x32xf32>
    %cst_84 = arith.constant dense<0.000000e+00> : vector<32x32xf32>
    %232 = tpu.matmul %27, %231, %cst_84 {dimension_numbers = #tpu.dot_dimension_numbers<[1], [0], [0], [1], [0, 0, 1, 1], [], []>} : vector<32x32xf32>, vector<32x32xf32>, vector<32x32xf32> -> vector<32x32xf32>
    %233 = arith.addf %230, %232 : vector<32x32xf32>
    %cst_85 = arith.constant dense<0.000000e+00> : vector<32x128xf32>
    %234 = tpu.matmul %233, %30, %cst_85 {dimension_numbers = #tpu.dot_dimension_numbers<[1], [0], [0], [1], [0, 0, 1, 1], [], []>} : vector<32x32xf32>, vector<32x128xf32>, vector<32x128xf32> -> vector<32x128xf32>
    %cst_86 = arith.constant dense<0.000000e+00> : vector<32x128xf32>
    %235 = tpu.matmul %222, %31, %cst_86 {dimension_numbers = #tpu.dot_dimension_numbers<[1], [0], [0], [1], [0, 0, 1, 1], [], []>} : vector<32x32xf32>, vector<32x128xf32>, vector<32x128xf32> -> vector<32x128xf32>
    %236 = arith.addf %234, %235 : vector<32x128xf32>
    %237 = vector.broadcast %32 : vector<1x128xf32> to vector<32x128xf32>
    %238 = arith.addf %236, %237 : vector<32x128xf32>
    %239 = vector.extract_strided_slice %238 {offsets = [0, 0], sizes = [32, 32], strides = [1, 1]} : vector<32x128xf32> to vector<32x32xf32>
    %240 = arith.negf %239 : vector<32x32xf32>
    %241 = math.exp %240 : vector<32x32xf32>
    %cst_87 = arith.constant 1.000000e+00 : f32
    %242 = vector.broadcast %cst_87 : f32 to vector<32x32xf32>
    %243 = arith.addf %242, %241 : vector<32x32xf32>
    %244 = arith.divf %242, %243 : vector<32x32xf32>
    %245 = vector.extract_strided_slice %238 {offsets = [0, 32], sizes = [32, 32], strides = [1, 1]} : vector<32x128xf32> to vector<32x32xf32>
    %246 = arith.negf %245 : vector<32x32xf32>
    %247 = math.exp %246 : vector<32x32xf32>
    %cst_88 = arith.constant 1.000000e+00 : f32
    %248 = vector.broadcast %cst_88 : f32 to vector<32x32xf32>
    %249 = arith.addf %248, %247 : vector<32x32xf32>
    %250 = arith.divf %248, %249 : vector<32x32xf32>
    %251 = vector.extract_strided_slice %238 {offsets = [0, 64], sizes = [32, 32], strides = [1, 1]} : vector<32x128xf32> to vector<32x32xf32>
    %252 = vector.extract_strided_slice %238 {offsets = [0, 96], sizes = [32, 32], strides = [1, 1]} : vector<32x128xf32> to vector<32x32xf32>
    %253 = arith.mulf %244, %252 : vector<32x32xf32>
    %254 = arith.addf %251, %253 : vector<32x32xf32>
    %255 = math.tanh %254 : vector<32x32xf32>
    %cst_89 = arith.constant 1.000000e+00 : f32
    %256 = vector.broadcast %cst_89 : f32 to vector<32x32xf32>
    %257 = arith.subf %256, %250 : vector<32x32xf32>
    %258 = arith.mulf %257, %255 : vector<32x32xf32>
    %259 = arith.mulf %250, %222 : vector<32x32xf32>
    %260 = arith.addf %258, %259 : vector<32x32xf32>
    %261 = vector.broadcast %0 : vector<32x1xf32> to vector<32x32xf32>
    %262 = arith.mulf %260, %261 : vector<32x32xf32>
    %263 = tpu.concatenate %262, %262, %3 in 1 : vector<32x32xf32>, vector<32x32xf32>, vector<32x16xf32> -> vector<32x80xf32>
    %264 = vector.extract_strided_slice %263 {offsets = [0, 0], sizes = [30, 80], strides = [1, 1]} : vector<32x80xf32> to vector<30x80xf32>
    %c0_90 = arith.constant 0 : index
    %c0_91 = arith.constant 0 : index
    %c0_92 = arith.constant 0 : index
    %265 = vector.load %arg8[%c0_90, %c0_91, %c0_92] : memref<3x80x80xf32, #tpu.memory_space<vmem>>, vector<1x80x80xf32>
    %266 = vector.shape_cast %265 : vector<1x80x80xf32> to vector<80x80xf32>
    %cst_93 = arith.constant dense<0.000000e+00> : vector<30x80xf32>
    %267 = tpu.matmul %264, %266, %cst_93 {dimension_numbers = #tpu.dot_dimension_numbers<[1], [0], [0], [1], [0, 0, 1, 1], [], []>} : vector<30x80xf32>, vector<80x80xf32>, vector<30x80xf32> -> vector<30x80xf32>
    %268 = vector.extract_strided_slice %263 {offsets = [1, 0], sizes = [30, 80], strides = [1, 1]} : vector<32x80xf32> to vector<30x80xf32>
    %c1_94 = arith.constant 1 : index
    %c0_95 = arith.constant 0 : index
    %c0_96 = arith.constant 0 : index
    %269 = vector.load %arg8[%c1_94, %c0_95, %c0_96] : memref<3x80x80xf32, #tpu.memory_space<vmem>>, vector<1x80x80xf32>
    %270 = vector.shape_cast %269 : vector<1x80x80xf32> to vector<80x80xf32>
    %cst_97 = arith.constant dense<0.000000e+00> : vector<30x80xf32>
    %271 = tpu.matmul %268, %270, %cst_97 {dimension_numbers = #tpu.dot_dimension_numbers<[1], [0], [0], [1], [0, 0, 1, 1], [], []>} : vector<30x80xf32>, vector<80x80xf32>, vector<30x80xf32> -> vector<30x80xf32>
    %272 = arith.addf %267, %271 : vector<30x80xf32>
    %273 = vector.extract_strided_slice %263 {offsets = [2, 0], sizes = [30, 80], strides = [1, 1]} : vector<32x80xf32> to vector<30x80xf32>
    %c2_98 = arith.constant 2 : index
    %c0_99 = arith.constant 0 : index
    %c0_100 = arith.constant 0 : index
    %274 = vector.load %arg8[%c2_98, %c0_99, %c0_100] : memref<3x80x80xf32, #tpu.memory_space<vmem>>, vector<1x80x80xf32>
    %275 = vector.shape_cast %274 : vector<1x80x80xf32> to vector<80x80xf32>
    %cst_101 = arith.constant dense<0.000000e+00> : vector<30x80xf32>
    %276 = tpu.matmul %273, %275, %cst_101 {dimension_numbers = #tpu.dot_dimension_numbers<[1], [0], [0], [1], [0, 0, 1, 1], [], []>} : vector<30x80xf32>, vector<80x80xf32>, vector<30x80xf32> -> vector<30x80xf32>
    %277 = arith.addf %272, %276 : vector<30x80xf32>
    %c0_102 = arith.constant 0 : index
    %c0_103 = arith.constant 0 : index
    %278 = vector.load %arg9[%c0_102, %c0_103] : memref<1x80xf32, #tpu.memory_space<vmem>>, vector<1x80xf32>
    %279 = vector.broadcast %278 : vector<1x80xf32> to vector<30x80xf32>
    %280 = arith.addf %277, %279 : vector<30x80xf32>
    %cst_104 = arith.constant 0.000000e+00 : f32
    %281 = vector.broadcast %cst_104 : f32 to vector<30x80xf32>
    %282 = arith.maximumf %280, %281 : vector<30x80xf32>
    %283 = vector.extract_strided_slice %282 {offsets = [0, 0], sizes = [28, 80], strides = [1, 1]} : vector<30x80xf32> to vector<28x80xf32>
    %284 = vector.extract_strided_slice %282 {offsets = [1, 0], sizes = [28, 80], strides = [1, 1]} : vector<30x80xf32> to vector<28x80xf32>
    %285 = arith.maximumf %283, %284 : vector<28x80xf32>
    %286 = vector.extract_strided_slice %282 {offsets = [2, 0], sizes = [28, 80], strides = [1, 1]} : vector<30x80xf32> to vector<28x80xf32>
    %287 = arith.maximumf %285, %286 : vector<28x80xf32>
    %c0_105 = arith.constant 0 : index
    %c0_106 = arith.constant 0 : index
    %288 = vector.load %arg14[%c0_105, %c0_106] : memref<12x28xf32, #tpu.memory_space<vmem>>, vector<12x28xf32>
    %cst_107 = arith.constant dense<0.000000e+00> : vector<12x80xf32>
    %289 = tpu.matmul %288, %287, %cst_107 {dimension_numbers = #tpu.dot_dimension_numbers<[1], [0], [0], [1], [0, 0, 1, 1], [], []>} : vector<12x28xf32>, vector<28x80xf32>, vector<12x80xf32> -> vector<12x80xf32>
    %c0_108 = arith.constant 0 : index
    %c0_109 = arith.constant 0 : index
    %290 = vector.load %arg10[%c0_108, %c0_109] : memref<80x80xf32, #tpu.memory_space<vmem>>, vector<80x80xf32>
    %cst_110 = arith.constant dense<0.000000e+00> : vector<12x80xf32>
    %291 = tpu.matmul %289, %290, %cst_110 {dimension_numbers = #tpu.dot_dimension_numbers<[1], [0], [0], [1], [0, 0, 1, 1], [], []>} : vector<12x80xf32>, vector<80x80xf32>, vector<12x80xf32> -> vector<12x80xf32>
    %c0_111 = arith.constant 0 : index
    %c0_112 = arith.constant 0 : index
    %292 = vector.load %arg11[%c0_111, %c0_112] : memref<1x80xf32, #tpu.memory_space<vmem>>, vector<1x80xf32>
    %293 = vector.broadcast %292 : vector<1x80xf32> to vector<12x80xf32>
    %294 = arith.addf %291, %293 : vector<12x80xf32>
    %cst_113 = arith.constant 0.000000e+00 : f32
    %295 = vector.broadcast %cst_113 : f32 to vector<12x80xf32>
    %296 = arith.maximumf %294, %295 : vector<12x80xf32>
    %297 = vector.extract_strided_slice %296 {offsets = [0, 0], sizes = [11, 80], strides = [1, 1]} : vector<12x80xf32> to vector<11x80xf32>
    %298 = vector.extract_strided_slice %296 {offsets = [1, 0], sizes = [11, 80], strides = [1, 1]} : vector<12x80xf32> to vector<11x80xf32>
    %299 = arith.maximumf %297, %298 : vector<11x80xf32>
    %c0_114 = arith.constant 0 : index
    %c0_115 = arith.constant 0 : index
    %300 = vector.load %arg15[%c0_114, %c0_115] : memref<6x11xf32, #tpu.memory_space<vmem>>, vector<6x11xf32>
    %cst_116 = arith.constant dense<0.000000e+00> : vector<6x80xf32>
    %301 = tpu.matmul %300, %299, %cst_116 {dimension_numbers = #tpu.dot_dimension_numbers<[1], [0], [0], [1], [0, 0, 1, 1], [], []>} : vector<6x11xf32>, vector<11x80xf32>, vector<6x80xf32> -> vector<6x80xf32>
    %c0_117 = arith.constant 0 : index
    %c0_118 = arith.constant 0 : index
    %302 = vector.load %arg12[%c0_117, %c0_118] : memref<80x2xf32, #tpu.memory_space<vmem>>, vector<80x2xf32>
    %cst_119 = arith.constant dense<0.000000e+00> : vector<6x2xf32>
    %303 = tpu.matmul %301, %302, %cst_119 {dimension_numbers = #tpu.dot_dimension_numbers<[1], [0], [0], [1], [0, 0, 1, 1], [], []>} : vector<6x80xf32>, vector<80x2xf32>, vector<6x2xf32> -> vector<6x2xf32>
    %c0_120 = arith.constant 0 : index
    %c0_121 = arith.constant 0 : index
    %304 = vector.load %arg13[%c0_120, %c0_121] : memref<1x2xf32, #tpu.memory_space<vmem>>, vector<1x2xf32>
    %305 = vector.broadcast %304 : vector<1x2xf32> to vector<6x2xf32>
    %306 = arith.addf %303, %305 : vector<6x2xf32>
    %307 = vector.extract_strided_slice %306 {offsets = [0, 0], sizes = [6, 1], strides = [1, 1]} : vector<6x2xf32> to vector<6x1xf32>
    %308 = vector.extract_strided_slice %306 {offsets = [0, 1], sizes = [6, 1], strides = [1, 1]} : vector<6x2xf32> to vector<6x1xf32>
    %309 = arith.mulf %307, %308 : vector<6x1xf32>
    %c0_122 = arith.constant 0 : index
    %c0_123 = arith.constant 0 : index
    %310 = vector.load %arg16[%c0_122, %c0_123] : memref<2x6xf32, #tpu.memory_space<vmem>>, vector<2x6xf32>
    %cst_124 = arith.constant dense<0.000000e+00> : vector<2x80xf32>
    %311 = tpu.matmul %310, %301, %cst_124 {dimension_numbers = #tpu.dot_dimension_numbers<[1], [0], [0], [1], [0, 0, 1, 1], [], []>} : vector<2x6xf32>, vector<6x80xf32>, vector<2x80xf32> -> vector<2x80xf32>
    %c0_125 = arith.constant 0 : index
    %c0_126 = arith.constant 0 : index
    %312 = vector.load %arg19[%c0_125, %c0_126] : memref<2x80xf32, #tpu.memory_space<vmem>>, vector<2x80xf32>
    tpu.vector_store %arg19[%c0_125, %c0_126], %311 {strides = array<i32>} : memref<2x80xf32, #tpu.memory_space<vmem>>, vector<2x80xf32>,
    %cst_127 = arith.constant dense<0.000000e+00> : vector<2x1xf32>
    %313 = tpu.matmul %310, %309, %cst_127 {dimension_numbers = #tpu.dot_dimension_numbers<[1], [0], [0], [1], [0, 0, 1, 1], [], []>} : vector<2x6xf32>, vector<6x1xf32>, vector<2x1xf32> -> vector<2x1xf32>
    %cst_128 = arith.constant 0.333333343 : f32
    %314 = vector.broadcast %cst_128 : f32 to vector<2x1xf32>
    %315 = arith.mulf %313, %314 : vector<2x1xf32>
    %c0_129 = arith.constant 0 : index
    %c0_130 = arith.constant 0 : index
    %316 = vector.load %arg18[%c0_129, %c0_130] : memref<2x1xf32, #tpu.memory_space<vmem>>, vector<2x1xf32>
    tpu.vector_store %arg18[%c0_129, %c0_130], %315 {strides = array<i32>} : memref<2x1xf32, #tpu.memory_space<vmem>>, vector<2x1xf32>,
    %317 = arith.negf %315 : vector<2x1xf32>
    %318 = math.exp %317 : vector<2x1xf32>
    %cst_131 = arith.constant 1.000000e+00 : f32
    %319 = vector.broadcast %cst_131 : f32 to vector<2x1xf32>
    %320 = arith.addf %319, %318 : vector<2x1xf32>
    %321 = arith.divf %319, %320 : vector<2x1xf32>
    %c0_132 = arith.constant 0 : index
    %c0_133 = arith.constant 0 : index
    %322 = vector.load %arg17[%c0_132, %c0_133] : memref<2x1xf32, #tpu.memory_space<vmem>>, vector<2x1xf32>
    tpu.vector_store %arg17[%c0_132, %c0_133], %321 {strides = array<i32>} : memref<2x1xf32, #tpu.memory_space<vmem>>, vector<2x1xf32>,
    return
  }
}

</mosaic_0001>

<llo_original>
// kernel: devign_forward.1
$region0: #{devign_forward.1}
  #allocation0 [shape = 'u32[]', space=smem, size = 0x4, offset = 0x4, fixed_abs, tag = 'smem constant byte address 0x4 - core index']
  #allocation1 [shape = 'u32[144,128]{1,0:T(1,128)}', space=vmem, size = 0x12000, scoped, tag = 'internal scratch']
  %s0 = inlined_call_operand.hbm [shape: f32[32,16], index: 0, kind: input, shape index: {}]
  %s1 = inlined_call_operand.vmem [shape: f32[2,3,16,16], index: 1, kind: input, shape index: {}]
  %s2 = inlined_call_operand.vmem [shape: f32[32,1], index: 2, kind: input, shape index: {}]
  %s3 = inlined_call_operand.vmem [shape: f32[32,96], index: 3, kind: input, shape index: {}]
  %s4 = inlined_call_operand.hbm [shape: f32[1,96], index: 4, kind: input, shape index: {}]
  %s5 = inlined_call_operand.vmem [shape: f32[32,128], index: 5, kind: input, shape index: {}]
  %s6 = inlined_call_operand.hbm [shape: f32[32,128], index: 6, kind: input, shape index: {}]
  %s7 = inlined_call_operand.hbm [shape: f32[1,128], index: 7, kind: input, shape index: {}]
  %s8 = inlined_call_operand.hbm [shape: f32[3,80,80], index: 8, kind: input, shape index: {}]
  %s9 = inlined_call_operand.hbm [shape: f32[1,80], index: 9, kind: input, shape index: {}]
  %s10 = inlined_call_operand.hbm [shape: f32[80,80], index: 10, kind: input, shape index: {}]
  %s11 = inlined_call_operand.hbm [shape: f32[1,80], index: 11, kind: input, shape index: {}]
  %s12 = inlined_call_operand.vmem [shape: f32[80,2], index: 12, kind: input, shape index: {}]
  %s13 = inlined_call_operand.hbm [shape: f32[1,2], index: 13, kind: input, shape index: {}]
  %s14 = inlined_call_operand.hbm [shape: f32[12,28], index: 14, kind: input, shape index: {}]
  %s15 = inlined_call_operand.hbm [shape: f32[6,11], index: 15, kind: input, shape index: {}]
  %s16 = inlined_call_operand.hbm [shape: f32[2,6], index: 16, kind: input, shape index: {}]
  %s17 = inlined_call_operand.vmem [shape: f32[2,1], index: 17, kind: output, shape index: {0}]
  %s18 = inlined_call_operand.vmem [shape: f32[2,1], index: 18, kind: output, shape index: {1}]
  %s19 = inlined_call_operand.hbm [shape: f32[2,80], index: 19, kind: output, shape index: {2}]
  %20 = xla_tuple %s17, %s18, %s19
  %s21 = sld [smem:[#allocation0]]
  $region142: #{devign_forward.1} parent=0
    _
  %s23 = ssub.s32 1, %s21
  %s24 = scalar_select 0, %s23, %s21
  $region1: #{devign_forward.1} parent=0
    #allocation2 [shape = 'u8[16384]{0}', space=vmem, size = 0x4000, scoped, tag = 'input window, operand 0, single buffered']
    #allocation3 [shape = 's32[1]{0}', space=sflag, size = 0x4, scoped, tag = 'scoped memory for devign_forward.1']
    #allocation4 [shape = 's32[1]{0}', space=sflag, size = 0x4, scoped, tag = 'scoped memory for devign_forward.1']
    #allocation5 [shape = 'u8[512]{0}', space=vmem, size = 0x400, scoped, tag = 'input window, operand 4, single buffered']
    #allocation6 [shape = 's32[1]{0}', space=sflag, size = 0x4, scoped, tag = 'scoped memory for devign_forward.1']
    #allocation7 [shape = 'u8[16384]{0}', space=vmem, size = 0x4000, scoped, tag = 'input window, operand 6, single buffered']
    #allocation8 [shape = 'u8[512]{0}', space=vmem, size = 0x400, scoped, tag = 'input window, operand 7, single buffered']
    #allocation9 [shape = 's32[1]{0}', space=sflag, size = 0x4, scoped, tag = 'scoped memory for devign_forward.1']
    #allocation10 [shape = 'u8[122880]{0}', space=vmem, size = 0x1e000, scoped, tag = 'input window, operand 8, single buffered']
    #allocation11 [shape = 'u8[512]{0}', space=vmem, size = 0x400, scoped, tag = 'input window, operand 9, single buffered']
    #allocation12 [shape = 's32[1]{0}', space=sflag, size = 0x4, scoped, tag = 'scoped memory for devign_forward.1']
    #allocation13 [shape = 'u8[40960]{0}', space=vmem, size = 0xa000, scoped, tag = 'input window, operand 10, single buffered']
    #allocation14 [shape = 'u8[512]{0}', space=vmem, size = 0x400, scoped, tag = 'input window, operand 11, single buffered']
    #allocation15 [shape = 's32[1]{0}', space=sflag, size = 0x4, scoped, tag = 'scoped memory for devign_forward.1']
    #allocation16 [shape = 'u8[512]{0}', space=vmem, size = 0x400, scoped, tag = 'input window, operand 13, single buffered']
    #allocation17 [shape = 'u8[8192]{0}', space=vmem, size = 0x2000, scoped, tag = 'input window, operand 14, single buffered']
    #allocation18 [shape = 's32[1]{0}', space=sflag, size = 0x4, scoped, tag = 'scoped memory for devign_forward.1']
    #allocation19 [shape = 'u8[4096]{0}', space=vmem, size = 0x1000, scoped, tag = 'input window, operand 15, single buffered']
    #allocation20 [shape = 'u8[1024]{0}', space=vmem, size = 0x400, scoped, tag = 'input window, operand 16, single buffered']
    #allocation21 [shape = 's32[1]{0}', space=sflag, size = 0x4, scoped, tag = 'scoped memory for devign_forward.1']
    #allocation22 [shape = 'u8[1024]{0}', space=vmem, size = 0x400, scoped, tag = 'output window, operand 2, single buffered']
    %25 = vsyncpa [#allocation3], 0
    %26 = vsyncpa [#allocation6], 0
    %27 = vsyncpa [#allocation9], 0
    %28 = vsyncpa [#allocation12], 0
    %29 = vsyncpa [#allocation15], 0
    %30 = vsyncpa [#allocation18], 0
    %31 = vsyncpa [#allocation21], 0
    %32 = vsyncpa [#allocation4], 0
    // Predicated region
    $region2: #{devign_forward.1} parent=1 // pred_check
      _
    $region3: #{devign_forward.1} parent=1 // pred_check_branch
      %34 = sbr.rel (0) target = $region5
    $region4: #{devign_forward.1} parent=1 // pred_region
      %s36 = ssub.s32 512, 512
      %37 = vsyncadd [#allocation3], %s36
      %s38 = sshll.u32 [#allocation2], 4
      %s39 = int_to_ptr.vmem [resolvable:$true] %s38
      %44 = dma.hbm_to_vmem [thread:$0]  %s0, 512, %s39, [#allocation3], 128, 128, 8
    $region5: #{devign_forward.1} parent=1 // pred_fallthru
      _
    // Predicated region
    $region6: #{devign_forward.1} parent=1 // pred_check
      _
    $region7: #{devign_forward.1} parent=1 // pred_check_branch
      %46 = sbr.rel (0) target = $region9
    $region8: #{devign_forward.1} parent=1 // pred_region
      _
    $region9: #{devign_forward.1} parent=1 // pred_fallthru
      _
    // Predicated region
    $region10: #{devign_forward.1} parent=1 // pred_check
      _
    $region11: #{devign_forward.1} parent=1 // pred_check_branch
      %48 = sbr.rel (0) target = $region13
    $region12: #{devign_forward.1} parent=1 // pred_region
      _
    $region13: #{devign_forward.1} parent=1 // pred_fallthru
      _
    // Predicated region
    $region14: #{devign_forward.1} parent=1 // pred_check
      _
    $region15: #{devign_forward.1} parent=1 // pred_check_branch
      %50 = sbr.rel (0) target = $region17
    $region16: #{devign_forward.1} parent=1 // pred_region
      _
    $region17: #{devign_forward.1} parent=1 // pred_fallthru
      _
    // Predicated region
    $region18: #{devign_forward.1} parent=1 // pred_check
      _
    $region19: #{devign_forward.1} parent=1 // pred_check_branch
      %52 = sbr.rel (0) target = $region21
    $region20: #{devign_forward.1} parent=1 // pred_region
      %s54 = ssub.s32 16, 16
      %55 = vsyncadd [#allocation6], %s54
      %s57 = sshll.u32 [#allocation5], 4
      %s58 = int_to_ptr.vmem [resolvable:$true] %s57
      %60 = dma.hbm_to_vmem [thread:$0]  %s4, 16, %s58, [#allocation6]
    $region21: #{devign_forward.1} parent=1 // pred_fallthru
      _
    // Predicated region
    $region22: #{devign_forward.1} parent=1 // pred_check
      _
    $region23: #{devign_forward.1} parent=1 // pred_check_branch
      %62 = sbr.rel (0) target = $region25
    $region24: #{devign_forward.1} parent=1 // pred_region
      _
    $region25: #{devign_forward.1} parent=1 // pred_fallthru
      _
    // Predicated region
    $region26: #{devign_forward.1} parent=1 // pred_check
      _
    $region27: #{devign_forward.1} parent=1 // pred_check_branch
      %64 = sbr.rel (0) target = $region29
    $region28: #{devign_forward.1} parent=1 // pred_region
      %s66 = ssub.s32 512, 512
      %67 = vsyncadd [#allocation6], %s66
      %s68 = sshll.u32 [#allocation7], 4
      %s69 = int_to_ptr.vmem [resolvable:$true] %s68
      %74 = dma.hbm_to_vmem [thread:$0]  %s6, 512, %s69, [#allocation6], 128, 128, 8
    $region29: #{devign_forward.1} parent=1 // pred_fallthru
      _
    // Predicated region
    $region30: #{devign_forward.1} parent=1 // pred_check
      _
    $region31: #{devign_forward.1} parent=1 // pred_check_branch
      %76 = sbr.rel (0) target = $region33
    $region32: #{devign_forward.1} parent=1 // pred_region
      %s78 = ssub.s32 16, 16
      %79 = vsyncadd [#allocation9], %s78
      %s81 = sshll.u32 [#allocation8], 4
      %s82 = int_to_ptr.vmem [resolvable:$true] %s81
      %84 = dma.hbm_to_vmem [thread:$0]  %s7, 16, %s82, [#allocation9]
    $region33: #{devign_forward.1} parent=1 // pred_fallthru
      _
    // Predicated region
    $region34: #{devign_forward.1} parent=1 // pred_check
      _
    $region35: #{devign_forward.1} parent=1 // pred_check_branch
      %86 = sbr.rel (0) target = $region37
    $region36: #{devign_forward.1} parent=1 // pred_region
      %s88 = ssub.s32 3840, 3840
      %89 = vsyncadd [#allocation9], %s88
      %s90 = sshll.u32 [#allocation10], 4
      %s91 = int_to_ptr.vmem [resolvable:$true] %s90
      %96 = dma.hbm_to_vmem [thread:$0]  %s8, 3840, %s91, [#allocation9], 128, 128, 8
    $region37: #{devign_forward.1} parent=1 // pred_fallthru
      _
    // Predicated region
    $region38: #{devign_forward.1} parent=1 // pred_check
      _
    $region39: #{devign_forward.1} parent=1 // pred_check_branch
      %98 = sbr.rel (0) target = $region41
    $region40: #{devign_forward.1} parent=1 // pred_region
      %s100 = ssub.s32 16, 16
      %101 = vsyncadd [#allocation12], %s100
      %s103 = sshll.u32 [#allocation11], 4
      %s104 = int_to_ptr.vmem [resolvable:$true] %s103
      %106 = dma.hbm_to_vmem [thread:$0]  %s9, 16, %s104, [#allocation12]
    $region41: #{devign_forward.1} parent=1 // pred_fallthru
      _
    // Predicated region
    $region42: #{devign_forward.1} parent=1 // pred_check
      _
    $region43: #{devign_forward.1} parent=1 // pred_check_branch
      %108 = sbr.rel (0) target = $region45
    $region44: #{devign_forward.1} parent=1 // pred_region
      %s110 = ssub.s32 1280, 1280
      %111 = vsyncadd [#allocation12], %s110
      %s112 = sshll.u32 [#allocation13], 4
      %s113 = int_to_ptr.vmem [resolvable:$true] %s112
      %118 = dma.hbm_to_vmem [thread:$0]  %s10, 1280, %s113, [#allocation12], 128, 128, 8
    $region45: #{devign_forward.1} parent=1 // pred_fallthru
      _
    // Predicated region
    $region46: #{devign_forward.1} parent=1 // pred_check
      _
    $region47: #{devign_forward.1} parent=1 // pred_check_branch
      %120 = sbr.rel (0) target = $region49
    $region48: #{devign_forward.1} parent=1 // pred_region
      %s122 = ssub.s32 16, 16
      %123 = vsyncadd [#allocation15], %s122
      %s125 = sshll.u32 [#allocation14], 4
      %s126 = int_to_ptr.vmem [resolvable:$true] %s125
      %128 = dma.hbm_to_vmem [thread:$0]  %s11, 16, %s126, [#allocation15]
    $region49: #{devign_forward.1} parent=1 // pred_fallthru
      _
    // Predicated region
    $region50: #{devign_forward.1} parent=1 // pred_check
      _
    $region51: #{devign_forward.1} parent=1 // pred_check_branch
      %130 = sbr.rel (0) target = $region53
    $region52: #{devign_forward.1} parent=1 // pred_region
      _
    $region53: #{devign_forward.1} parent=1 // pred_fallthru
      _
    // Predicated region
    $region54: #{devign_forward.1} parent=1 // pred_check
      _
    $region55: #{devign_forward.1} parent=1 // pred_check_branch
      %132 = sbr.rel (0) target = $region57
    $region56: #{devign_forward.1} parent=1 // pred_region
      %s134 = ssub.s32 16, 16
      %135 = vsyncadd [#allocation15], %s134
      %s137 = sshll.u32 [#allocation16], 4
      %s138 = int_to_ptr.vmem [resolvable:$true] %s137
      %140 = dma.hbm_to_vmem [thread:$0]  %s13, 16, %s138, [#allocation15]
    $region57: #{devign_forward.1} parent=1 // pred_fallthru
      _
    // Predicated region
    $region58: #{devign_forward.1} parent=1 // pred_check
      _
    $region59: #{devign_forward.1} parent=1 // pred_check_branch
      %142 = sbr.rel (0) target = $region61
    $region60: #{devign_forward.1} parent=1 // pred_region
      %s144 = ssub.s32 256, 256
      %145 = vsyncadd [#allocation18], %s144
      %s146 = sshll.u32 [#allocation17], 4
      %s147 = int_to_ptr.vmem [resolvable:$true] %s146
      %152 = dma.hbm_to_vmem [thread:$0]  %s14, 256, %s147, [#allocation18], 128, 128, 8
    $region61: #{devign_forward.1} parent=1 // pred_fallthru
      _
    // Predicated region
    $region62: #{devign_forward.1} parent=1 // pred_check
      _
    $region63: #{devign_forward.1} parent=1 // pred_check_branch
      %154 = sbr.rel (0) target = $region65
    $region64: #{devign_forward.1} parent=1 // pred_region
      %s156 = ssub.s32 128, 128
      %157 = vsyncadd [#allocation18], %s156
      %s159 = sshll.u32 [#allocation19], 4
      %s160 = int_to_ptr.vmem [resolvable:$true] %s159
      %162 = dma.hbm_to_vmem [thread:$0]  %s15, 128, %s160, [#allocation18]
    $region65: #{devign_forward.1} parent=1 // pred_fallthru
      _
    // Predicated region
    $region66: #{devign_forward.1} parent=1 // pred_check
      _
    $region67: #{devign_forward.1} parent=1 // pred_check_branch
      %164 = sbr.rel (0) target = $region69
    $region68: #{devign_forward.1} parent=1 // pred_region
      %s166 = ssub.s32 32, 32
      %167 = vsyncadd [#allocation21], %s166
      %s169 = sshll.u32 [#allocation20], 4
      %s170 = int_to_ptr.vmem [resolvable:$true] %s169
      %172 = dma.hbm_to_vmem [thread:$0]  %s16, 32, %s170, [#allocation21]
    $region69: #{devign_forward.1} parent=1 // pred_fallthru
      _
    // Predicated region
    $region70: #{devign_forward.1} parent=1 // pred_check
      _
    $region71: #{devign_forward.1} parent=1 // pred_check_branch
      %174 = sbr.rel (0) target = $region73
    $region72: #{devign_forward.1} parent=1 // pred_region
      %175 = dma.done [#allocation3], 512
    $region73: #{devign_forward.1} parent=1 // pred_fallthru
      _
    // Predicated region
    $region74: #{devign_forward.1} parent=1 // pred_check
      _
    $region75: #{devign_forward.1} parent=1 // pred_check_branch
      %177 = sbr.rel (0) target = $region77
    $region76: #{devign_forward.1} parent=1 // pred_region
      %178 = dma.done [#allocation6], 16
    $region77: #{devign_forward.1} parent=1 // pred_fallthru
      _
    // Predicated region
    $region78: #{devign_forward.1} parent=1 // pred_check
      _
    $region79: #{devign_forward.1} parent=1 // pred_check_branch
      %180 = sbr.rel (0) target = $region81
    $region80: #{devign_forward.1} parent=1 // pred_region
      %181 = dma.done [#allocation6], 512
    $region81: #{devign_forward.1} parent=1 // pred_fallthru
      _
    // Predicated region
    $region82: #{devign_forward.1} parent=1 // pred_check
      _
    $region83: #{devign_forward.1} parent=1 // pred_check_branch
      %183 = sbr.rel (0) target = $region85
    $region84: #{devign_forward.1} parent=1 // pred_region
      %184 = dma.done [#allocation9], 16
    $region85: #{devign_forward.1} parent=1 // pred_fallthru
      _
    // Predicated region
    $region86: #{devign_forward.1} parent=1 // pred_check
      _
    $region87: #{devign_forward.1} parent=1 // pred_check_branch
      %186 = sbr.rel (0) target = $region89
    $region88: #{devign_forward.1} parent=1 // pred_region
      %187 = dma.done [#allocation9], 3840
    $region89: #{devign_forward.1} parent=1 // pred_fallthru
      _
    // Predicated region
    $region90: #{devign_forward.1} parent=1 // pred_check
      _
    $region91: #{devign_forward.1} parent=1 // pred_check_branch
      %189 = sbr.rel (0) target = $region93
    $region92: #{devign_forward.1} parent=1 // pred_region
      %190 = dma.done [#allocation12], 16
    $region93: #{devign_forward.1} parent=1 // pred_fallthru
      _
    // Predicated region
    $region94: #{devign_forward.1} parent=1 // pred_check
      _
    $region95: #{devign_forward.1} parent=1 // pred_check_branch
      %192 = sbr.rel (0) target = $region97
    $region96: #{devign_forward.1} parent=1 // pred_region
      %193 = dma.done [#allocation12], 1280
    $region97: #{devign_forward.1} parent=1 // pred_fallthru
      _
    // Predicated region
    $region98: #{devign_forward.1} parent=1 // pred_check
      _
    $region99: #{devign_forward.1} parent=1 // pred_check_branch
      %195 = sbr.rel (0) target = $region101
    $region100: #{devign_forward.1} parent=1 // pred_region
      %196 = dma.done [#allocation15], 16
    $region101: #{devign_forward.1} parent=1 // pred_fallthru
      _
    // Predicated region
    $region102: #{devign_forward.1} parent=1 // pred_check
      _
    $region103: #{devign_forward.1} parent=1 // pred_check_branch
      %198 = sbr.rel (0) target = $region105
    $region104: #{devign_forward.1} parent=1 // pred_region
      %199 = dma.done [#allocation15], 16
    $region105: #{devign_forward.1} parent=1 // pred_fallthru
      _
    // Predicated region
    $region106: #{devign_forward.1} parent=1 // pred_check
      _
    $region107: #{devign_forward.1} parent=1 // pred_check_branch
      %201 = sbr.rel (0) target = $region109
    $region108: #{devign_forward.1} parent=1 // pred_region
      %202 = dma.done [#allocation18], 256
    $region109: #{devign_forward.1} parent=1 // pred_fallthru
      _
    // Predicated region
    $region110: #{devign_forward.1} parent=1 // pred_check
      _
    $region111: #{devign_forward.1} parent=1 // pred_check_branch
      %204 = sbr.rel (0) target = $region113
    $region112: #{devign_forward.1} parent=1 // pred_region
      %205 = dma.done [#allocation18], 128
    $region113: #{devign_forward.1} parent=1 // pred_fallthru
      _
    // Predicated region
    $region114: #{devign_forward.1} parent=1 // pred_check
      _
    $region115: #{devign_forward.1} parent=1 // pred_check_branch
      %207 = sbr.rel (0) target = $region117
    $region116: #{devign_forward.1} parent=1 // pred_region
      %208 = dma.done [#allocation21], 32
    $region117: #{devign_forward.1} parent=1 // pred_fallthru
      _
    %v209 = vld [vmem:[%s2] sm:$0xff]
    %v210 = vld [vmem:[%s2 + $0x8] sm:$0xff]
    %v211 = vld [vmem:[%s2 + $0x10] sm:$0xff]
    %v212 = vld [vmem:[%s2 + $0x18] sm:$0xff]
    %v213 = vld [vmem:[#allocation2] sm:$0xff]
    %v214 = vld [vmem:[#allocation2 + $0x8] sm:$0xff]
    %v215 = vld [vmem:[#allocation2 + $0x10] sm:$0xff]
    %v216 = vld [vmem:[#allocation2 + $0x18] sm:$0xff]
    %218 = vset.pattern.permute.xlu0 0
    %219 = vperm.xlu0 %218, %v209
    %v220 = vpop.permute.xlu0 %219
    %223 = vset.pattern.permute.xlu0 0
    %224 = vperm.xlu0 %223, %v210
    %v225 = vpop.permute.xlu0 %224
    %228 = vset.pattern.permute.xlu0 0
    %229 = vperm.xlu0 %228, %v211
    %v230 = vpop.permute.xlu0 %229
    %233 = vset.pattern.permute.xlu0 0
    %234 = vperm.xlu0 %233, %v212
    %v235 = vpop.permute.xlu0 %234
    %v237 = vmul.f32 %v213, %v220
    %v238 = vmul.f32 %v214, %v225
    %v239 = vmul.f32 %v215, %v230
    %v240 = vmul.f32 %v216, %v235
    %vm241 = vcmask 130048
    %v242 = vsel %vm241, %v237, 0.0
    %v243 = vsel %vm241, %v238, 0.0
    %v244 = vsel %vm241, %v239, 0.0
    %v245 = vsel %vm241, %v240, 0.0
    %v246 = vld [vmem:[%s1] sm:$0xff]
    %v247 = vld [vmem:[%s1 + $0x8] sm:$0xff]
    %v248 = vsel %vm241, %v246, 0.0
    %v249 = vsel %vm241, %v247, 0.0
    %s250 = scalar_lea.vmem %s1, 48
    %v251 = vld [vmem:[%s250] sm:$0xff]
    %v252 = vld [vmem:[%s250 + $0x8] sm:$0xff]
    %255 = vrot.lane.b32.xlu0 %v251, 16
    %v256 = vpop.permute.xlu0 %255
    %257 = vrot.lane.b32.xlu0 %v252, 16
    %v258 = vpop.permute.xlu0 %257
    %v261 = vsel %vm241, 0.0, %v256
    %v262 = vsel %vm241, 0.0, %v258
    %s263 = scalar_lea.vmem %s1, 16
    %v264 = vld [vmem:[%s263] sm:$0xff]
    %v265 = vld [vmem:[%s263 + $0x8] sm:$0xff]
    %v266 = vsel %vm241, %v264, 0.0
    %v267 = vsel %vm241, %v265, 0.0
    %s268 = scalar_lea.vmem %s1, 64
    %v269 = vld [vmem:[%s268] sm:$0xff]
    %v270 = vld [vmem:[%s268 + $0x8] sm:$0xff]
    %273 = vrot.lane.b32.xlu0 %v269, 16
    %v274 = vpop.permute.xlu0 %273
    %275 = vrot.lane.b32.xlu0 %v270, 16
    %v276 = vpop.permute.xlu0 %275
    %v279 = vsel %vm241, 0.0, %v274
    %v280 = vsel %vm241, 0.0, %v276
    %s281 = scalar_lea.vmem %s1, 32
    %v282 = vld [vmem:[%s281] sm:$0xff]
    %v283 = vld [vmem:[%s281 + $0x8] sm:$0xff]
    %v284 = vsel %vm241, %v282, 0.0
    %v285 = vsel %vm241, %v283, 0.0
    %s286 = scalar_lea.vmem %s1, 80
    %v287 = vld [vmem:[%s286] sm:$0xff]
    %v288 = vld [vmem:[%s286 + $0x8] sm:$0xff]
    %291 = vrot.lane.b32.xlu0 %v287, 16
    %v292 = vpop.permute.xlu0 %291
    %293 = vrot.lane.b32.xlu0 %v288, 16
    %v294 = vpop.permute.xlu0 %293
    %v297 = vsel %vm241, 0.0, %v292
    %v298 = vsel %vm241, 0.0, %v294
    %v299 = vld [vmem:[%s3] sm:$0xff]
    %v300 = vld [vmem:[%s3 + $0x8] sm:$0xff]
    %v301 = vld [vmem:[%s3 + $0x10] sm:$0xff]
    %v302 = vld [vmem:[%s3 + $0x18] sm:$0xff]
    %v303 = vld [vmem:[#allocation5] sm:$0x1]
    %v304 = vld [vmem:[%s5] sm:$0xff]
    %v305 = vld [vmem:[%s5 + $0x8] sm:$0xff]
    %v306 = vld [vmem:[%s5 + $0x10] sm:$0xff]
    %v307 = vld [vmem:[%s5 + $0x18] sm:$0xff]
    %v308 = vld [vmem:[#allocation7] sm:$0xff]
    %v309 = vld [vmem:[#allocation7 + $0x8] sm:$0xff]
    %v310 = vld [vmem:[#allocation7 + $0x10] sm:$0xff]
    %v311 = vld [vmem:[#allocation7 + $0x18] sm:$0xff]
    %v312 = vld [vmem:[#allocation8] sm:$0x1]
    %v314 = vlaneseq
    %v315 = vshrl.u32 %v314, 7
    %v316 = vsub.s32 0, %v315
    %v317 = vrot.slane %v303, %v316
    %vm319 = vcmask 261120
    %v321 = vsel %vm319, %v242, 0
    %v324 = vsel %vm319, %v243, 0
    %v327 = vsel %vm319, %v244, 0
    %v330 = vsel %vm319, %v245, 0
    %332 = vmatprep.subr.mxu0 0.0
    %333 = vmatpush1.msra.mxu0 %v299
    %334 = vmatprep.subr.mxu0 0.0
    %335 = vmatpush1.msra.mxu0 %v300
    %336 = vmatprep.subr.mxu0 0.0
    %337 = vmatpush1.msra.mxu0 %v301
    %338 = vmatprep.subr.mxu0 0.0
    %339 = vmatpush1.msra.mxu0 %v302
    %340 = vmatprep.subr.mxu0 0.0
    %341 = vmatpush1.msra.mxu0 0.0
    %342 = vmatprep.subr.mxu0 0.0
    %343 = vmatpush1.msra.mxu0 0.0
    %344 = vmatprep.subr.mxu0 0.0
    %345 = vmatpush1.msra.mxu0 0.0
    %346 = vmatprep.subr.mxu0 0.0
    %347 = vmatpush1.msra.mxu0 0.0
    %348 = vmatprep.subr.mxu0 0.0
    %349 = vmatpush1.msra.mxu0 0.0
    %350 = vmatprep.subr.mxu0 0.0
    %351 = vmatpush1.msra.mxu0 0.0
    %352 = vmatprep.subr.mxu0 0.0
    %353 = vmatpush1.msra.mxu0 0.0
    %354 = vmatprep.subr.mxu0 0.0
    %355 = vmatpush1.msra.mxu0 0.0
    %356 = vmatprep.subr.mxu0 0.0
    %357 = vmatpush1.msra.mxu0 0.0
    %358 = vmatprep.subr.mxu0 0.0
    %359 = vmatpush1.msra.mxu0 0.0
    %360 = vmatprep.subr.mxu0 0.0
    %361 = vmatpush1.msra.mxu0 0.0
    %362 = vmatprep.subr.mxu0 0.0
    %363 = vmatpush1.msra.mxu0 0.0
    %364 = vmatprep.subr.mxu0 0.0
    %365 = vmatpush1.msra.mxu0 0.0
    %366 = vmatprep.subr.mxu0 0.0
    %367 = vmatpush1.msra.mxu0 0.0
    %368 = vmatprep.subr.mxu0 0.0
    %369 = vmatpush1.msra.mxu0 0.0
    %370 = vmatprep.subr.mxu0 0.0
    %371 = vmatpush1.msra.mxu0 0.0
    %372 = vmatprep.subr.mxu0 0.0
    %373 = vmatpush1.msra.mxu0 0.0
    %374 = vmatprep.subr.mxu0 0.0
    %375 = vmatpush1.msra.mxu0 0.0
    %376 = vmatprep.subr.mxu0 0.0
    %377 = vmatpush1.msra.mxu0 0.0
    %378 = vmatprep.subr.mxu0 0.0
    %379 = vmatpush1.msra.mxu0 0.0
    %380 = vmatprep.subr.mxu0 0.0
    %381 = vmatpush1.msra.mxu0 0.0
    %382 = vmatprep.subr.mxu0 0.0
    %383 = vmatpush1.msra.mxu0 0.0
    %384 = vmatprep.subr.mxu0 0.0
    %385 = vmatpush1.msra.mxu0 0.0
    %386 = vmatprep.subr.mxu0 0.0
    %387 = vmatpush1.msra.mxu0 0.0
    %388 = vmatprep.subr.mxu0 0.0
    %389 = vmatpush1.msra.mxu0 0.0
    %390 = vmatprep.subr.mxu0 0.0
    %391 = vmatpush1.msra.mxu0 0.0
    %392 = vmatprep.subr.mxu0 0.0
    %393 = vmatpush1.msra.mxu0 0.0
    %394 = vmatprep.subr.mxu0 0.0
    %395 = vmatpush1.msra.mxu0 0.0
    %396 = vmatprep.mubr.f32.mxu0 0.0
    %397 = vmatmul.mubr.f32.gmra.mrb[0].mxu0 %v321
    %v398 = vpop.f32.mrb[0].mxu0
    %v399 = vadd.f32 %v317, %v398
    %v400 = vpop.f32.mrb[0].mxu0
    %401 = vmatprep.mubr.f32.mxu0 0.0
    %402 = vmatmul.mubr.f32.gmra.mrb[0].mxu0 %v324
    %v403 = vpop.f32.mrb[0].mxu0
    %v404 = vadd.f32 %v317, %v403
    %v405 = vpop.f32.mrb[0].mxu0
    %406 = vmatprep.mubr.f32.mxu0 0.0
    %407 = vmatmul.mubr.f32.gmra.mrb[0].mxu0 %v327
    %v408 = vpop.f32.mrb[0].mxu0
    %v409 = vadd.f32 %v317, %v408
    %v410 = vpop.f32.mrb[0].mxu0
    %411 = vmatprep.mubr.f32.mxu0 0.0
    %412 = vmatmul.mubr.f32.gmra.mrb[0].mxu0 %v330
    %v413 = vpop.f32.mrb[0].mxu0
    %v414 = vadd.f32 %v317, %v413
    %v415 = vpop.f32.mrb[0].mxu0
    %416 = vdwg.mxu0
    %421 = vrot.lane.b32.xlu0 %v399, 96
    %v422 = vpop.permute.xlu0 %421
    %423 = vrot.lane.b32.xlu0 %v404, 96
    %v424 = vpop.permute.xlu0 %423
    %425 = vrot.lane.b32.xlu0 %v409, 96
    %v426 = vpop.permute.xlu0 %425
    %427 = vrot.lane.b32.xlu0 %v414, 96
    %v428 = vpop.permute.xlu0 %427
    %v434 = vsel %vm319, %v266, 0
    %v437 = vsel %vm319, %v267, 0
    %v440 = vsel %vm319, %v279, 0
    %v443 = vsel %vm319, %v280, 0
    %445 = vmatprep.subr.mxu0 0.0
    %446 = vmatpush1.msra.mxu0 %v422
    %447 = vmatprep.subr.mxu0 0.0
    %448 = vmatpush1.msra.mxu0 %v424
    %449 = vmatprep.subr.mxu0 0.0
    %450 = vmatpush1.msra.mxu0 %v426
    %451 = vmatprep.subr.mxu0 0.0
    %452 = vmatpush1.msra.mxu0 %v428
    %453 = vmatprep.subr.mxu0 0.0
    %454 = vmatpush1.msra.mxu0 0.0
    %455 = vmatprep.subr.mxu0 0.0
    %456 = vmatpush1.msra.mxu0 0.0
    %457 = vmatprep.subr.mxu0 0.0
    %458 = vmatpush1.msra.mxu0 0.0
    %459 = vmatprep.subr.mxu0 0.0
    %460 = vmatpush1.msra.mxu0 0.0
    %461 = vmatprep.subr.mxu0 0.0
    %462 = vmatpush1.msra.mxu0 0.0
    %463 = vmatprep.subr.mxu0 0.0
    %464 = vmatpush1.msra.mxu0 0.0
    %465 = vmatprep.subr.mxu0 0.0
    %466 = vmatpush1.msra.mxu0 0.0
    %467 = vmatprep.subr.mxu0 0.0
    %468 = vmatpush1.msra.mxu0 0.0
    %469 = vmatprep.subr.mxu0 0.0
    %470 = vmatpush1.msra.mxu0 0.0
    %471 = vmatprep.subr.mxu0 0.0
    %472 = vmatpush1.msra.mxu0 0.0
    %473 = vmatprep.subr.mxu0 0.0
    %474 = vmatpush1.msra.mxu0 0.0
    %475 = vmatprep.subr.mxu0 0.0
    %476 = vmatpush1.msra.mxu0 0.0
    %477 = vmatprep.subr.mxu0 0.0
    %478 = vmatpush1.msra.mxu0 0.0
    %479 = vmatprep.subr.mxu0 0.0
    %480 = vmatpush1.msra.mxu0 0.0
    %481 = vmatprep.subr.mxu0 0.0
    %482 = vmatpush1.msra.mxu0 0.0
    %483 = vmatprep.subr.mxu0 0.0
    %484 = vmatpush1.msra.mxu0 0.0
    %485 = vmatprep.subr.mxu0 0.0
    %486 = vmatpush1.msra.mxu0 0.0
    %487 = vmatprep.subr.mxu0 0.0
    %488 = vmatpush1.msra.mxu0 0.0
    %489 = vmatprep.subr.mxu0 0.0
    %490 = vmatpush1.msra.mxu0 0.0
    %491 = vmatprep.subr.mxu0 0.0
    %492 = vmatpush1.msra.mxu0 0.0
    %493 = vmatprep.subr.mxu0 0.0
    %494 = vmatpush1.msra.mxu0 0.0
    %495 = vmatprep.subr.mxu0 0.0
    %496 = vmatpush1.msra.mxu0 0.0
    %497 = vmatprep.subr.mxu0 0.0
    %498 = vmatpush1.msra.mxu0 0.0
    %499 = vmatprep.subr.mxu0 0.0
    %500 = vmatpush1.msra.mxu0 0.0
    %501 = vmatprep.subr.mxu0 0.0
    %502 = vmatpush1.msra.mxu0 0.0
    %503 = vmatprep.subr.mxu0 0.0
    %504 = vmatpush1.msra.mxu0 0.0
    %505 = vmatprep.subr.mxu0 0.0
    %506 = vmatpush1.msra.mxu0 0.0
    %507 = vmatprep.subr.mxu0 0.0
    %508 = vmatpush1.msra.mxu0 0.0
    %509 = vmatprep.mubr.f32.mxu0 0.0
    %510 = vmatmul.mubr.f32.gmra.mrb[0].mxu0 %v434
    %v511 = vpop.f32.mrb[0].mxu0
    %v512 = vadd.f32 0.0, %v511
    %v513 = vpop.f32.mrb[0].mxu0
    %514 = vmatprep.mubr.f32.mxu0 0.0
    %515 = vmatmul.mubr.f32.gmra.mrb[0].mxu0 %v437
    %v516 = vpop.f32.mrb[0].mxu0
    %v517 = vadd.f32 0.0, %v516
    %v518 = vpop.f32.mrb[0].mxu0
    %519 = vmatprep.mubr.f32.mxu0 0.0
    %520 = vmatmul.mubr.f32.gmra.mrb[0].mxu0 %v440
    %v521 = vpop.f32.mrb[0].mxu0
    %v522 = vadd.f32 0.0, %v521
    %v523 = vpop.f32.mrb[0].mxu0
    %524 = vmatprep.mubr.f32.mxu0 0.0
    %525 = vmatmul.mubr.f32.gmra.mrb[0].mxu0 %v443
    %v526 = vpop.f32.mrb[0].mxu0
    %v527 = vadd.f32 0.0, %v526
    %v528 = vpop.f32.mrb[0].mxu0
    %529 = vdwg.mxu0
    %v531 = vsel %vm319, %v248, 0
    %v534 = vsel %vm319, %v249, 0
    %v537 = vsel %vm319, %v261, 0
    %v540 = vsel %vm319, %v262, 0
    %542 = vmatprep.subr.mxu0 0.0
    %543 = vmatpush1.msra.mxu0 %v399
    %544 = vmatprep.subr.mxu0 0.0
    %545 = vmatpush1.msra.mxu0 %v404
    %546 = vmatprep.subr.mxu0 0.0
    %547 = vmatpush1.msra.mxu0 %v409
    %548 = vmatprep.subr.mxu0 0.0
    %549 = vmatpush1.msra.mxu0 %v414
    %550 = vmatprep.subr.mxu0 0.0
    %551 = vmatpush1.msra.mxu0 0.0
    %552 = vmatprep.subr.mxu0 0.0
    %553 = vmatpush1.msra.mxu0 0.0
    %554 = vmatprep.subr.mxu0 0.0
    %555 = vmatpush1.msra.mxu0 0.0
    %556 = vmatprep.subr.mxu0 0.0
    %557 = vmatpush1.msra.mxu0 0.0
    %558 = vmatprep.subr.mxu0 0.0
    %559 = vmatpush1.msra.mxu0 0.0
    %560 = vmatprep.subr.mxu0 0.0
    %561 = vmatpush1.msra.mxu0 0.0
    %562 = vmatprep.subr.mxu0 0.0
    %563 = vmatpush1.msra.mxu0 0.0
    %564 = vmatprep.subr.mxu0 0.0
    %565 = vmatpush1.msra.mxu0 0.0
    %566 = vmatprep.subr.mxu0 0.0
    %567 = vmatpush1.msra.mxu0 0.0
    %568 = vmatprep.subr.mxu0 0.0
    %569 = vmatpush1.msra.mxu0 0.0
    %570 = vmatprep.subr.mxu0 0.0
    %571 = vmatpush1.msra.mxu0 0.0
    %572 = vmatprep.subr.mxu0 0.0
    %573 = vmatpush1.msra.mxu0 0.0
    %574 = vmatprep.subr.mxu0 0.0
    %575 = vmatpush1.msra.mxu0 0.0
    %576 = vmatprep.subr.mxu0 0.0
    %577 = vmatpush1.msra.mxu0 0.0
    %578 = vmatprep.subr.mxu0 0.0
    %579 = vmatpush1.msra.mxu0 0.0
    %580 = vmatprep.subr.mxu0 0.0
    %581 = vmatpush1.msra.mxu0 0.0
    %582 = vmatprep.subr.mxu0 0.0
    %583 = vmatpush1.msra.mxu0 0.0
    %584 = vmatprep.subr.mxu0 0.0
    %585 = vmatpush1.msra.mxu0 0.0
    %586 = vmatprep.subr.mxu0 0.0
    %587 = vmatpush1.msra.mxu0 0.0
    %588 = vmatprep.subr.mxu0 0.0
    %589 = vmatpush1.msra.mxu0 0.0
    %590 = vmatprep.subr.mxu0 0.0
    %591 = vmatpush1.msra.mxu0 0.0
    %592 = vmatprep.subr.mxu0 0.0
    %593 = vmatpush1.msra.mxu0 0.0
    %594 = vmatprep.subr.mxu0 0.0
    %595 = vmatpush1.msra.mxu0 0.0
    %596 = vmatprep.subr.mxu0 0.0
    %597 = vmatpush1.msra.mxu0 0.0
    %598 = vmatprep.subr.mxu0 0.0
    %599 = vmatpush1.msra.mxu0 0.0
    %600 = vmatprep.subr.mxu0 0.0
    %601 = vmatpush1.msra.mxu0 0.0
    %602 = vmatprep.subr.mxu0 0.0
    %603 = vmatpush1.msra.mxu0 0.0
    %604 = vmatprep.subr.mxu0 0.0
    %605 = vmatpush1.msra.mxu0 0.0
    %606 = vmatprep.mubr.f32.mxu0 0.0
    %607 = vmatmul.mubr.f32.gmra.mrb[0].mxu0 %v531
    %v608 = vpop.f32.mrb[0].mxu0
    %v609 = vadd.f32 %v512, %v608
    %v610 = vpop.f32.mrb[0].mxu0
    %611 = vmatprep.mubr.f32.mxu0 0.0
    %612 = vmatmul.mubr.f32.gmra.mrb[0].mxu0 %v534
    %v613 = vpop.f32.mrb[0].mxu0
    %v614 = vadd.f32 %v517, %v613
    %v615 = vpop.f32.mrb[0].mxu0
    %616 = vmatprep.mubr.f32.mxu0 0.0
    %617 = vmatmul.mubr.f32.gmra.mrb[0].mxu0 %v537
    %v618 = vpop.f32.mrb[0].mxu0
    %v619 = vadd.f32 %v522, %v618
    %v620 = vpop.f32.mrb[0].mxu0
    %621 = vmatprep.mubr.f32.mxu0 0.0
    %622 = vmatmul.mubr.f32.gmra.mrb[0].mxu0 %v540
    %v623 = vpop.f32.mrb[0].mxu0
    %v624 = vadd.f32 %v527, %v623
    %v625 = vpop.f32.mrb[0].mxu0
    %626 = vdwg.mxu0
    %627 = vrot.lane.b32.xlu0 %v399, 64
    %v628 = vpop.permute.xlu0 %627
    %629 = vrot.lane.b32.xlu0 %v404, 64
    %v630 = vpop.permute.xlu0 %629
    %631 = vrot.lane.b32.xlu0 %v409, 64
    %v632 = vpop.permute.xlu0 %631
    %633 = vrot.lane.b32.xlu0 %v414, 64
    %v634 = vpop.permute.xlu0 %633
    %v640 = vsel %vm319, %v284, 0
    %v643 = vsel %vm319, %v285, 0
    %v646 = vsel %vm319, %v297, 0
    %v649 = vsel %vm319, %v298, 0
    %651 = vmatprep.subr.mxu0 0.0
    %652 = vmatpush1.msra.mxu0 %v628
    %653 = vmatprep.subr.mxu0 0.0
    %654 = vmatpush1.msra.mxu0 %v630
    %655 = vmatprep.subr.mxu0 0.0
    %656 = vmatpush1.msra.mxu0 %v632
    %657 = vmatprep.subr.mxu0 0.0
    %658 = vmatpush1.msra.mxu0 %v634
    %659 = vmatprep.subr.mxu0 0.0
    %660 = vmatpush1.msra.mxu0 0.0
    %661 = vmatprep.subr.mxu0 0.0
    %662 = vmatpush1.msra.mxu0 0.0
    %663 = vmatprep.subr.mxu0 0.0
    %664 = vmatpush1.msra.mxu0 0.0
    %665 = vmatprep.subr.mxu0 0.0
    %666 = vmatpush1.msra.mxu0 0.0
    %667 = vmatprep.subr.mxu0 0.0
    %668 = vmatpush1.msra.mxu0 0.0
    %669 = vmatprep.subr.mxu0 0.0
    %670 = vmatpush1.msra.mxu0 0.0
    %671 = vmatprep.subr.mxu0 0.0
    %672 = vmatpush1.msra.mxu0 0.0
    %673 = vmatprep.subr.mxu0 0.0
    %674 = vmatpush1.msra.mxu0 0.0
    %675 = vmatprep.subr.mxu0 0.0
    %676 = vmatpush1.msra.mxu0 0.0
    %677 = vmatprep.subr.mxu0 0.0
    %678 = vmatpush1.msra.mxu0 0.0
    %679 = vmatprep.subr.mxu0 0.0
    %680 = vmatpush1.msra.mxu0 0.0
    %681 = vmatprep.subr.mxu0 0.0
    %682 = vmatpush1.msra.mxu0 0.0
    %683 = vmatprep.subr.mxu0 0.0
    %684 = vmatpush1.msra.mxu0 0.0
    %685 = vmatprep.subr.mxu0 0.0
    %686 = vmatpush1.msra.mxu0 0.0
    %687 = vmatprep.subr.mxu0 0.0
    %688 = vmatpush1.msra.mxu0 0.0
    %689 = vmatprep.subr.mxu0 0.0
    %690 = vmatpush1.msra.mxu0 0.0
    %691 = vmatprep.subr.mxu0 0.0
    %692 = vmatpush1.msra.mxu0 0.0
    %693 = vmatprep.subr.mxu0 0.0
    %694 = vmatpush1.msra.mxu0 0.0
    %695 = vmatprep.subr.mxu0 0.0
    %696 = vmatpush1.msra.mxu0 0.0
    %697 = vmatprep.subr.mxu0 0.0
    %698 = vmatpush1.msra.mxu0 0.0
    %699 = vmatprep.subr.mxu0 0.0
    %700 = vmatpush1.msra.mxu0 0.0
    %701 = vmatprep.subr.mxu0 0.0
    %702 = vmatpush1.msra.mxu0 0.0
    %703 = vmatprep.subr.mxu0 0.0
    %704 = vmatpush1.msra.mxu0 0.0
    %705 = vmatprep.subr.mxu0 0.0
    %706 = vmatpush1.msra.mxu0 0.0
    %707 = vmatprep.subr.mxu0 0.0
    %708 = vmatpush1.msra.mxu0 0.0
    %709 = vmatprep.subr.mxu0 0.0
    %710 = vmatpush1.msra.mxu0 0.0
    %711 = vmatprep.subr.mxu0 0.0
    %712 = vmatpush1.msra.mxu0 0.0
    %713 = vmatprep.subr.mxu0 0.0
    %714 = vmatpush1.msra.mxu0 0.0
    %715 = vmatprep.mubr.f32.mxu0 0.0
    %716 = vmatmul.mubr.f32.gmra.mrb[0].mxu0 %v640
    %v717 = vpop.f32.mrb[0].mxu0
    %v718 = vadd.f32 0.0, %v717
    %v719 = vpop.f32.mrb[0].mxu0
    %720 = vmatprep.mubr.f32.mxu0 0.0
    %721 = vmatmul.mubr.f32.gmra.mrb[0].mxu0 %v643
    %v722 = vpop.f32.mrb[0].mxu0
    %v723 = vadd.f32 0.0, %v722
    %v724 = vpop.f32.mrb[0].mxu0
    %725 = vmatprep.mubr.f32.mxu0 0.0
    %726 = vmatmul.mubr.f32.gmra.mrb[0].mxu0 %v646
    %v727 = vpop.f32.mrb[0].mxu0
    %v728 = vadd.f32 0.0, %v727
    %v729 = vpop.f32.mrb[0].mxu0
    %730 = vmatprep.mubr.f32.mxu0 0.0
    %731 = vmatmul.mubr.f32.gmra.mrb[0].mxu0 %v649
    %v732 = vpop.f32.mrb[0].mxu0
    %v733 = vadd.f32 0.0, %v732
    %v734 = vpop.f32.mrb[0].mxu0
    %735 = vdwg.mxu0
    %v736 = vadd.f32 %v609, %v718
    %v737 = vadd.f32 %v614, %v723
    %v738 = vadd.f32 %v619, %v728
    %v739 = vadd.f32 %v624, %v733
    %740 = vmatprep.subr.mxu0 0.0
    %741 = vmatpush1.msra.mxu0 %v308
    %742 = vmatprep.subr.mxu0 0.0
    %743 = vmatpush1.msra.mxu0 %v309
    %744 = vmatprep.subr.mxu0 0.0
    %745 = vmatpush1.msra.mxu0 %v310
    %746 = vmatprep.subr.mxu0 0.0
    %747 = vmatpush1.msra.mxu0 %v311
    %748 = vmatprep.subr.mxu0 0.0
    %749 = vmatpush1.msra.mxu0 0.0
    %750 = vmatprep.subr.mxu0 0.0
    %751 = vmatpush1.msra.mxu0 0.0
    %752 = vmatprep.subr.mxu0 0.0
    %753 = vmatpush1.msra.mxu0 0.0
    %754 = vmatprep.subr.mxu0 0.0
    %755 = vmatpush1.msra.mxu0 0.0
    %756 = vmatprep.subr.mxu0 0.0
    %757 = vmatpush1.msra.mxu0 0.0
    %758 = vmatprep.subr.mxu0 0.0
    %759 = vmatpush1.msra.mxu0 0.0
    %760 = vmatprep.subr.mxu0 0.0
    %761 = vmatpush1.msra.mxu0 0.0
    %762 = vmatprep.subr.mxu0 0.0
    %763 = vmatpush1.msra.mxu0 0.0
    %764 = vmatprep.subr.mxu0 0.0
    %765 = vmatpush1.msra.mxu0 0.0
    %766 = vmatprep.subr.mxu0 0.0
    %767 = vmatpush1.msra.mxu0 0.0
    %768 = vmatprep.subr.mxu0 0.0
    %769 = vmatpush1.msra.mxu0 0.0
    %770 = vmatprep.subr.mxu0 0.0
    %771 = vmatpush1.msra.mxu0 0.0
    %772 = vmatprep.subr.mxu0 0.0
    %773 = vmatpush1.msra.mxu0 0.0
    %774 = vmatprep.subr.mxu0 0.0
    %775 = vmatpush1.msra.mxu0 0.0
    %776 = vmatprep.subr.mxu0 0.0
    %777 = vmatpush1.msra.mxu0 0.0
    %778 = vmatprep.subr.mxu0 0.0
    %779 = vmatpush1.msra.mxu0 0.0
    %780 = vmatprep.subr.mxu0 0.0
    %781 = vmatpush1.msra.mxu0 0.0
    %782 = vmatprep.subr.mxu0 0.0
    %783 = vmatpush1.msra.mxu0 0.0
    %784 = vmatprep.subr.mxu0 0.0
    %785 = vmatpush1.msra.mxu0 0.0
    %786 = vmatprep.subr.mxu0 0.0
    %787 = vmatpush1.msra.mxu0 0.0
    %788 = vmatprep.subr.mxu0 0.0
    %789 = vmatpush1.msra.mxu0 0.0
    %790 = vmatprep.subr.mxu0 0.0
    %791 = vmatpush1.msra.mxu0 0.0
    %792 = vmatprep.subr.mxu0 0.0
    %793 = vmatpush1.msra.mxu0 0.0
    %794 = vmatprep.subr.mxu0 0.0
    %795 = vmatpush1.msra.mxu0 0.0
    %796 = vmatprep.subr.mxu0 0.0
    %797 = vmatpush1.msra.mxu0 0.0
    %798 = vmatprep.subr.mxu0 0.0
    %799 = vmatpush1.msra.mxu0 0.0
    %800 = vmatprep.subr.mxu0 0.0
    %801 = vmatpush1.msra.mxu0 0.0
    %802 = vmatprep.subr.mxu0 0.0
    %803 = vmatpush1.msra.mxu0 0.0
    %804 = vmatprep.mubr.f32.mxu0 0.0
    %805 = vmatmul.mubr.f32.gmra.mrb[0].mxu0 %v321
    %v806 = vpop.f32.mrb[0].mxu0
    %v807 = vadd.f32 0.0, %v806
    %v808 = vpop.f32.mrb[0].mxu0
    %809 = vmatprep.mubr.f32.mxu0 0.0
    %810 = vmatmul.mubr.f32.gmra.mrb[0].mxu0 %v324
    %v811 = vpop.f32.mrb[0].mxu0
    %v812 = vadd.f32 0.0, %v811
    %v813 = vpop.f32.mrb[0].mxu0
    %814 = vmatprep.mubr.f32.mxu0 0.0
    %815 = vmatmul.mubr.f32.gmra.mrb[0].mxu0 %v327
    %v816 = vpop.f32.mrb[0].mxu0
    %v817 = vadd.f32 0.0, %v816
    %v818 = vpop.f32.mrb[0].mxu0
    %819 = vmatprep.mubr.f32.mxu0 0.0
    %820 = vmatmul.mubr.f32.gmra.mrb[0].mxu0 %v330
    %v821 = vpop.f32.mrb[0].mxu0
    %v822 = vadd.f32 0.0, %v821
    %v823 = vpop.f32.mrb[0].mxu0
    %824 = vdwg.mxu0
    %v826 = vsel %vm319, %v736, 0
    %v829 = vsel %vm319, %v737, 0
    %v832 = vsel %vm319, %v738, 0
    %v835 = vsel %vm319, %v739, 0
    %837 = vmatprep.subr.mxu0 0.0
    %838 = vmatpush1.msra.mxu0 %v304
    %839 = vmatprep.subr.mxu0 0.0
    %840 = vmatpush1.msra.mxu0 %v305
    %841 = vmatprep.subr.mxu0 0.0
    %842 = vmatpush1.msra.mxu0 %v306
    %843 = vmatprep.subr.mxu0 0.0
    %844 = vmatpush1.msra.mxu0 %v307
    %845 = vmatprep.subr.mxu0 0.0
    %846 = vmatpush1.msra.mxu0 0.0
    %847 = vmatprep.subr.mxu0 0.0
    %848 = vmatpush1.msra.mxu0 0.0
    %849 = vmatprep.subr.mxu0 0.0
    %850 = vmatpush1.msra.mxu0 0.0
    %851 = vmatprep.subr.mxu0 0.0
    %852 = vmatpush1.msra.mxu0 0.0
    %853 = vmatprep.subr.mxu0 0.0
    %854 = vmatpush1.msra.mxu0 0.0
    %855 = vmatprep.subr.mxu0 0.0
    %856 = vmatpush1.msra.mxu0 0.0
    %857 = vmatprep.subr.mxu0 0.0
    %858 = vmatpush1.msra.mxu0 0.0
    %859 = vmatprep.subr.mxu0 0.0
    %860 = vmatpush1.msra.mxu0 0.0
    %861 = vmatprep.subr.mxu0 0.0
    %862 = vmatpush1.msra.mxu0 0.0
    %863 = vmatprep.subr.mxu0 0.0
    %864 = vmatpush1.msra.mxu0 0.0
    %865 = vmatprep.subr.mxu0 0.0
    %866 = vmatpush1.msra.mxu0 0.0
    %867 = vmatprep.subr.mxu0 0.0
    %868 = vmatpush1.msra.mxu0 0.0
    %869 = vmatprep.subr.mxu0 0.0
    %870 = vmatpush1.msra.mxu0 0.0
    %871 = vmatprep.subr.mxu0 0.0
    %872 = vmatpush1.msra.mxu0 0.0
    %873 = vmatprep.subr.mxu0 0.0
    %874 = vmatpush1.msra.mxu0 0.0
    %875 = vmatprep.subr.mxu0 0.0
    %876 = vmatpush1.msra.mxu0 0.0
    %877 = vmatprep.subr.mxu0 0.0
    %878 = vmatpush1.msra.mxu0 0.0
    %879 = vmatprep.subr.mxu0 0.0
    %880 = vmatpush1.msra.mxu0 0.0
    %881 = vmatprep.subr.mxu0 0.0
    %882 = vmatpush1.msra.mxu0 0.0
    %883 = vmatprep.subr.mxu0 0.0
    %884 = vmatpush1.msra.mxu0 0.0
    %885 = vmatprep.subr.mxu0 0.0
    %886 = vmatpush1.msra.mxu0 0.0
    %887 = vmatprep.subr.mxu0 0.0
    %888 = vmatpush1.msra.mxu0 0.0
    %889 = vmatprep.subr.mxu0 0.0
    %890 = vmatpush1.msra.mxu0 0.0
    %891 = vmatprep.subr.mxu0 0.0
    %892 = vmatpush1.msra.mxu0 0.0
    %893 = vmatprep.subr.mxu0 0.0
    %894 = vmatpush1.msra.mxu0 0.0
    %895 = vmatprep.subr.mxu0 0.0
    %896 = vmatpush1.msra.mxu0 0.0
    %897 = vmatprep.subr.mxu0 0.0
    %898 = vmatpush1.msra.mxu0 0.0
    %899 = vmatprep.subr.mxu0 0.0
    %900 = vmatpush1.msra.mxu0 0.0
    %901 = vmatprep.mubr.f32.mxu0 0.0
    %902 = vmatmul.mubr.f32.gmra.mrb[0].mxu0 %v826
    %v903 = vpop.f32.mrb[0].mxu0
    %v904 = vadd.f32 %v807, %v903
    %v905 = vpop.f32.mrb[0].mxu0
    %906 = vmatprep.mubr.f32.mxu0 0.0
    %907 = vmatmul.mubr.f32.gmra.mrb[0].mxu0 %v829
    %v908 = vpop.f32.mrb[0].mxu0
    %v909 = vadd.f32 %v812, %v908
    %v910 = vpop.f32.mrb[0].mxu0
    %911 = vmatprep.mubr.f32.mxu0 0.0
    %912 = vmatmul.mubr.f32.gmra.mrb[0].mxu0 %v832
    %v913 = vpop.f32.mrb[0].mxu0
    %v914 = vadd.f32 %v817, %v913
    %v915 = vpop.f32.mrb[0].mxu0
    %916 = vmatprep.mubr.f32.mxu0 0.0
    %917 = vmatmul.mubr.f32.gmra.mrb[0].mxu0 %v835
    %v918 = vpop.f32.mrb[0].mxu0
    %v919 = vadd.f32 %v822, %v918
    %v920 = vpop.f32.mrb[0].mxu0
    %921 = vdwg.mxu0
    %v923 = vlaneseq
    %v924 = vshrl.u32 %v923, 7
    %v925 = vsub.s32 0, %v924
    %v926 = vrot.slane %v312, %v925
    %v928 = vadd.f32 %v904, %v926
    %v929 = vadd.f32 %v909, %v926
    %v930 = vadd.f32 %v914, %v926
    %v931 = vadd.f32 %v919, %v926
    %v932 = vxor.u32 %v928, 2147483648
    %v933 = vxor.u32 %v929, 2147483648
    %v934 = vxor.u32 %v930, 2147483648
    %v935 = vxor.u32 %v931, 2147483648
    %v936 = vmul.f32 %v932, 1.442695
    %v937 = vpow.pop %v936
    %v938 = vmul.f32 %v933, 1.442695
    %v939 = vpow.pop %v938
    %v940 = vmul.f32 %v934, 1.442695
    %v941 = vpow.pop %v940
    %v942 = vmul.f32 %v935, 1.442695
    %v943 = vpow.pop %v942
    %v944 = vadd.f32 %v937, 1.0
    %v945 = vadd.f32 %v939, 1.0
    %v946 = vadd.f32 %v941, 1.0
    %v947 = vadd.f32 %v943, 1.0
    %v948 = vrcp.pop %v944
    %v949 = vmul.f32 1.0, %v948
    %v950 = vrcp.pop %v945
    %v951 = vmul.f32 1.0, %v950
    %v952 = vrcp.pop %v946
    %v953 = vmul.f32 1.0, %v952
    %v954 = vrcp.pop %v947
    %v955 = vmul.f32 1.0, %v954
    %960 = vrot.lane.b32.xlu0 %v928, 32
    %v961 = vpop.permute.xlu0 %960
    %962 = vrot.lane.b32.xlu0 %v929, 32
    %v963 = vpop.permute.xlu0 %962
    %964 = vrot.lane.b32.xlu0 %v930, 32
    %v965 = vpop.permute.xlu0 %964
    %966 = vrot.lane.b32.xlu0 %v931, 32
    %v967 = vpop.permute.xlu0 %966
    %v972 = vmul.f32 %v949, %v961
    %v973 = vmul.f32 %v951, %v963
    %v974 = vmul.f32 %v953, %v965
    %v975 = vmul.f32 %v955, %v967
    %980 = vrot.lane.b32.xlu0 %v972, 64
    %v981 = vpop.permute.xlu0 %980
    %982 = vrot.lane.b32.xlu0 %v973, 64
    %v983 = vpop.permute.xlu0 %982
    %984 = vrot.lane.b32.xlu0 %v974, 64
    %v985 = vpop.permute.xlu0 %984
    %986 = vrot.lane.b32.xlu0 %v975, 64
    %v987 = vpop.permute.xlu0 %986
    %v992 = vadd.f32 %v928, %v981
    %v993 = vadd.f32 %v929, %v983
    %v994 = vadd.f32 %v930, %v985
    %v995 = vadd.f32 %v931, %v987
    %v996 = vtanh.pop %v992
    %v997 = vtanh.pop %v993
    %v998 = vtanh.pop %v994
    %v999 = vtanh.pop %v995
    %v1000 = vsub.f32 1.0, %v949
    %v1001 = vsub.f32 1.0, %v951
    %v1002 = vsub.f32 1.0, %v953
    %v1003 = vsub.f32 1.0, %v955
    %1008 = vrot.lane.b32.xlu0 %v996, 96
    %v1009 = vpop.permute.xlu0 %1008
    %1010 = vrot.lane.b32.xlu0 %v997, 96
    %v1011 = vpop.permute.xlu0 %1010
    %1012 = vrot.lane.b32.xlu0 %v998, 96
    %v1013 = vpop.permute.xlu0 %1012
    %1014 = vrot.lane.b32.xlu0 %v999, 96
    %v1015 = vpop.permute.xlu0 %1014
    %v1020 = vmul.f32 %v1000, %v1009
    %v1021 = vmul.f32 %v1001, %v1011
    %v1022 = vmul.f32 %v1002, %v1013
    %v1023 = vmul.f32 %v1003, %v1015
    %1024 = vrot.lane.b32.xlu0 %v242, 32
    %v1025 = vpop.permute.xlu0 %1024
    %1026 = vrot.lane.b32.xlu0 %v243, 32
    %v1027 = vpop.permute.xlu0 %1026
    %1028 = vrot.lane.b32.xlu0 %v244, 32
    %v1029 = vpop.permute.xlu0 %1028
    %1030 = vrot.lane.b32.xlu0 %v245, 32
    %v1031 = vpop.permute.xlu0 %1030
    %v1036 = vmul.f32 %v949, %v1025
    %v1037 = vmul.f32 %v951, %v1027
    %v1038 = vmul.f32 %v953, %v1029
    %v1039 = vmul.f32 %v955, %v1031
    %v1040 = vadd.f32 %v1020, %v1036
    %v1041 = vadd.f32 %v1021, %v1037
    %v1042 = vadd.f32 %v1022, %v1038
    %v1043 = vadd.f32 %v1023, %v1039
    %1048 = vrot.lane.b32.xlu0 %v1040, 96
    %v1049 = vpop.permute.xlu0 %1048
    %1050 = vrot.lane.b32.xlu0 %v1041, 96
    %v1051 = vpop.permute.xlu0 %1050
    %1052 = vrot.lane.b32.xlu0 %v1042, 96
    %v1053 = vpop.permute.xlu0 %1052
    %1054 = vrot.lane.b32.xlu0 %v1043, 96
    %v1055 = vpop.permute.xlu0 %1054
    %v1056 = vsel %vm319, %v1049, 0
    %v1058 = vsel %vm319, %v1051, 0
    %v1060 = vsel %vm319, %v1053, 0
    %v1062 = vsel %vm319, %v1055, 0
    %1064 = vmatprep.subr.mxu0 0.0
    %1065 = vmatpush1.msra.mxu0 %v299
    %1066 = vmatprep.subr.mxu0 0.0
    %1067 = vmatpush1.msra.mxu0 %v300
    %1068 = vmatprep.subr.mxu0 0.0
    %1069 = vmatpush1.msra.mxu0 %v301
    %1070 = vmatprep.subr.mxu0 0.0
    %1071 = vmatpush1.msra.mxu0 %v302
    %1072 = vmatprep.subr.mxu0 0.0
    %1073 = vmatpush1.msra.mxu0 0.0
    %1074 = vmatprep.subr.mxu0 0.0
    %1075 = vmatpush1.msra.mxu0 0.0
    %1076 = vmatprep.subr.mxu0 0.0
    %1077 = vmatpush1.msra.mxu0 0.0
    %1078 = vmatprep.subr.mxu0 0.0
    %1079 = vmatpush1.msra.mxu0 0.0
    %1080 = vmatprep.subr.mxu0 0.0
    %1081 = vmatpush1.msra.mxu0 0.0
    %1082 = vmatprep.subr.mxu0 0.0
    %1083 = vmatpush1.msra.mxu0 0.0
    %1084 = vmatprep.subr.mxu0 0.0
    %1085 = vmatpush1.msra.mxu0 0.0
    %1086 = vmatprep.subr.mxu0 0.0
    %1087 = vmatpush1.msra.mxu0 0.0
    %1088 = vmatprep.subr.mxu0 0.0
    %1089 = vmatpush1.msra.mxu0 0.0
    %1090 = vmatprep.subr.mxu0 0.0
    %1091 = vmatpush1.msra.mxu0 0.0
    %1092 = vmatprep.subr.mxu0 0.0
    %1093 = vmatpush1.msra.mxu0 0.0
    %1094 = vmatprep.subr.mxu0 0.0
    %1095 = vmatpush1.msra.mxu0 0.0
    %1096 = vmatprep.subr.mxu0 0.0
    %1097 = vmatpush1.msra.mxu0 0.0
    %1098 = vmatprep.subr.mxu0 0.0
    %1099 = vmatpush1.msra.mxu0 0.0
    %1100 = vmatprep.subr.mxu0 0.0
    %1101 = vmatpush1.msra.mxu0 0.0
    %1102 = vmatprep.subr.mxu0 0.0
    %1103 = vmatpush1.msra.mxu0 0.0
    %1104 = vmatprep.subr.mxu0 0.0
    %1105 = vmatpush1.msra.mxu0 0.0
    %1106 = vmatprep.subr.mxu0 0.0
    %1107 = vmatpush1.msra.mxu0 0.0
    %1108 = vmatprep.subr.mxu0 0.0
    %1109 = vmatpush1.msra.mxu0 0.0
    %1110 = vmatprep.subr.mxu0 0.0
    %1111 = vmatpush1.msra.mxu0 0.0
    %1112 = vmatprep.subr.mxu0 0.0
    %1113 = vmatpush1.msra.mxu0 0.0
    %1114 = vmatprep.subr.mxu0 0.0
    %1115 = vmatpush1.msra.mxu0 0.0
    %1116 = vmatprep.subr.mxu0 0.0
    %1117 = vmatpush1.msra.mxu0 0.0
    %1118 = vmatprep.subr.mxu0 0.0
    %1119 = vmatpush1.msra.mxu0 0.0
    %1120 = vmatprep.subr.mxu0 0.0
    %1121 = vmatpush1.msra.mxu0 0.0
    %1122 = vmatprep.subr.mxu0 0.0
    %1123 = vmatpush1.msra.mxu0 0.0
    %1124 = vmatprep.subr.mxu0 0.0
    %1125 = vmatpush1.msra.mxu0 0.0
    %1126 = vmatprep.subr.mxu0 0.0
    %1127 = vmatpush1.msra.mxu0 0.0
    %1128 = vmatprep.mubr.f32.mxu0 0.0
    %1129 = vmatmul.mubr.f32.gmra.mrb[0].mxu0 %v1056
    %v1130 = vpop.f32.mrb[0].mxu0
    %v1131 = vadd.f32 %v317, %v1130
    %v1132 = vpop.f32.mrb[0].mxu0
    %1133 = vmatprep.mubr.f32.mxu0 0.0
    %1134 = vmatmul.mubr.f32.gmra.mrb[0].mxu0 %v1058
    %v1135 = vpop.f32.mrb[0].mxu0
    %v1136 = vadd.f32 %v317, %v1135
    %v1137 = vpop.f32.mrb[0].mxu0
    %1138 = vmatprep.mubr.f32.mxu0 0.0
    %1139 = vmatmul.mubr.f32.gmra.mrb[0].mxu0 %v1060
    %v1140 = vpop.f32.mrb[0].mxu0
    %v1141 = vadd.f32 %v317, %v1140
    %v1142 = vpop.f32.mrb[0].mxu0
    %1143 = vmatprep.mubr.f32.mxu0 0.0
    %1144 = vmatmul.mubr.f32.gmra.mrb[0].mxu0 %v1062
    %v1145 = vpop.f32.mrb[0].mxu0
    %v1146 = vadd.f32 %v317, %v1145
    %v1147 = vpop.f32.mrb[0].mxu0
    %1148 = vdwg.mxu0
    %1153 = vrot.lane.b32.xlu0 %v1131, 96
    %v1154 = vpop.permute.xlu0 %1153
    %1155 = vrot.lane.b32.xlu0 %v1136, 96
    %v1156 = vpop.permute.xlu0 %1155
    %1157 = vrot.lane.b32.xlu0 %v1141, 96
    %v1158 = vpop.permute.xlu0 %1157
    %1159 = vrot.lane.b32.xlu0 %v1146, 96
    %v1160 = vpop.permute.xlu0 %1159
    %1165 = vmatprep.subr.mxu0 0.0
    %1166 = vmatpush1.msra.mxu0 %v1154
    %1167 = vmatprep.subr.mxu0 0.0
    %1168 = vmatpush1.msra.mxu0 %v1156
    %1169 = vmatprep.subr.mxu0 0.0
    %1170 = vmatpush1.msra.mxu0 %v1158
    %1171 = vmatprep.subr.mxu0 0.0
    %1172 = vmatpush1.msra.mxu0 %v1160
    %1173 = vmatprep.subr.mxu0 0.0
    %1174 = vmatpush1.msra.mxu0 0.0
    %1175 = vmatprep.subr.mxu0 0.0
    %1176 = vmatpush1.msra.mxu0 0.0
    %1177 = vmatprep.subr.mxu0 0.0
    %1178 = vmatpush1.msra.mxu0 0.0
    %1179 = vmatprep.subr.mxu0 0.0
    %1180 = vmatpush1.msra.mxu0 0.0
    %1181 = vmatprep.subr.mxu0 0.0
    %1182 = vmatpush1.msra.mxu0 0.0
    %1183 = vmatprep.subr.mxu0 0.0
    %1184 = vmatpush1.msra.mxu0 0.0
    %1185 = vmatprep.subr.mxu0 0.0
    %1186 = vmatpush1.msra.mxu0 0.0
    %1187 = vmatprep.subr.mxu0 0.0
    %1188 = vmatpush1.msra.mxu0 0.0
    %1189 = vmatprep.subr.mxu0 0.0
    %1190 = vmatpush1.msra.mxu0 0.0
    %1191 = vmatprep.subr.mxu0 0.0
    %1192 = vmatpush1.msra.mxu0 0.0
    %1193 = vmatprep.subr.mxu0 0.0
    %1194 = vmatpush1.msra.mxu0 0.0
    %1195 = vmatprep.subr.mxu0 0.0
    %1196 = vmatpush1.msra.mxu0 0.0
    %1197 = vmatprep.subr.mxu0 0.0
    %1198 = vmatpush1.msra.mxu0 0.0
    %1199 = vmatprep.subr.mxu0 0.0
    %1200 = vmatpush1.msra.mxu0 0.0
    %1201 = vmatprep.subr.mxu0 0.0
    %1202 = vmatpush1.msra.mxu0 0.0
    %1203 = vmatprep.subr.mxu0 0.0
    %1204 = vmatpush1.msra.mxu0 0.0
    %1205 = vmatprep.subr.mxu0 0.0
    %1206 = vmatpush1.msra.mxu0 0.0
    %1207 = vmatprep.subr.mxu0 0.0
    %1208 = vmatpush1.msra.mxu0 0.0
    %1209 = vmatprep.subr.mxu0 0.0
    %1210 = vmatpush1.msra.mxu0 0.0
    %1211 = vmatprep.subr.mxu0 0.0
    %1212 = vmatpush1.msra.mxu0 0.0
    %1213 = vmatprep.subr.mxu0 0.0
    %1214 = vmatpush1.msra.mxu0 0.0
    %1215 = vmatprep.subr.mxu0 0.0
    %1216 = vmatpush1.msra.mxu0 0.0
    %1217 = vmatprep.subr.mxu0 0.0
    %1218 = vmatpush1.msra.mxu0 0.0
    %1219 = vmatprep.subr.mxu0 0.0
    %1220 = vmatpush1.msra.mxu0 0.0
    %1221 = vmatprep.subr.mxu0 0.0
    %1222 = vmatpush1.msra.mxu0 0.0
    %1223 = vmatprep.subr.mxu0 0.0
    %1224 = vmatpush1.msra.mxu0 0.0
    %1225 = vmatprep.subr.mxu0 0.0
    %1226 = vmatpush1.msra.mxu0 0.0
    %1227 = vmatprep.subr.mxu0 0.0
    %1228 = vmatpush1.msra.mxu0 0.0
    %1229 = vmatprep.mubr.f32.mxu0 0.0
    %1230 = vmatmul.mubr.f32.gmra.mrb[0].mxu0 %v434
    %v1231 = vpop.f32.mrb[0].mxu0
    %v1232 = vadd.f32 0.0, %v1231
    %v1233 = vpop.f32.mrb[0].mxu0
    %1234 = vmatprep.mubr.f32.mxu0 0.0
    %1235 = vmatmul.mubr.f32.gmra.mrb[0].mxu0 %v437
    %v1236 = vpop.f32.mrb[0].mxu0
    %v1237 = vadd.f32 0.0, %v1236
    %v1238 = vpop.f32.mrb[0].mxu0
    %1239 = vmatprep.mubr.f32.mxu0 0.0
    %1240 = vmatmul.mubr.f32.gmra.mrb[0].mxu0 %v440
    %v1241 = vpop.f32.mrb[0].mxu0
    %v1242 = vadd.f32 0.0, %v1241
    %v1243 = vpop.f32.mrb[0].mxu0
    %1244 = vmatprep.mubr.f32.mxu0 0.0
    %1245 = vmatmul.mubr.f32.gmra.mrb[0].mxu0 %v443
    %v1246 = vpop.f32.mrb[0].mxu0
    %v1247 = vadd.f32 0.0, %v1246
    %v1248 = vpop.f32.mrb[0].mxu0
    %1249 = vdwg.mxu0
    %1250 = vmatprep.subr.mxu0 0.0
    %1251 = vmatpush1.msra.mxu0 %v1131
    %1252 = vmatprep.subr.mxu0 0.0
    %1253 = vmatpush1.msra.mxu0 %v1136
    %1254 = vmatprep.subr.mxu0 0.0
    %1255 = vmatpush1.msra.mxu0 %v1141
    %1256 = vmatprep.subr.mxu0 0.0
    %1257 = vmatpush1.msra.mxu0 %v1146
    %1258 = vmatprep.subr.mxu0 0.0
    %1259 = vmatpush1.msra.mxu0 0.0
    %1260 = vmatprep.subr.mxu0 0.0
    %1261 = vmatpush1.msra.mxu0 0.0
    %1262 = vmatprep.subr.mxu0 0.0
    %1263 = vmatpush1.msra.mxu0 0.0
    %1264 = vmatprep.subr.mxu0 0.0
    %1265 = vmatpush1.msra.mxu0 0.0
    %1266 = vmatprep.subr.mxu0 0.0
    %1267 = vmatpush1.msra.mxu0 0.0
    %1268 = vmatprep.subr.mxu0 0.0
    %1269 = vmatpush1.msra.mxu0 0.0
    %1270 = vmatprep.subr.mxu0 0.0
    %1271 = vmatpush1.msra.mxu0 0.0
    %1272 = vmatprep.subr.mxu0 0.0
    %1273 = vmatpush1.msra.mxu0 0.0
    %1274 = vmatprep.subr.mxu0 0.0
    %1275 = vmatpush1.msra.mxu0 0.0
    %1276 = vmatprep.subr.mxu0 0.0
    %1277 = vmatpush1.msra.mxu0 0.0
    %1278 = vmatprep.subr.mxu0 0.0
    %1279 = vmatpush1.msra.mxu0 0.0
    %1280 = vmatprep.subr.mxu0 0.0
    %1281 = vmatpush1.msra.mxu0 0.0
    %1282 = vmatprep.subr.mxu0 0.0
    %1283 = vmatpush1.msra.mxu0 0.0
    %1284 = vmatprep.subr.mxu0 0.0
    %1285 = vmatpush1.msra.mxu0 0.0
    %1286 = vmatprep.subr.mxu0 0.0
    %1287 = vmatpush1.msra.mxu0 0.0
    %1288 = vmatprep.subr.mxu0 0.0
    %1289 = vmatpush1.msra.mxu0 0.0
    %1290 = vmatprep.subr.mxu0 0.0
    %1291 = vmatpush1.msra.mxu0 0.0
    %1292 = vmatprep.subr.mxu0 0.0
    %1293 = vmatpush1.msra.mxu0 0.0
    %1294 = vmatprep.subr.mxu0 0.0
    %1295 = vmatpush1.msra.mxu0 0.0
    %1296 = vmatprep.subr.mxu0 0.0
    %1297 = vmatpush1.msra.mxu0 0.0
    %1298 = vmatprep.subr.mxu0 0.0
    %1299 = vmatpush1.msra.mxu0 0.0
    %1300 = vmatprep.subr.mxu0 0.0
    %1301 = vmatpush1.msra.mxu0 0.0
    %1302 = vmatprep.subr.mxu0 0.0
    %1303 = vmatpush1.msra.mxu0 0.0
    %1304 = vmatprep.subr.mxu0 0.0
    %1305 = vmatpush1.msra.mxu0 0.0
    %1306 = vmatprep.subr.mxu0 0.0
    %1307 = vmatpush1.msra.mxu0 0.0
    %1308 = vmatprep.subr.mxu0 0.0
    %1309 = vmatpush1.msra.mxu0 0.0
    %1310 = vmatprep.subr.mxu0 0.0
    %1311 = vmatpush1.msra.mxu0 0.0
    %1312 = vmatprep.subr.mxu0 0.0
    %1313 = vmatpush1.msra.mxu0 0.0
    %1314 = vmatprep.mubr.f32.mxu0 0.0
    %1315 = vmatmul.mubr.f32.gmra.mrb[0].mxu0 %v531
    %v1316 = vpop.f32.mrb[0].mxu0
    %v1317 = vadd.f32 %v1232, %v1316
    %v1318 = vpop.f32.mrb[0].mxu0
    %1319 = vmatprep.mubr.f32.mxu0 0.0
    %1320 = vmatmul.mubr.f32.gmra.mrb[0].mxu0 %v534
    %v1321 = vpop.f32.mrb[0].mxu0
    %v1322 = vadd.f32 %v1237, %v1321
    %v1323 = vpop.f32.mrb[0].mxu0
    %1324 = vmatprep.mubr.f32.mxu0 0.0
    %1325 = vmatmul.mubr.f32.gmra.mrb[0].mxu0 %v537
    %v1326 = vpop.f32.mrb[0].mxu0
    %v1327 = vadd.f32 %v1242, %v1326
    %v1328 = vpop.f32.mrb[0].mxu0
    %1329 = vmatprep.mubr.f32.mxu0 0.0
    %1330 = vmatmul.mubr.f32.gmra.mrb[0].mxu0 %v540
    %v1331 = vpop.f32.mrb[0].mxu0
    %v1332 = vadd.f32 %v1247, %v1331
    %v1333 = vpop.f32.mrb[0].mxu0
    %1334 = vdwg.mxu0
    %1335 = vrot.lane.b32.xlu0 %v1131, 64
    %v1336 = vpop.permute.xlu0 %1335
    %1337 = vrot.lane.b32.xlu0 %v1136, 64
    %v1338 = vpop.permute.xlu0 %1337
    %1339 = vrot.lane.b32.xlu0 %v1141, 64
    %v1340 = vpop.permute.xlu0 %1339
    %1341 = vrot.lane.b32.xlu0 %v1146, 64
    %v1342 = vpop.permute.xlu0 %1341
    %1347 = vmatprep.subr.mxu0 0.0
    %1348 = vmatpush1.msra.mxu0 %v1336
    %1349 = vmatprep.subr.mxu0 0.0
    %1350 = vmatpush1.msra.mxu0 %v1338
    %1351 = vmatprep.subr.mxu0 0.0
    %1352 = vmatpush1.msra.mxu0 %v1340
    %1353 = vmatprep.subr.mxu0 0.0
    %1354 = vmatpush1.msra.mxu0 %v1342
    %1355 = vmatprep.subr.mxu0 0.0
    %1356 = vmatpush1.msra.mxu0 0.0
    %1357 = vmatprep.subr.mxu0 0.0
    %1358 = vmatpush1.msra.mxu0 0.0
    %1359 = vmatprep.subr.mxu0 0.0
    %1360 = vmatpush1.msra.mxu0 0.0
    %1361 = vmatprep.subr.mxu0 0.0
    %1362 = vmatpush1.msra.mxu0 0.0
    %1363 = vmatprep.subr.mxu0 0.0
    %1364 = vmatpush1.msra.mxu0 0.0
    %1365 = vmatprep.subr.mxu0 0.0
    %1366 = vmatpush1.msra.mxu0 0.0
    %1367 = vmatprep.subr.mxu0 0.0
    %1368 = vmatpush1.msra.mxu0 0.0
    %1369 = vmatprep.subr.mxu0 0.0
    %1370 = vmatpush1.msra.mxu0 0.0
    %1371 = vmatprep.subr.mxu0 0.0
    %1372 = vmatpush1.msra.mxu0 0.0
    %1373 = vmatprep.subr.mxu0 0.0
    %1374 = vmatpush1.msra.mxu0 0.0
    %1375 = vmatprep.subr.mxu0 0.0
    %1376 = vmatpush1.msra.mxu0 0.0
    %1377 = vmatprep.subr.mxu0 0.0
    %1378 = vmatpush1.msra.mxu0 0.0
    %1379 = vmatprep.subr.mxu0 0.0
    %1380 = vmatpush1.msra.mxu0 0.0
    %1381 = vmatprep.subr.mxu0 0.0
    %1382 = vmatpush1.msra.mxu0 0.0
    %1383 = vmatprep.subr.mxu0 0.0
    %1384 = vmatpush1.msra.mxu0 0.0
    %1385 = vmatprep.subr.mxu0 0.0
    %1386 = vmatpush1.msra.mxu0 0.0
    %1387 = vmatprep.subr.mxu0 0.0
    %1388 = vmatpush1.msra.mxu0 0.0
    %1389 = vmatprep.subr.mxu0 0.0
    %1390 = vmatpush1.msra.mxu0 0.0
    %1391 = vmatprep.subr.mxu0 0.0
    %1392 = vmatpush1.msra.mxu0 0.0
    %1393 = vmatprep.subr.mxu0 0.0
    %1394 = vmatpush1.msra.mxu0 0.0
    %1395 = vmatprep.subr.mxu0 0.0
    %1396 = vmatpush1.msra.mxu0 0.0
    %1397 = vmatprep.subr.mxu0 0.0
    %1398 = vmatpush1.msra.mxu0 0.0
    %1399 = vmatprep.subr.mxu0 0.0
    %1400 = vmatpush1.msra.mxu0 0.0
    %1401 = vmatprep.subr.mxu0 0.0
    %1402 = vmatpush1.msra.mxu0 0.0
    %1403 = vmatprep.subr.mxu0 0.0
    %1404 = vmatpush1.msra.mxu0 0.0
    %1405 = vmatprep.subr.mxu0 0.0
    %1406 = vmatpush1.msra.mxu0 0.0
    %1407 = vmatprep.subr.mxu0 0.0
    %1408 = vmatpush1.msra.mxu0 0.0
    %1409 = vmatprep.subr.mxu0 0.0
    %1410 = vmatpush1.msra.mxu0 0.0
    %1411 = vmatprep.mubr.f32.mxu0 0.0
    %1412 = vmatmul.mubr.f32.gmra.mrb[0].mxu0 %v640
    %v1413 = vpop.f32.mrb[0].mxu0
    %v1414 = vadd.f32 0.0, %v1413
    %v1415 = vpop.f32.mrb[0].mxu0
    %1416 = vmatprep.mubr.f32.mxu0 0.0
    %1417 = vmatmul.mubr.f32.gmra.mrb[0].mxu0 %v643
    %v1418 = vpop.f32.mrb[0].mxu0
    %v1419 = vadd.f32 0.0, %v1418
    %v1420 = vpop.f32.mrb[0].mxu0
    %1421 = vmatprep.mubr.f32.mxu0 0.0
    %1422 = vmatmul.mubr.f32.gmra.mrb[0].mxu0 %v646
    %v1423 = vpop.f32.mrb[0].mxu0
    %v1424 = vadd.f32 0.0, %v1423
    %v1425 = vpop.f32.mrb[0].mxu0
    %1426 = vmatprep.mubr.f32.mxu0 0.0
    %1427 = vmatmul.mubr.f32.gmra.mrb[0].mxu0 %v649
    %v1428 = vpop.f32.mrb[0].mxu0
    %v1429 = vadd.f32 0.0, %v1428
    %v1430 = vpop.f32.mrb[0].mxu0
    %1431 = vdwg.mxu0
    %v1432 = vadd.f32 %v1317, %v1414
    %v1433 = vadd.f32 %v1322, %v1419
    %v1434 = vadd.f32 %v1327, %v1424
    %v1435 = vadd.f32 %v1332, %v1429
    %1436 = vmatprep.subr.mxu0 0.0
    %1437 = vmatpush1.msra.mxu0 %v308
    %1438 = vmatprep.subr.mxu0 0.0
    %1439 = vmatpush1.msra.mxu0 %v309
    %1440 = vmatprep.subr.mxu0 0.0
    %1441 = vmatpush1.msra.mxu0 %v310
    %1442 = vmatprep.subr.mxu0 0.0
    %1443 = vmatpush1.msra.mxu0 %v311
    %1444 = vmatprep.subr.mxu0 0.0
    %1445 = vmatpush1.msra.mxu0 0.0
    %1446 = vmatprep.subr.mxu0 0.0
    %1447 = vmatpush1.msra.mxu0 0.0
    %1448 = vmatprep.subr.mxu0 0.0
    %1449 = vmatpush1.msra.mxu0 0.0
    %1450 = vmatprep.subr.mxu0 0.0
    %1451 = vmatpush1.msra.mxu0 0.0
    %1452 = vmatprep.subr.mxu0 0.0
    %1453 = vmatpush1.msra.mxu0 0.0
    %1454 = vmatprep.subr.mxu0 0.0
    %1455 = vmatpush1.msra.mxu0 0.0
    %1456 = vmatprep.subr.mxu0 0.0
    %1457 = vmatpush1.msra.mxu0 0.0
    %1458 = vmatprep.subr.mxu0 0.0
    %1459 = vmatpush1.msra.mxu0 0.0
    %1460 = vmatprep.subr.mxu0 0.0
    %1461 = vmatpush1.msra.mxu0 0.0
    %1462 = vmatprep.subr.mxu0 0.0
    %1463 = vmatpush1.msra.mxu0 0.0
    %1464 = vmatprep.subr.mxu0 0.0
    %1465 = vmatpush1.msra.mxu0 0.0
    %1466 = vmatprep.subr.mxu0 0.0
    %1467 = vmatpush1.msra.mxu0 0.0
    %1468 = vmatprep.subr.mxu0 0.0
    %1469 = vmatpush1.msra.mxu0 0.0
    %1470 = vmatprep.subr.mxu0 0.0
    %1471 = vmatpush1.msra.mxu0 0.0
    %1472 = vmatprep.subr.mxu0 0.0
    %1473 = vmatpush1.msra.mxu0 0.0
    %1474 = vmatprep.subr.mxu0 0.0
    %1475 = vmatpush1.msra.mxu0 0.0
    %1476 = vmatprep.subr.mxu0 0.0
    %1477 = vmatpush1.msra.mxu0 0.0
    %1478 = vmatprep.subr.mxu0 0.0
    %1479 = vmatpush1.msra.mxu0 0.0
    %1480 = vmatprep.subr.mxu0 0.0
    %1481 = vmatpush1.msra.mxu0 0.0
    %1482 = vmatprep.subr.mxu0 0.0
    %1483 = vmatpush1.msra.mxu0 0.0
    %1484 = vmatprep.subr.mxu0 0.0
    %1485 = vmatpush1.msra.mxu0 0.0
    %1486 = vmatprep.subr.mxu0 0.0
    %1487 = vmatpush1.msra.mxu0 0.0
    %1488 = vmatprep.subr.mxu0 0.0
    %1489 = vmatpush1.msra.mxu0 0.0
    %1490 = vmatprep.subr.mxu0 0.0
    %1491 = vmatpush1.msra.mxu0 0.0
    %1492 = vmatprep.subr.mxu0 0.0
    %1493 = vmatpush1.msra.mxu0 0.0
    %1494 = vmatprep.subr.mxu0 0.0
    %1495 = vmatpush1.msra.mxu0 0.0
    %1496 = vmatprep.subr.mxu0 0.0
    %1497 = vmatpush1.msra.mxu0 0.0
    %1498 = vmatprep.subr.mxu0 0.0
    %1499 = vmatpush1.msra.mxu0 0.0
    %1500 = vmatprep.mubr.f32.mxu0 0.0
    %1501 = vmatmul.mubr.f32.gmra.mrb[0].mxu0 %v1056
    %v1502 = vpop.f32.mrb[0].mxu0
    %v1503 = vadd.f32 0.0, %v1502
    %v1504 = vpop.f32.mrb[0].mxu0
    %1505 = vmatprep.mubr.f32.mxu0 0.0
    %1506 = vmatmul.mubr.f32.gmra.mrb[0].mxu0 %v1058
    %v1507 = vpop.f32.mrb[0].mxu0
    %v1508 = vadd.f32 0.0, %v1507
    %v1509 = vpop.f32.mrb[0].mxu0
    %1510 = vmatprep.mubr.f32.mxu0 0.0
    %1511 = vmatmul.mubr.f32.gmra.mrb[0].mxu0 %v1060
    %v1512 = vpop.f32.mrb[0].mxu0
    %v1513 = vadd.f32 0.0, %v1512
    %v1514 = vpop.f32.mrb[0].mxu0
    %1515 = vmatprep.mubr.f32.mxu0 0.0
    %1516 = vmatmul.mubr.f32.gmra.mrb[0].mxu0 %v1062
    %v1517 = vpop.f32.mrb[0].mxu0
    %v1518 = vadd.f32 0.0, %v1517
    %v1519 = vpop.f32.mrb[0].mxu0
    %1520 = vdwg.mxu0
    %v1522 = vsel %vm319, %v1432, 0
    %v1525 = vsel %vm319, %v1433, 0
    %v1528 = vsel %vm319, %v1434, 0
    %v1531 = vsel %vm319, %v1435, 0
    %1533 = vmatprep.subr.mxu0 0.0
    %1534 = vmatpush1.msra.mxu0 %v304
    %1535 = vmatprep.subr.mxu0 0.0
    %1536 = vmatpush1.msra.mxu0 %v305
    %1537 = vmatprep.subr.mxu0 0.0
    %1538 = vmatpush1.msra.mxu0 %v306
    %1539 = vmatprep.subr.mxu0 0.0
    %1540 = vmatpush1.msra.mxu0 %v307
    %1541 = vmatprep.subr.mxu0 0.0
    %1542 = vmatpush1.msra.mxu0 0.0
    %1543 = vmatprep.subr.mxu0 0.0
    %1544 = vmatpush1.msra.mxu0 0.0
    %1545 = vmatprep.subr.mxu0 0.0
    %1546 = vmatpush1.msra.mxu0 0.0
    %1547 = vmatprep.subr.mxu0 0.0
    %1548 = vmatpush1.msra.mxu0 0.0
    %1549 = vmatprep.subr.mxu0 0.0
    %1550 = vmatpush1.msra.mxu0 0.0
    %1551 = vmatprep.subr.mxu0 0.0
    %1552 = vmatpush1.msra.mxu0 0.0
    %1553 = vmatprep.subr.mxu0 0.0
    %1554 = vmatpush1.msra.mxu0 0.0
    %1555 = vmatprep.subr.mxu0 0.0
    %1556 = vmatpush1.msra.mxu0 0.0
    %1557 = vmatprep.subr.mxu0 0.0
    %1558 = vmatpush1.msra.mxu0 0.0
    %1559 = vmatprep.subr.mxu0 0.0
    %1560 = vmatpush1.msra.mxu0 0.0
    %1561 = vmatprep.subr.mxu0 0.0
    %1562 = vmatpush1.msra.mxu0 0.0
    %1563 = vmatprep.subr.mxu0 0.0
    %1564 = vmatpush1.msra.mxu0 0.0
    %1565 = vmatprep.subr.mxu0 0.0
    %1566 = vmatpush1.msra.mxu0 0.0
    %1567 = vmatprep.subr.mxu0 0.0
    %1568 = vmatpush1.msra.mxu0 0.0
    %1569 = vmatprep.subr.mxu0 0.0
    %1570 = vmatpush1.msra.mxu0 0.0
    %1571 = vmatprep.subr.mxu0 0.0
    %1572 = vmatpush1.msra.mxu0 0.0
    %1573 = vmatprep.subr.mxu0 0.0
    %1574 = vmatpush1.msra.mxu0 0.0
    %1575 = vmatprep.subr.mxu0 0.0
    %1576 = vmatpush1.msra.mxu0 0.0
    %1577 = vmatprep.subr.mxu0 0.0
    %1578 = vmatpush1.msra.mxu0 0.0
    %1579 = vmatprep.subr.mxu0 0.0
    %1580 = vmatpush1.msra.mxu0 0.0
    %1581 = vmatprep.subr.mxu0 0.0
    %1582 = vmatpush1.msra.mxu0 0.0
    %1583 = vmatprep.subr.mxu0 0.0
    %1584 = vmatpush1.msra.mxu0 0.0
    %1585 = vmatprep.subr.mxu0 0.0
    %1586 = vmatpush1.msra.mxu0 0.0
    %1587 = vmatprep.subr.mxu0 0.0
    %1588 = vmatpush1.msra.mxu0 0.0
    %1589 = vmatprep.subr.mxu0 0.0
    %1590 = vmatpush1.msra.mxu0 0.0
    %1591 = vmatprep.subr.mxu0 0.0
    %1592 = vmatpush1.msra.mxu0 0.0
    %1593 = vmatprep.subr.mxu0 0.0
    %1594 = vmatpush1.msra.mxu0 0.0
    %1595 = vmatprep.subr.mxu0 0.0
    %1596 = vmatpush1.msra.mxu0 0.0
    %1597 = vmatprep.mubr.f32.mxu0 0.0
    %1598 = vmatmul.mubr.f32.gmra.mrb[0].mxu0 %v1522
    %v1599 = vpop.f32.mrb[0].mxu0
    %v1600 = vadd.f32 %v1503, %v1599
    %v1601 = vpop.f32.mrb[0].mxu0
    %1602 = vmatprep.mubr.f32.mxu0 0.0
    %1603 = vmatmul.mubr.f32.gmra.mrb[0].mxu0 %v1525
    %v1604 = vpop.f32.mrb[0].mxu0
    %v1605 = vadd.f32 %v1508, %v1604
    %v1606 = vpop.f32.mrb[0].mxu0
    %1607 = vmatprep.mubr.f32.mxu0 0.0
    %1608 = vmatmul.mubr.f32.gmra.mrb[0].mxu0 %v1528
    %v1609 = vpop.f32.mrb[0].mxu0
    %v1610 = vadd.f32 %v1513, %v1609
    %v1611 = vpop.f32.mrb[0].mxu0
    %1612 = vmatprep.mubr.f32.mxu0 0.0
    %1613 = vmatmul.mubr.f32.gmra.mrb[0].mxu0 %v1531
    %v1614 = vpop.f32.mrb[0].mxu0
    %v1615 = vadd.f32 %v1518, %v1614
    %v1616 = vpop.f32.mrb[0].mxu0
    %1617 = vdwg.mxu0
    %v1618 = vadd.f32 %v1600, %v926
    %v1619 = vadd.f32 %v1605, %v926
    %v1620 = vadd.f32 %v1610, %v926
    %v1621 = vadd.f32 %v1615, %v926
    %v1622 = vxor.u32 %v1618, 2147483648
    %v1623 = vxor.u32 %v1619, 2147483648
    %v1624 = vxor.u32 %v1620, 2147483648
    %v1625 = vxor.u32 %v1621, 2147483648
    %v1626 = vmul.f32 %v1622, 1.442695
    %v1627 = vpow.pop %v1626
    %v1628 = vmul.f32 %v1623, 1.442695
    %v1629 = vpow.pop %v1628
    %v1630 = vmul.f32 %v1624, 1.442695
    %v1631 = vpow.pop %v1630
    %v1632 = vmul.f32 %v1625, 1.442695
    %v1633 = vpow.pop %v1632
    %v1634 = vadd.f32 %v1627, 1.0
    %v1635 = vadd.f32 %v1629, 1.0
    %v1636 = vadd.f32 %v1631, 1.0
    %v1637 = vadd.f32 %v1633, 1.0
    %v1638 = vrcp.pop %v1634
    %v1639 = vmul.f32 1.0, %v1638
    %v1640 = vrcp.pop %v1635
    %v1641 = vmul.f32 1.0, %v1640
    %v1642 = vrcp.pop %v1636
    %v1643 = vmul.f32 1.0, %v1642
    %v1644 = vrcp.pop %v1637
    %v1645 = vmul.f32 1.0, %v1644
    %1650 = vrot.lane.b32.xlu0 %v1618, 32
    %v1651 = vpop.permute.xlu0 %1650
    %1652 = vrot.lane.b32.xlu0 %v1619, 32
    %v1653 = vpop.permute.xlu0 %1652
    %1654 = vrot.lane.b32.xlu0 %v1620, 32
    %v1655 = vpop.permute.xlu0 %1654
    %1656 = vrot.lane.b32.xlu0 %v1621, 32
    %v1657 = vpop.permute.xlu0 %1656
    %v1662 = vmul.f32 %v1639, %v1651
    %v1663 = vmul.f32 %v1641, %v1653
    %v1664 = vmul.f32 %v1643, %v1655
    %v1665 = vmul.f32 %v1645, %v1657
    %1670 = vrot.lane.b32.xlu0 %v1662, 64
    %v1671 = vpop.permute.xlu0 %1670
    %1672 = vrot.lane.b32.xlu0 %v1663, 64
    %v1673 = vpop.permute.xlu0 %1672
    %1674 = vrot.lane.b32.xlu0 %v1664, 64
    %v1675 = vpop.permute.xlu0 %1674
    %1676 = vrot.lane.b32.xlu0 %v1665, 64
    %v1677 = vpop.permute.xlu0 %1676
    %v1682 = vadd.f32 %v1618, %v1671
    %v1683 = vadd.f32 %v1619, %v1673
    %v1684 = vadd.f32 %v1620, %v1675
    %v1685 = vadd.f32 %v1621, %v1677
    %v1686 = vtanh.pop %v1682
    %v1687 = vtanh.pop %v1683
    %v1688 = vtanh.pop %v1684
    %v1689 = vtanh.pop %v1685
    %v1690 = vsub.f32 1.0, %v1639
    %v1691 = vsub.f32 1.0, %v1641
    %v1692 = vsub.f32 1.0, %v1643
    %v1693 = vsub.f32 1.0, %v1645
    %1698 = vrot.lane.b32.xlu0 %v1686, 96
    %v1699 = vpop.permute.xlu0 %1698
    %1700 = vrot.lane.b32.xlu0 %v1687, 96
    %v1701 = vpop.permute.xlu0 %1700
    %1702 = vrot.lane.b32.xlu0 %v1688, 96
    %v1703 = vpop.permute.xlu0 %1702
    %1704 = vrot.lane.b32.xlu0 %v1689, 96
    %v1705 = vpop.permute.xlu0 %1704
    %v1710 = vmul.f32 %v1690, %v1699
    %v1711 = vmul.f32 %v1691, %v1701
    %v1712 = vmul.f32 %v1692, %v1703
    %v1713 = vmul.f32 %v1693, %v1705
    %v1714 = vmul.f32 %v1639, %v1040
    %v1715 = vmul.f32 %v1641, %v1041
    %v1716 = vmul.f32 %v1643, %v1042
    %v1717 = vmul.f32 %v1645, %v1043
    %v1718 = vadd.f32 %v1710, %v1714
    %v1719 = vadd.f32 %v1711, %v1715
    %v1720 = vadd.f32 %v1712, %v1716
    %v1721 = vadd.f32 %v1713, %v1717
    %1726 = vrot.lane.b32.xlu0 %v1718, 96
    %v1727 = vpop.permute.xlu0 %1726
    %1728 = vrot.lane.b32.xlu0 %v1719, 96
    %v1729 = vpop.permute.xlu0 %1728
    %1730 = vrot.lane.b32.xlu0 %v1720, 96
    %v1731 = vpop.permute.xlu0 %1730
    %1732 = vrot.lane.b32.xlu0 %v1721, 96
    %v1733 = vpop.permute.xlu0 %1732
    %v1734 = vsel %vm319, %v1727, 0
    %v1736 = vsel %vm319, %v1729, 0
    %v1738 = vsel %vm319, %v1731, 0
    %v1740 = vsel %vm319, %v1733, 0
    %1742 = vmatprep.subr.mxu0 0.0
    %1743 = vmatpush1.msra.mxu0 %v299
    %1744 = vmatprep.subr.mxu0 0.0
    %1745 = vmatpush1.msra.mxu0 %v300
    %1746 = vmatprep.subr.mxu0 0.0
    %1747 = vmatpush1.msra.mxu0 %v301
    %1748 = vmatprep.subr.mxu0 0.0
    %1749 = vmatpush1.msra.mxu0 %v302
    %1750 = vmatprep.subr.mxu0 0.0
    %1751 = vmatpush1.msra.mxu0 0.0
    %1752 = vmatprep.subr.mxu0 0.0
    %1753 = vmatpush1.msra.mxu0 0.0
    %1754 = vmatprep.subr.mxu0 0.0
    %1755 = vmatpush1.msra.mxu0 0.0
    %1756 = vmatprep.subr.mxu0 0.0
    %1757 = vmatpush1.msra.mxu0 0.0
    %1758 = vmatprep.subr.mxu0 0.0
    %1759 = vmatpush1.msra.mxu0 0.0
    %1760 = vmatprep.subr.mxu0 0.0
    %1761 = vmatpush1.msra.mxu0 0.0
    %1762 = vmatprep.subr.mxu0 0.0
    %1763 = vmatpush1.msra.mxu0 0.0
    %1764 = vmatprep.subr.mxu0 0.0
    %1765 = vmatpush1.msra.mxu0 0.0
    %1766 = vmatprep.subr.mxu0 0.0
    %1767 = vmatpush1.msra.mxu0 0.0
    %1768 = vmatprep.subr.mxu0 0.0
    %1769 = vmatpush1.msra.mxu0 0.0
    %1770 = vmatprep.subr.mxu0 0.0
    %1771 = vmatpush1.msra.mxu0 0.0
    %1772 = vmatprep.subr.mxu0 0.0
    %1773 = vmatpush1.msra.mxu0 0.0
    %1774 = vmatprep.subr.mxu0 0.0
    %1775 = vmatpush1.msra.mxu0 0.0
    %1776 = vmatprep.subr.mxu0 0.0
    %1777 = vmatpush1.msra.mxu0 0.0
    %1778 = vmatprep.subr.mxu0 0.0
    %1779 = vmatpush1.msra.mxu0 0.0
    %1780 = vmatprep.subr.mxu0 0.0
    %1781 = vmatpush1.msra.mxu0 0.0
    %1782 = vmatprep.subr.mxu0 0.0
    %1783 = vmatpush1.msra.mxu0 0.0
    %1784 = vmatprep.subr.mxu0 0.0
    %1785 = vmatpush1.msra.mxu0 0.0
    %1786 = vmatprep.subr.mxu0 0.0
    %1787 = vmatpush1.msra.mxu0 0.0
    %1788 = vmatprep.subr.mxu0 0.0
    %1789 = vmatpush1.msra.mxu0 0.0
    %1790 = vmatprep.subr.mxu0 0.0
    %1791 = vmatpush1.msra.mxu0 0.0
    %1792 = vmatprep.subr.mxu0 0.0
    %1793 = vmatpush1.msra.mxu0 0.0
    %1794 = vmatprep.subr.mxu0 0.0
    %1795 = vmatpush1.msra.mxu0 0.0
    %1796 = vmatprep.subr.mxu0 0.0
    %1797 = vmatpush1.msra.mxu0 0.0
    %1798 = vmatprep.subr.mxu0 0.0
    %1799 = vmatpush1.msra.mxu0 0.0
    %1800 = vmatprep.subr.mxu0 0.0
    %1801 = vmatpush1.msra.mxu0 0.0
    %1802 = vmatprep.subr.mxu0 0.0
    %1803 = vmatpush1.msra.mxu0 0.0
    %1804 = vmatprep.subr.mxu0 0.0
    %1805 = vmatpush1.msra.mxu0 0.0
    %1806 = vmatprep.mubr.f32.mxu0 0.0
    %1807 = vmatmul.mubr.f32.gmra.mrb[0].mxu0 %v1734
    %v1808 = vpop.f32.mrb[0].mxu0
    %v1809 = vadd.f32 %v317, %v1808
    %v1810 = vpop.f32.mrb[0].mxu0
    %1811 = vmatprep.mubr.f32.mxu0 0.0
    %1812 = vmatmul.mubr.f32.gmra.mrb[0].mxu0 %v1736
    %v1813 = vpop.f32.mrb[0].mxu0
    %v1814 = vadd.f32 %v317, %v1813
    %v1815 = vpop.f32.mrb[0].mxu0
    %1816 = vmatprep.mubr.f32.mxu0 0.0
    %1817 = vmatmul.mubr.f32.gmra.mrb[0].mxu0 %v1738
    %v1818 = vpop.f32.mrb[0].mxu0
    %v1819 = vadd.f32 %v317, %v1818
    %v1820 = vpop.f32.mrb[0].mxu0
    %1821 = vmatprep.mubr.f32.mxu0 0.0
    %1822 = vmatmul.mubr.f32.gmra.mrb[0].mxu0 %v1740
    %v1823 = vpop.f32.mrb[0].mxu0
    %v1824 = vadd.f32 %v317, %v1823
    %v1825 = vpop.f32.mrb[0].mxu0
    %1826 = vdwg.mxu0
    %1831 = vrot.lane.b32.xlu0 %v1809, 96
    %v1832 = vpop.permute.xlu0 %1831
    %1833 = vrot.lane.b32.xlu0 %v1814, 96
    %v1834 = vpop.permute.xlu0 %1833
    %1835 = vrot.lane.b32.xlu0 %v1819, 96
    %v1836 = vpop.permute.xlu0 %1835
    %1837 = vrot.lane.b32.xlu0 %v1824, 96
    %v1838 = vpop.permute.xlu0 %1837
    %1843 = vmatprep.subr.mxu0 0.0
    %1844 = vmatpush1.msra.mxu0 %v1832
    %1845 = vmatprep.subr.mxu0 0.0
    %1846 = vmatpush1.msra.mxu0 %v1834
    %1847 = vmatprep.subr.mxu0 0.0
    %1848 = vmatpush1.msra.mxu0 %v1836
    %1849 = vmatprep.subr.mxu0 0.0
    %1850 = vmatpush1.msra.mxu0 %v1838
    %1851 = vmatprep.subr.mxu0 0.0
    %1852 = vmatpush1.msra.mxu0 0.0
    %1853 = vmatprep.subr.mxu0 0.0
    %1854 = vmatpush1.msra.mxu0 0.0
    %1855 = vmatprep.subr.mxu0 0.0
    %1856 = vmatpush1.msra.mxu0 0.0
    %1857 = vmatprep.subr.mxu0 0.0
    %1858 = vmatpush1.msra.mxu0 0.0
    %1859 = vmatprep.subr.mxu0 0.0
    %1860 = vmatpush1.msra.mxu0 0.0
    %1861 = vmatprep.subr.mxu0 0.0
    %1862 = vmatpush1.msra.mxu0 0.0
    %1863 = vmatprep.subr.mxu0 0.0
    %1864 = vmatpush1.msra.mxu0 0.0
    %1865 = vmatprep.subr.mxu0 0.0
    %1866 = vmatpush1.msra.mxu0 0.0
    %1867 = vmatprep.subr.mxu0 0.0
    %1868 = vmatpush1.msra.mxu0 0.0
    %1869 = vmatprep.subr.mxu0 0.0
    %1870 = vmatpush1.msra.mxu0 0.0
    %1871 = vmatprep.subr.mxu0 0.0
    %1872 = vmatpush1.msra.mxu0 0.0
    %1873 = vmatprep.subr.mxu0 0.0
    %1874 = vmatpush1.msra.mxu0 0.0
    %1875 = vmatprep.subr.mxu0 0.0
    %1876 = vmatpush1.msra.mxu0 0.0
    %1877 = vmatprep.subr.mxu0 0.0
    %1878 = vmatpush1.msra.mxu0 0.0
    %1879 = vmatprep.subr.mxu0 0.0
    %1880 = vmatpush1.msra.mxu0 0.0
    %1881 = vmatprep.subr.mxu0 0.0
    %1882 = vmatpush1.msra.mxu0 0.0
    %1883 = vmatprep.subr.mxu0 0.0
    %1884 = vmatpush1.msra.mxu0 0.0
    %1885 = vmatprep.subr.mxu0 0.0
    %1886 = vmatpush1.msra.mxu0 0.0
    %1887 = vmatprep.subr.mxu0 0.0
    %1888 = vmatpush1.msra.mxu0 0.0
    %1889 = vmatprep.subr.mxu0 0.0
    %1890 = vmatpush1.msra.mxu0 0.0
    %1891 = vmatprep.subr.mxu0 0.0
    %1892 = vmatpush1.msra.mxu0 0.0
    %1893 = vmatprep.subr.mxu0 0.0
    %1894 = vmatpush1.msra.mxu0 0.0
    %1895 = vmatprep.subr.mxu0 0.0
    %1896 = vmatpush1.msra.mxu0 0.0
    %1897 = vmatprep.subr.mxu0 0.0
    %1898 = vmatpush1.msra.mxu0 0.0
    %1899 = vmatprep.subr.mxu0 0.0
    %1900 = vmatpush1.msra.mxu0 0.0
    %1901 = vmatprep.subr.mxu0 0.0
    %1902 = vmatpush1.msra.mxu0 0.0
    %1903 = vmatprep.subr.mxu0 0.0
    %1904 = vmatpush1.msra.mxu0 0.0
    %1905 = vmatprep.subr.mxu0 0.0
    %1906 = vmatpush1.msra.mxu0 0.0
    %1907 = vmatprep.mubr.f32.mxu0 0.0
    %1908 = vmatmul.mubr.f32.gmra.mrb[0].mxu0 %v434
    %v1909 = vpop.f32.mrb[0].mxu0
    %v1910 = vadd.f32 0.0, %v1909
    %v1911 = vpop.f32.mrb[0].mxu0
    %1912 = vmatprep.mubr.f32.mxu0 0.0
    %1913 = vmatmul.mubr.f32.gmra.mrb[0].mxu0 %v437
    %v1914 = vpop.f32.mrb[0].mxu0
    %v1915 = vadd.f32 0.0, %v1914
    %v1916 = vpop.f32.mrb[0].mxu0
    %1917 = vmatprep.mubr.f32.mxu0 0.0
    %1918 = vmatmul.mubr.f32.gmra.mrb[0].mxu0 %v440
    %v1919 = vpop.f32.mrb[0].mxu0
    %v1920 = vadd.f32 0.0, %v1919
    %v1921 = vpop.f32.mrb[0].mxu0
    %1922 = vmatprep.mubr.f32.mxu0 0.0
    %1923 = vmatmul.mubr.f32.gmra.mrb[0].mxu0 %v443
    %v1924 = vpop.f32.mrb[0].mxu0
    %v1925 = vadd.f32 0.0, %v1924
    %v1926 = vpop.f32.mrb[0].mxu0
    %1927 = vdwg.mxu0
    %1928 = vmatprep.subr.mxu0 0.0
    %1929 = vmatpush1.msra.mxu0 %v1809
    %1930 = vmatprep.subr.mxu0 0.0
    %1931 = vmatpush1.msra.mxu0 %v1814
    %1932 = vmatprep.subr.mxu0 0.0
    %1933 = vmatpush1.msra.mxu0 %v1819
    %1934 = vmatprep.subr.mxu0 0.0
    %1935 = vmatpush1.msra.mxu0 %v1824
    %1936 = vmatprep.subr.mxu0 0.0
    %1937 = vmatpush1.msra.mxu0 0.0
    %1938 = vmatprep.subr.mxu0 0.0
    %1939 = vmatpush1.msra.mxu0 0.0
    %1940 = vmatprep.subr.mxu0 0.0
    %1941 = vmatpush1.msra.mxu0 0.0
    %1942 = vmatprep.subr.mxu0 0.0
    %1943 = vmatpush1.msra.mxu0 0.0
    %1944 = vmatprep.subr.mxu0 0.0
    %1945 = vmatpush1.msra.mxu0 0.0
    %1946 = vmatprep.subr.mxu0 0.0
    %1947 = vmatpush1.msra.mxu0 0.0
    %1948 = vmatprep.subr.mxu0 0.0
    %1949 = vmatpush1.msra.mxu0 0.0
    %1950 = vmatprep.subr.mxu0 0.0
    %1951 = vmatpush1.msra.mxu0 0.0
    %1952 = vmatprep.subr.mxu0 0.0
    %1953 = vmatpush1.msra.mxu0 0.0
    %1954 = vmatprep.subr.mxu0 0.0
    %1955 = vmatpush1.msra.mxu0 0.0
    %1956 = vmatprep.subr.mxu0 0.0
    %1957 = vmatpush1.msra.mxu0 0.0
    %1958 = vmatprep.subr.mxu0 0.0
    %1959 = vmatpush1.msra.mxu0 0.0
    %1960 = vmatprep.subr.mxu0 0.0
    %1961 = vmatpush1.msra.mxu0 0.0
    %1962 = vmatprep.subr.mxu0 0.0
    %1963 = vmatpush1.msra.mxu0 0.0
    %1964 = vmatprep.subr.mxu0 0.0
    %1965 = vmatpush1.msra.mxu0 0.0
    %1966 = vmatprep.subr.mxu0 0.0
    %1967 = vmatpush1.msra.mxu0 0.0
    %1968 = vmatprep.subr.mxu0 0.0
    %1969 = vmatpush1.msra.mxu0 0.0
    %1970 = vmatprep.subr.mxu0 0.0
    %1971 = vmatpush1.msra.mxu0 0.0
    %1972 = vmatprep.subr.mxu0 0.0
    %1973 = vmatpush1.msra.mxu0 0.0
    %1974 = vmatprep.subr.mxu0 0.0
    %1975 = vmatpush1.msra.mxu0 0.0
    %1976 = vmatprep.subr.mxu0 0.0
    %1977 = vmatpush1.msra.mxu0 0.0
    %1978 = vmatprep.subr.mxu0 0.0
    %1979 = vmatpush1.msra.mxu0 0.0
    %1980 = vmatprep.subr.mxu0 0.0
    %1981 = vmatpush1.msra.mxu0 0.0
    %1982 = vmatprep.subr.mxu0 0.0
    %1983 = vmatpush1.msra.mxu0 0.0
    %1984 = vmatprep.subr.mxu0 0.0
    %1985 = vmatpush1.msra.mxu0 0.0
    %1986 = vmatprep.subr.mxu0 0.0
    %1987 = vmatpush1.msra.mxu0 0.0
    %1988 = vmatprep.subr.mxu0 0.0
    %1989 = vmatpush1.msra.mxu0 0.0
    %1990 = vmatprep.subr.mxu0 0.0
    %1991 = vmatpush1.msra.mxu0 0.0
    %1992 = vmatprep.mubr.f32.mxu0 0.0
    %1993 = vmatmul.mubr.f32.gmra.mrb[0].mxu0 %v531
    %v1994 = vpop.f32.mrb[0].mxu0
    %v1995 = vadd.f32 %v1910, %v1994
    %v1996 = vpop.f32.mrb[0].mxu0
    %1997 = vmatprep.mubr.f32.mxu0 0.0
    %1998 = vmatmul.mubr.f32.gmra.mrb[0].mxu0 %v534
    %v1999 = vpop.f32.mrb[0].mxu0
    %v2000 = vadd.f32 %v1915, %v1999
    %v2001 = vpop.f32.mrb[0].mxu0
    %2002 = vmatprep.mubr.f32.mxu0 0.0
    %2003 = vmatmul.mubr.f32.gmra.mrb[0].mxu0 %v537
    %v2004 = vpop.f32.mrb[0].mxu0
    %v2005 = vadd.f32 %v1920, %v2004
    %v2006 = vpop.f32.mrb[0].mxu0
    %2007 = vmatprep.mubr.f32.mxu0 0.0
    %2008 = vmatmul.mubr.f32.gmra.mrb[0].mxu0 %v540
    %v2009 = vpop.f32.mrb[0].mxu0
    %v2010 = vadd.f32 %v1925, %v2009
    %v2011 = vpop.f32.mrb[0].mxu0
    %2012 = vdwg.mxu0
    %2013 = vrot.lane.b32.xlu0 %v1809, 64
    %v2014 = vpop.permute.xlu0 %2013
    %2015 = vrot.lane.b32.xlu0 %v1814, 64
    %v2016 = vpop.permute.xlu0 %2015
    %2017 = vrot.lane.b32.xlu0 %v1819, 64
    %v2018 = vpop.permute.xlu0 %2017
    %2019 = vrot.lane.b32.xlu0 %v1824, 64
    %v2020 = vpop.permute.xlu0 %2019
    %2025 = vmatprep.subr.mxu0 0.0
    %2026 = vmatpush1.msra.mxu0 %v2014
    %2027 = vmatprep.subr.mxu0 0.0
    %2028 = vmatpush1.msra.mxu0 %v2016
    %2029 = vmatprep.subr.mxu0 0.0
    %2030 = vmatpush1.msra.mxu0 %v2018
    %2031 = vmatprep.subr.mxu0 0.0
    %2032 = vmatpush1.msra.mxu0 %v2020
    %2033 = vmatprep.subr.mxu0 0.0
    %2034 = vmatpush1.msra.mxu0 0.0
    %2035 = vmatprep.subr.mxu0 0.0
    %2036 = vmatpush1.msra.mxu0 0.0
    %2037 = vmatprep.subr.mxu0 0.0
    %2038 = vmatpush1.msra.mxu0 0.0
    %2039 = vmatprep.subr.mxu0 0.0
    %2040 = vmatpush1.msra.mxu0 0.0
    %2041 = vmatprep.subr.mxu0 0.0
    %2042 = vmatpush1.msra.mxu0 0.0
    %2043 = vmatprep.subr.mxu0 0.0
    %2044 = vmatpush1.msra.mxu0 0.0
    %2045 = vmatprep.subr.mxu0 0.0
    %2046 = vmatpush1.msra.mxu0 0.0
    %2047 = vmatprep.subr.mxu0 0.0
    %2048 = vmatpush1.msra.mxu0 0.0
    %2049 = vmatprep.subr.mxu0 0.0
    %2050 = vmatpush1.msra.mxu0 0.0
    %2051 = vmatprep.subr.mxu0 0.0
    %2052 = vmatpush1.msra.mxu0 0.0
    %2053 = vmatprep.subr.mxu0 0.0
    %2054 = vmatpush1.msra.mxu0 0.0
    %2055 = vmatprep.subr.mxu0 0.0
    %2056 = vmatpush1.msra.mxu0 0.0
    %2057 = vmatprep.subr.mxu0 0.0
    %2058 = vmatpush1.msra.mxu0 0.0
    %2059 = vmatprep.subr.mxu0 0.0
    %2060 = vmatpush1.msra.mxu0 0.0
    %2061 = vmatprep.subr.mxu0 0.0
    %2062 = vmatpush1.msra.mxu0 0.0
    %2063 = vmatprep.subr.mxu0 0.0
    %2064 = vmatpush1.msra.mxu0 0.0
    %2065 = vmatprep.subr.mxu0 0.0
    %2066 = vmatpush1.msra.mxu0 0.0
    %2067 = vmatprep.subr.mxu0 0.0
    %2068 = vmatpush1.msra.mxu0 0.0
    %2069 = vmatprep.subr.mxu0 0.0
    %2070 = vmatpush1.msra.mxu0 0.0
    %2071 = vmatprep.subr.mxu0 0.0
    %2072 = vmatpush1.msra.mxu0 0.0
    %2073 = vmatprep.subr.mxu0 0.0
    %2074 = vmatpush1.msra.mxu0 0.0
    %2075 = vmatprep.subr.mxu0 0.0
    %2076 = vmatpush1.msra.mxu0 0.0
    %2077 = vmatprep.subr.mxu0 0.0
    %2078 = vmatpush1.msra.mxu0 0.0
    %2079 = vmatprep.subr.mxu0 0.0
    %2080 = vmatpush1.msra.mxu0 0.0
    %2081 = vmatprep.subr.mxu0 0.0
    %2082 = vmatpush1.msra.mxu0 0.0
    %2083 = vmatprep.subr.mxu0 0.0
    %2084 = vmatpush1.msra.mxu0 0.0
    %2085 = vmatprep.subr.mxu0 0.0
    %2086 = vmatpush1.msra.mxu0 0.0
    %2087 = vmatprep.subr.mxu0 0.0
    %2088 = vmatpush1.msra.mxu0 0.0
    %2089 = vmatprep.mubr.f32.mxu0 0.0
    %2090 = vmatmul.mubr.f32.gmra.mrb[0].mxu0 %v640
    %v2091 = vpop.f32.mrb[0].mxu0
    %v2092 = vadd.f32 0.0, %v2091
    %v2093 = vpop.f32.mrb[0].mxu0
    %2094 = vmatprep.mubr.f32.mxu0 0.0
    %2095 = vmatmul.mubr.f32.gmra.mrb[0].mxu0 %v643
    %v2096 = vpop.f32.mrb[0].mxu0
    %v2097 = vadd.f32 0.0, %v2096
    %v2098 = vpop.f32.mrb[0].mxu0
    %2099 = vmatprep.mubr.f32.mxu0 0.0
    %2100 = vmatmul.mubr.f32.gmra.mrb[0].mxu0 %v646
    %v2101 = vpop.f32.mrb[0].mxu0
    %v2102 = vadd.f32 0.0, %v2101
    %v2103 = vpop.f32.mrb[0].mxu0
    %2104 = vmatprep.mubr.f32.mxu0 0.0
    %2105 = vmatmul.mubr.f32.gmra.mrb[0].mxu0 %v649
    %v2106 = vpop.f32.mrb[0].mxu0
    %v2107 = vadd.f32 0.0, %v2106
    %v2108 = vpop.f32.mrb[0].mxu0
    %2109 = vdwg.mxu0
    %v2110 = vadd.f32 %v1995, %v2092
    %v2111 = vadd.f32 %v2000, %v2097
    %v2112 = vadd.f32 %v2005, %v2102
    %v2113 = vadd.f32 %v2010, %v2107
    %2114 = vmatprep.subr.mxu0 0.0
    %2115 = vmatpush1.msra.mxu0 %v308
    %2116 = vmatprep.subr.mxu0 0.0
    %2117 = vmatpush1.msra.mxu0 %v309
    %2118 = vmatprep.subr.mxu0 0.0
    %2119 = vmatpush1.msra.mxu0 %v310
    %2120 = vmatprep.subr.mxu0 0.0
    %2121 = vmatpush1.msra.mxu0 %v311
    %2122 = vmatprep.subr.mxu0 0.0
    %2123 = vmatpush1.msra.mxu0 0.0
    %2124 = vmatprep.subr.mxu0 0.0
    %2125 = vmatpush1.msra.mxu0 0.0
    %2126 = vmatprep.subr.mxu0 0.0
    %2127 = vmatpush1.msra.mxu0 0.0
    %2128 = vmatprep.subr.mxu0 0.0
    %2129 = vmatpush1.msra.mxu0 0.0
    %2130 = vmatprep.subr.mxu0 0.0
    %2131 = vmatpush1.msra.mxu0 0.0
    %2132 = vmatprep.subr.mxu0 0.0
    %2133 = vmatpush1.msra.mxu0 0.0
    %2134 = vmatprep.subr.mxu0 0.0
    %2135 = vmatpush1.msra.mxu0 0.0
    %2136 = vmatprep.subr.mxu0 0.0
    %2137 = vmatpush1.msra.mxu0 0.0
    %2138 = vmatprep.subr.mxu0 0.0
    %2139 = vmatpush1.msra.mxu0 0.0
    %2140 = vmatprep.subr.mxu0 0.0
    %2141 = vmatpush1.msra.mxu0 0.0
    %2142 = vmatprep.subr.mxu0 0.0
    %2143 = vmatpush1.msra.mxu0 0.0
    %2144 = vmatprep.subr.mxu0 0.0
    %2145 = vmatpush1.msra.mxu0 0.0
    %2146 = vmatprep.subr.mxu0 0.0
    %2147 = vmatpush1.msra.mxu0 0.0
    %2148 = vmatprep.subr.mxu0 0.0
    %2149 = vmatpush1.msra.mxu0 0.0
    %2150 = vmatprep.subr.mxu0 0.0
    %2151 = vmatpush1.msra.mxu0 0.0
    %2152 = vmatprep.subr.mxu0 0.0
    %2153 = vmatpush1.msra.mxu0 0.0
    %2154 = vmatprep.subr.mxu0 0.0
    %2155 = vmatpush1.msra.mxu0 0.0
    %2156 = vmatprep.subr.mxu0 0.0
    %2157 = vmatpush1.msra.mxu0 0.0
    %2158 = vmatprep.subr.mxu0 0.0
    %2159 = vmatpush1.msra.mxu0 0.0
    %2160 = vmatprep.subr.mxu0 0.0
    %2161 = vmatpush1.msra.mxu0 0.0
    %2162 = vmatprep.subr.mxu0 0.0
    %2163 = vmatpush1.msra.mxu0 0.0
    %2164 = vmatprep.subr.mxu0 0.0
    %2165 = vmatpush1.msra.mxu0 0.0
    %2166 = vmatprep.subr.mxu0 0.0
    %2167 = vmatpush1.msra.mxu0 0.0
    %2168 = vmatprep.subr.mxu0 0.0
    %2169 = vmatpush1.msra.mxu0 0.0
    %2170 = vmatprep.subr.mxu0 0.0
    %2171 = vmatpush1.msra.mxu0 0.0
    %2172 = vmatprep.subr.mxu0 0.0
    %2173 = vmatpush1.msra.mxu0 0.0
    %2174 = vmatprep.subr.mxu0 0.0
    %2175 = vmatpush1.msra.mxu0 0.0
    %2176 = vmatprep.subr.mxu0 0.0
    %2177 = vmatpush1.msra.mxu0 0.0
    %2178 = vmatprep.mubr.f32.mxu0 0.0
    %2179 = vmatmul.mubr.f32.gmra.mrb[0].mxu0 %v1734
    %v2180 = vpop.f32.mrb[0].mxu0
    %v2181 = vadd.f32 0.0, %v2180
    %v2182 = vpop.f32.mrb[0].mxu0
    %2183 = vmatprep.mubr.f32.mxu0 0.0
    %2184 = vmatmul.mubr.f32.gmra.mrb[0].mxu0 %v1736
    %v2185 = vpop.f32.mrb[0].mxu0
    %v2186 = vadd.f32 0.0, %v2185
    %v2187 = vpop.f32.mrb[0].mxu0
    %2188 = vmatprep.mubr.f32.mxu0 0.0
    %2189 = vmatmul.mubr.f32.gmra.mrb[0].mxu0 %v1738
    %v2190 = vpop.f32.mrb[0].mxu0
    %v2191 = vadd.f32 0.0, %v2190
    %v2192 = vpop.f32.mrb[0].mxu0
    %2193 = vmatprep.mubr.f32.mxu0 0.0
    %2194 = vmatmul.mubr.f32.gmra.mrb[0].mxu0 %v1740
    %v2195 = vpop.f32.mrb[0].mxu0
    %v2196 = vadd.f32 0.0, %v2195
    %v2197 = vpop.f32.mrb[0].mxu0
    %2198 = vdwg.mxu0
    %v2200 = vsel %vm319, %v2110, 0
    %v2203 = vsel %vm319, %v2111, 0
    %v2206 = vsel %vm319, %v2112, 0
    %v2209 = vsel %vm319, %v2113, 0
    %2211 = vmatprep.subr.mxu0 0.0
    %2212 = vmatpush1.msra.mxu0 %v304
    %2213 = vmatprep.subr.mxu0 0.0
    %2214 = vmatpush1.msra.mxu0 %v305
    %2215 = vmatprep.subr.mxu0 0.0
    %2216 = vmatpush1.msra.mxu0 %v306
    %2217 = vmatprep.subr.mxu0 0.0
    %2218 = vmatpush1.msra.mxu0 %v307
    %2219 = vmatprep.subr.mxu0 0.0
    %2220 = vmatpush1.msra.mxu0 0.0
    %2221 = vmatprep.subr.mxu0 0.0
    %2222 = vmatpush1.msra.mxu0 0.0
    %2223 = vmatprep.subr.mxu0 0.0
    %2224 = vmatpush1.msra.mxu0 0.0
    %2225 = vmatprep.subr.mxu0 0.0
    %2226 = vmatpush1.msra.mxu0 0.0
    %2227 = vmatprep.subr.mxu0 0.0
    %2228 = vmatpush1.msra.mxu0 0.0
    %2229 = vmatprep.subr.mxu0 0.0
    %2230 = vmatpush1.msra.mxu0 0.0
    %2231 = vmatprep.subr.mxu0 0.0
    %2232 = vmatpush1.msra.mxu0 0.0
    %2233 = vmatprep.subr.mxu0 0.0
    %2234 = vmatpush1.msra.mxu0 0.0
    %2235 = vmatprep.subr.mxu0 0.0
    %2236 = vmatpush1.msra.mxu0 0.0
    %2237 = vmatprep.subr.mxu0 0.0
    %2238 = vmatpush1.msra.mxu0 0.0
    %2239 = vmatprep.subr.mxu0 0.0
    %2240 = vmatpush1.msra.mxu0 0.0
    %2241 = vmatprep.subr.mxu0 0.0
    %2242 = vmatpush1.msra.mxu0 0.0
    %2243 = vmatprep.subr.mxu0 0.0
    %2244 = vmatpush1.msra.mxu0 0.0
    %2245 = vmatprep.subr.mxu0 0.0
    %2246 = vmatpush1.msra.mxu0 0.0
    %2247 = vmatprep.subr.mxu0 0.0
    %2248 = vmatpush1.msra.mxu0 0.0
    %2249 = vmatprep.subr.mxu0 0.0
    %2250 = vmatpush1.msra.mxu0 0.0
    %2251 = vmatprep.subr.mxu0 0.0
    %2252 = vmatpush1.msra.mxu0 0.0
    %2253 = vmatprep.subr.mxu0 0.0
    %2254 = vmatpush1.msra.mxu0 0.0
    %2255 = vmatprep.subr.mxu0 0.0
    %2256 = vmatpush1.msra.mxu0 0.0
    %2257 = vmatprep.subr.mxu0 0.0
    %2258 = vmatpush1.msra.mxu0 0.0
    %2259 = vmatprep.subr.mxu0 0.0
    %2260 = vmatpush1.msra.mxu0 0.0
    %2261 = vmatprep.subr.mxu0 0.0
    %2262 = vmatpush1.msra.mxu0 0.0
    %2263 = vmatprep.subr.mxu0 0.0
    %2264 = vmatpush1.msra.mxu0 0.0
    %2265 = vmatprep.subr.mxu0 0.0
    %2266 = vmatpush1.msra.mxu0 0.0
    %2267 = vmatprep.subr.mxu0 0.0
    %2268 = vmatpush1.msra.mxu0 0.0
    %2269 = vmatprep.subr.mxu0 0.0
    %2270 = vmatpush1.msra.mxu0 0.0
    %2271 = vmatprep.subr.mxu0 0.0
    %2272 = vmatpush1.msra.mxu0 0.0
    %2273 = vmatprep.subr.mxu0 0.0
    %2274 = vmatpush1.msra.mxu0 0.0
    %2275 = vmatprep.mubr.f32.mxu0 0.0
    %2276 = vmatmul.mubr.f32.gmra.mrb[0].mxu0 %v2200
    %v2277 = vpop.f32.mrb[0].mxu0
    %v2278 = vadd.f32 %v2181, %v2277
    %v2279 = vpop.f32.mrb[0].mxu0
    %2280 = vmatprep.mubr.f32.mxu0 0.0
    %2281 = vmatmul.mubr.f32.gmra.mrb[0].mxu0 %v2203
    %v2282 = vpop.f32.mrb[0].mxu0
    %v2283 = vadd.f32 %v2186, %v2282
    %v2284 = vpop.f32.mrb[0].mxu0
    %2285 = vmatprep.mubr.f32.mxu0 0.0
    %2286 = vmatmul.mubr.f32.gmra.mrb[0].mxu0 %v2206
    %v2287 = vpop.f32.mrb[0].mxu0
    %v2288 = vadd.f32 %v2191, %v2287
    %v2289 = vpop.f32.mrb[0].mxu0
    %2290 = vmatprep.mubr.f32.mxu0 0.0
    %2291 = vmatmul.mubr.f32.gmra.mrb[0].mxu0 %v2209
    %v2292 = vpop.f32.mrb[0].mxu0
    %v2293 = vadd.f32 %v2196, %v2292
    %v2294 = vpop.f32.mrb[0].mxu0
    %2295 = vdwg.mxu0
    %v2296 = vadd.f32 %v2278, %v926
    %v2297 = vadd.f32 %v2283, %v926
    %v2298 = vadd.f32 %v2288, %v926
    %v2299 = vadd.f32 %v2293, %v926
    %v2300 = vxor.u32 %v2296, 2147483648
    %v2301 = vxor.u32 %v2297, 2147483648
    %v2302 = vxor.u32 %v2298, 2147483648
    %v2303 = vxor.u32 %v2299, 2147483648
    %v2304 = vmul.f32 %v2300, 1.442695
    %v2305 = vpow.pop %v2304
    %v2306 = vmul.f32 %v2301, 1.442695
    %v2307 = vpow.pop %v2306
    %v2308 = vmul.f32 %v2302, 1.442695
    %v2309 = vpow.pop %v2308
    %v2310 = vmul.f32 %v2303, 1.442695
    %v2311 = vpow.pop %v2310
    %v2312 = vadd.f32 %v2305, 1.0
    %v2313 = vadd.f32 %v2307, 1.0
    %v2314 = vadd.f32 %v2309, 1.0
    %v2315 = vadd.f32 %v2311, 1.0
    %v2316 = vrcp.pop %v2312
    %v2317 = vmul.f32 1.0, %v2316
    %v2318 = vrcp.pop %v2313
    %v2319 = vmul.f32 1.0, %v2318
    %v2320 = vrcp.pop %v2314
    %v2321 = vmul.f32 1.0, %v2320
    %v2322 = vrcp.pop %v2315
    %v2323 = vmul.f32 1.0, %v2322
    %2328 = vrot.lane.b32.xlu0 %v2296, 32
    %v2329 = vpop.permute.xlu0 %2328
    %2330 = vrot.lane.b32.xlu0 %v2297, 32
    %v2331 = vpop.permute.xlu0 %2330
    %2332 = vrot.lane.b32.xlu0 %v2298, 32
    %v2333 = vpop.permute.xlu0 %2332
    %2334 = vrot.lane.b32.xlu0 %v2299, 32
    %v2335 = vpop.permute.xlu0 %2334
    %v2340 = vmul.f32 %v2317, %v2329
    %v2341 = vmul.f32 %v2319, %v2331
    %v2342 = vmul.f32 %v2321, %v2333
    %v2343 = vmul.f32 %v2323, %v2335
    %2348 = vrot.lane.b32.xlu0 %v2340, 64
    %v2349 = vpop.permute.xlu0 %2348
    %2350 = vrot.lane.b32.xlu0 %v2341, 64
    %v2351 = vpop.permute.xlu0 %2350
    %2352 = vrot.lane.b32.xlu0 %v2342, 64
    %v2353 = vpop.permute.xlu0 %2352
    %2354 = vrot.lane.b32.xlu0 %v2343, 64
    %v2355 = vpop.permute.xlu0 %2354
    %v2360 = vadd.f32 %v2296, %v2349
    %v2361 = vadd.f32 %v2297, %v2351
    %v2362 = vadd.f32 %v2298, %v2353
    %v2363 = vadd.f32 %v2299, %v2355
    %v2364 = vtanh.pop %v2360
    %v2365 = vtanh.pop %v2361
    %v2366 = vtanh.pop %v2362
    %v2367 = vtanh.pop %v2363
    %v2368 = vsub.f32 1.0, %v2317
    %v2369 = vsub.f32 1.0, %v2319
    %v2370 = vsub.f32 1.0, %v2321
    %v2371 = vsub.f32 1.0, %v2323
    %2376 = vrot.lane.b32.xlu0 %v2364, 96
    %v2377 = vpop.permute.xlu0 %2376
    %2378 = vrot.lane.b32.xlu0 %v2365, 96
    %v2379 = vpop.permute.xlu0 %2378
    %2380 = vrot.lane.b32.xlu0 %v2366, 96
    %v2381 = vpop.permute.xlu0 %2380
    %2382 = vrot.lane.b32.xlu0 %v2367, 96
    %v2383 = vpop.permute.xlu0 %2382
    %v2388 = vmul.f32 %v2368, %v2377
    %v2389 = vmul.f32 %v2369, %v2379
    %v2390 = vmul.f32 %v2370, %v2381
    %v2391 = vmul.f32 %v2371, %v2383
    %v2392 = vmul.f32 %v2317, %v1718
    %v2393 = vmul.f32 %v2319, %v1719
    %v2394 = vmul.f32 %v2321, %v1720
    %v2395 = vmul.f32 %v2323, %v1721
    %v2396 = vadd.f32 %v2388, %v2392
    %v2397 = vadd.f32 %v2389, %v2393
    %v2398 = vadd.f32 %v2390, %v2394
    %v2399 = vadd.f32 %v2391, %v2395
    %2404 = vrot.lane.b32.xlu0 %v2396, 96
    %v2405 = vpop.permute.xlu0 %2404
    %2406 = vrot.lane.b32.xlu0 %v2397, 96
    %v2407 = vpop.permute.xlu0 %2406
    %2408 = vrot.lane.b32.xlu0 %v2398, 96
    %v2409 = vpop.permute.xlu0 %2408
    %2410 = vrot.lane.b32.xlu0 %v2399, 96
    %v2411 = vpop.permute.xlu0 %2410
    %v2412 = vsel %vm319, %v2405, 0
    %v2414 = vsel %vm319, %v2407, 0
    %v2416 = vsel %vm319, %v2409, 0
    %v2418 = vsel %vm319, %v2411, 0
    %2420 = vmatprep.subr.mxu0 0.0
    %2421 = vmatpush1.msra.mxu0 %v299
    %2422 = vmatprep.subr.mxu0 0.0
    %2423 = vmatpush1.msra.mxu0 %v300
    %2424 = vmatprep.subr.mxu0 0.0
    %2425 = vmatpush1.msra.mxu0 %v301
    %2426 = vmatprep.subr.mxu0 0.0
    %2427 = vmatpush1.msra.mxu0 %v302
    %2428 = vmatprep.subr.mxu0 0.0
    %2429 = vmatpush1.msra.mxu0 0.0
    %2430 = vmatprep.subr.mxu0 0.0
    %2431 = vmatpush1.msra.mxu0 0.0
    %2432 = vmatprep.subr.mxu0 0.0
    %2433 = vmatpush1.msra.mxu0 0.0
    %2434 = vmatprep.subr.mxu0 0.0
    %2435 = vmatpush1.msra.mxu0 0.0
    %2436 = vmatprep.subr.mxu0 0.0
    %2437 = vmatpush1.msra.mxu0 0.0
    %2438 = vmatprep.subr.mxu0 0.0
    %2439 = vmatpush1.msra.mxu0 0.0
    %2440 = vmatprep.subr.mxu0 0.0
    %2441 = vmatpush1.msra.mxu0 0.0
    %2442 = vmatprep.subr.mxu0 0.0
    %2443 = vmatpush1.msra.mxu0 0.0
    %2444 = vmatprep.subr.mxu0 0.0
    %2445 = vmatpush1.msra.mxu0 0.0
    %2446 = vmatprep.subr.mxu0 0.0
    %2447 = vmatpush1.msra.mxu0 0.0
    %2448 = vmatprep.subr.mxu0 0.0
    %2449 = vmatpush1.msra.mxu0 0.0
    %2450 = vmatprep.subr.mxu0 0.0
    %2451 = vmatpush1.msra.mxu0 0.0
    %2452 = vmatprep.subr.mxu0 0.0
    %2453 = vmatpush1.msra.mxu0 0.0
    %2454 = vmatprep.subr.mxu0 0.0
    %2455 = vmatpush1.msra.mxu0 0.0
    %2456 = vmatprep.subr.mxu0 0.0
    %2457 = vmatpush1.msra.mxu0 0.0
    %2458 = vmatprep.subr.mxu0 0.0
    %2459 = vmatpush1.msra.mxu0 0.0
    %2460 = vmatprep.subr.mxu0 0.0
    %2461 = vmatpush1.msra.mxu0 0.0
    %2462 = vmatprep.subr.mxu0 0.0
    %2463 = vmatpush1.msra.mxu0 0.0
    %2464 = vmatprep.subr.mxu0 0.0
    %2465 = vmatpush1.msra.mxu0 0.0
    %2466 = vmatprep.subr.mxu0 0.0
    %2467 = vmatpush1.msra.mxu0 0.0
    %2468 = vmatprep.subr.mxu0 0.0
    %2469 = vmatpush1.msra.mxu0 0.0
    %2470 = vmatprep.subr.mxu0 0.0
    %2471 = vmatpush1.msra.mxu0 0.0
    %2472 = vmatprep.subr.mxu0 0.0
    %2473 = vmatpush1.msra.mxu0 0.0
    %2474 = vmatprep.subr.mxu0 0.0
    %2475 = vmatpush1.msra.mxu0 0.0
    %2476 = vmatprep.subr.mxu0 0.0
    %2477 = vmatpush1.msra.mxu0 0.0
    %2478 = vmatprep.subr.mxu0 0.0
    %2479 = vmatpush1.msra.mxu0 0.0
    %2480 = vmatprep.subr.mxu0 0.0
    %2481 = vmatpush1.msra.mxu0 0.0
    %2482 = vmatprep.subr.mxu0 0.0
    %2483 = vmatpush1.msra.mxu0 0.0
    %2484 = vmatprep.mubr.f32.mxu0 0.0
    %2485 = vmatmul.mubr.f32.gmra.mrb[0].mxu0 %v2412
    %v2486 = vpop.f32.mrb[0].mxu0
    %v2487 = vadd.f32 %v317, %v2486
    %v2488 = vpop.f32.mrb[0].mxu0
    %2489 = vmatprep.mubr.f32.mxu0 0.0
    %2490 = vmatmul.mubr.f32.gmra.mrb[0].mxu0 %v2414
    %v2491 = vpop.f32.mrb[0].mxu0
    %v2492 = vadd.f32 %v317, %v2491
    %v2493 = vpop.f32.mrb[0].mxu0
    %2494 = vmatprep.mubr.f32.mxu0 0.0
    %2495 = vmatmul.mubr.f32.gmra.mrb[0].mxu0 %v2416
    %v2496 = vpop.f32.mrb[0].mxu0
    %v2497 = vadd.f32 %v317, %v2496
    %v2498 = vpop.f32.mrb[0].mxu0
    %2499 = vmatprep.mubr.f32.mxu0 0.0
    %2500 = vmatmul.mubr.f32.gmra.mrb[0].mxu0 %v2418
    %v2501 = vpop.f32.mrb[0].mxu0
    %v2502 = vadd.f32 %v317, %v2501
    %v2503 = vpop.f32.mrb[0].mxu0
    %2504 = vdwg.mxu0
    %2509 = vrot.lane.b32.xlu0 %v2487, 96
    %v2510 = vpop.permute.xlu0 %2509
    %2511 = vrot.lane.b32.xlu0 %v2492, 96
    %v2512 = vpop.permute.xlu0 %2511
    %2513 = vrot.lane.b32.xlu0 %v2497, 96
    %v2514 = vpop.permute.xlu0 %2513
    %2515 = vrot.lane.b32.xlu0 %v2502, 96
    %v2516 = vpop.permute.xlu0 %2515
    %2521 = vmatprep.subr.mxu0 0.0
    %2522 = vmatpush1.msra.mxu0 %v2510
    %2523 = vmatprep.subr.mxu0 0.0
    %2524 = vmatpush1.msra.mxu0 %v2512
    %2525 = vmatprep.subr.mxu0 0.0
    %2526 = vmatpush1.msra.mxu0 %v2514
    %2527 = vmatprep.subr.mxu0 0.0
    %2528 = vmatpush1.msra.mxu0 %v2516
    %2529 = vmatprep.subr.mxu0 0.0
    %2530 = vmatpush1.msra.mxu0 0.0
    %2531 = vmatprep.subr.mxu0 0.0
    %2532 = vmatpush1.msra.mxu0 0.0
    %2533 = vmatprep.subr.mxu0 0.0
    %2534 = vmatpush1.msra.mxu0 0.0
    %2535 = vmatprep.subr.mxu0 0.0
    %2536 = vmatpush1.msra.mxu0 0.0
    %2537 = vmatprep.subr.mxu0 0.0
    %2538 = vmatpush1.msra.mxu0 0.0
    %2539 = vmatprep.subr.mxu0 0.0
    %2540 = vmatpush1.msra.mxu0 0.0
    %2541 = vmatprep.subr.mxu0 0.0
    %2542 = vmatpush1.msra.mxu0 0.0
    %2543 = vmatprep.subr.mxu0 0.0
    %2544 = vmatpush1.msra.mxu0 0.0
    %2545 = vmatprep.subr.mxu0 0.0
    %2546 = vmatpush1.msra.mxu0 0.0
    %2547 = vmatprep.subr.mxu0 0.0
    %2548 = vmatpush1.msra.mxu0 0.0
    %2549 = vmatprep.subr.mxu0 0.0
    %2550 = vmatpush1.msra.mxu0 0.0
    %2551 = vmatprep.subr.mxu0 0.0
    %2552 = vmatpush1.msra.mxu0 0.0
    %2553 = vmatprep.subr.mxu0 0.0
    %2554 = vmatpush1.msra.mxu0 0.0
    %2555 = vmatprep.subr.mxu0 0.0
    %2556 = vmatpush1.msra.mxu0 0.0
    %2557 = vmatprep.subr.mxu0 0.0
    %2558 = vmatpush1.msra.mxu0 0.0
    %2559 = vmatprep.subr.mxu0 0.0
    %2560 = vmatpush1.msra.mxu0 0.0
    %2561 = vmatprep.subr.mxu0 0.0
    %2562 = vmatpush1.msra.mxu0 0.0
    %2563 = vmatprep.subr.mxu0 0.0
    %2564 = vmatpush1.msra.mxu0 0.0
    %2565 = vmatprep.subr.mxu0 0.0
    %2566 = vmatpush1.msra.mxu0 0.0
    %2567 = vmatprep.subr.mxu0 0.0
    %2568 = vmatpush1.msra.mxu0 0.0
    %2569 = vmatprep.subr.mxu0 0.0
    %2570 = vmatpush1.msra.mxu0 0.0
    %2571 = vmatprep.subr.mxu0 0.0
    %2572 = vmatpush1.msra.mxu0 0.0
    %2573 = vmatprep.subr.mxu0 0.0
    %2574 = vmatpush1.msra.mxu0 0.0
    %2575 = vmatprep.subr.mxu0 0.0
    %2576 = vmatpush1.msra.mxu0 0.0
    %2577 = vmatprep.subr.mxu0 0.0
    %2578 = vmatpush1.msra.mxu0 0.0
    %2579 = vmatprep.subr.mxu0 0.0
    %2580 = vmatpush1.msra.mxu0 0.0
    %2581 = vmatprep.subr.mxu0 0.0
    %2582 = vmatpush1.msra.mxu0 0.0
    %2583 = vmatprep.subr.mxu0 0.0
    %2584 = vmatpush1.msra.mxu0 0.0
    %2585 = vmatprep.mubr.f32.mxu0 0.0
    %2586 = vmatmul.mubr.f32.gmra.mrb[0].mxu0 %v434
    %v2587 = vpop.f32.mrb[0].mxu0
    %v2588 = vadd.f32 0.0, %v2587
    %v2589 = vpop.f32.mrb[0].mxu0
    %2590 = vmatprep.mubr.f32.mxu0 0.0
    %2591 = vmatmul.mubr.f32.gmra.mrb[0].mxu0 %v437
    %v2592 = vpop.f32.mrb[0].mxu0
    %v2593 = vadd.f32 0.0, %v2592
    %v2594 = vpop.f32.mrb[0].mxu0
    %2595 = vmatprep.mubr.f32.mxu0 0.0
    %2596 = vmatmul.mubr.f32.gmra.mrb[0].mxu0 %v440
    %v2597 = vpop.f32.mrb[0].mxu0
    %v2598 = vadd.f32 0.0, %v2597
    %v2599 = vpop.f32.mrb[0].mxu0
    %2600 = vmatprep.mubr.f32.mxu0 0.0
    %2601 = vmatmul.mubr.f32.gmra.mrb[0].mxu0 %v443
    %v2602 = vpop.f32.mrb[0].mxu0
    %v2603 = vadd.f32 0.0, %v2602
    %v2604 = vpop.f32.mrb[0].mxu0
    %2605 = vdwg.mxu0
    %2606 = vmatprep.subr.mxu0 0.0
    %2607 = vmatpush1.msra.mxu0 %v2487
    %2608 = vmatprep.subr.mxu0 0.0
    %2609 = vmatpush1.msra.mxu0 %v2492
    %2610 = vmatprep.subr.mxu0 0.0
    %2611 = vmatpush1.msra.mxu0 %v2497
    %2612 = vmatprep.subr.mxu0 0.0
    %2613 = vmatpush1.msra.mxu0 %v2502
    %2614 = vmatprep.subr.mxu0 0.0
    %2615 = vmatpush1.msra.mxu0 0.0
    %2616 = vmatprep.subr.mxu0 0.0
    %2617 = vmatpush1.msra.mxu0 0.0
    %2618 = vmatprep.subr.mxu0 0.0
    %2619 = vmatpush1.msra.mxu0 0.0
    %2620 = vmatprep.subr.mxu0 0.0
    %2621 = vmatpush1.msra.mxu0 0.0
    %2622 = vmatprep.subr.mxu0 0.0
    %2623 = vmatpush1.msra.mxu0 0.0
    %2624 = vmatprep.subr.mxu0 0.0
    %2625 = vmatpush1.msra.mxu0 0.0
    %2626 = vmatprep.subr.mxu0 0.0
    %2627 = vmatpush1.msra.mxu0 0.0
    %2628 = vmatprep.subr.mxu0 0.0
    %2629 = vmatpush1.msra.mxu0 0.0
    %2630 = vmatprep.subr.mxu0 0.0
    %2631 = vmatpush1.msra.mxu0 0.0
    %2632 = vmatprep.subr.mxu0 0.0
    %2633 = vmatpush1.msra.mxu0 0.0
    %2634 = vmatprep.subr.mxu0 0.0
    %2635 = vmatpush1.msra.mxu0 0.0
    %2636 = vmatprep.subr.mxu0 0.0
    %2637 = vmatpush1.msra.mxu0 0.0
    %2638 = vmatprep.subr.mxu0 0.0
    %2639 = vmatpush1.msra.mxu0 0.0
    %2640 = vmatprep.subr.mxu0 0.0
    %2641 = vmatpush1.msra.mxu0 0.0
    %2642 = vmatprep.subr.mxu0 0.0
    %2643 = vmatpush1.msra.mxu0 0.0
    %2644 = vmatprep.subr.mxu0 0.0
    %2645 = vmatpush1.msra.mxu0 0.0
    %2646 = vmatprep.subr.mxu0 0.0
    %2647 = vmatpush1.msra.mxu0 0.0
    %2648 = vmatprep.subr.mxu0 0.0
    %2649 = vmatpush1.msra.mxu0 0.0
    %2650 = vmatprep.subr.mxu0 0.0
    %2651 = vmatpush1.msra.mxu0 0.0
    %2652 = vmatprep.subr.mxu0 0.0
    %2653 = vmatpush1.msra.mxu0 0.0
    %2654 = vmatprep.subr.mxu0 0.0
    %2655 = vmatpush1.msra.mxu0 0.0
    %2656 = vmatprep.subr.mxu0 0.0
    %2657 = vmatpush1.msra.mxu0 0.0
    %2658 = vmatprep.subr.mxu0 0.0
    %2659 = vmatpush1.msra.mxu0 0.0
    %2660 = vmatprep.subr.mxu0 0.0
    %2661 = vmatpush1.msra.mxu0 0.0
    %2662 = vmatprep.subr.mxu0 0.0
    %2663 = vmatpush1.msra.mxu0 0.0
    %2664 = vmatprep.subr.mxu0 0.0
    %2665 = vmatpush1.msra.mxu0 0.0
    %2666 = vmatprep.subr.mxu0 0.0
    %2667 = vmatpush1.msra.mxu0 0.0
    %2668 = vmatprep.subr.mxu0 0.0
    %2669 = vmatpush1.msra.mxu0 0.0
    %2670 = vmatprep.mubr.f32.mxu0 0.0
    %2671 = vmatmul.mubr.f32.gmra.mrb[0].mxu0 %v531
    %v2672 = vpop.f32.mrb[0].mxu0
    %v2673 = vadd.f32 %v2588, %v2672
    %v2674 = vpop.f32.mrb[0].mxu0
    %2675 = vmatprep.mubr.f32.mxu0 0.0
    %2676 = vmatmul.mubr.f32.gmra.mrb[0].mxu0 %v534
    %v2677 = vpop.f32.mrb[0].mxu0
    %v2678 = vadd.f32 %v2593, %v2677
    %v2679 = vpop.f32.mrb[0].mxu0
    %2680 = vmatprep.mubr.f32.mxu0 0.0
    %2681 = vmatmul.mubr.f32.gmra.mrb[0].mxu0 %v537
    %v2682 = vpop.f32.mrb[0].mxu0
    %v2683 = vadd.f32 %v2598, %v2682
    %v2684 = vpop.f32.mrb[0].mxu0
    %2685 = vmatprep.mubr.f32.mxu0 0.0
    %2686 = vmatmul.mubr.f32.gmra.mrb[0].mxu0 %v540
    %v2687 = vpop.f32.mrb[0].mxu0
    %v2688 = vadd.f32 %v2603, %v2687
    %v2689 = vpop.f32.mrb[0].mxu0
    %2690 = vdwg.mxu0
    %2691 = vrot.lane.b32.xlu0 %v2487, 64
    %v2692 = vpop.permute.xlu0 %2691
    %2693 = vrot.lane.b32.xlu0 %v2492, 64
    %v2694 = vpop.permute.xlu0 %2693
    %2695 = vrot.lane.b32.xlu0 %v2497, 64
    %v2696 = vpop.permute.xlu0 %2695
    %2697 = vrot.lane.b32.xlu0 %v2502, 64
    %v2698 = vpop.permute.xlu0 %2697
    %2703 = vmatprep.subr.mxu0 0.0
    %2704 = vmatpush1.msra.mxu0 %v2692
    %2705 = vmatprep.subr.mxu0 0.0
    %2706 = vmatpush1.msra.mxu0 %v2694
    %2707 = vmatprep.subr.mxu0 0.0
    %2708 = vmatpush1.msra.mxu0 %v2696
    %2709 = vmatprep.subr.mxu0 0.0
    %2710 = vmatpush1.msra.mxu0 %v2698
    %2711 = vmatprep.subr.mxu0 0.0
    %2712 = vmatpush1.msra.mxu0 0.0
    %2713 = vmatprep.subr.mxu0 0.0
    %2714 = vmatpush1.msra.mxu0 0.0
    %2715 = vmatprep.subr.mxu0 0.0
    %2716 = vmatpush1.msra.mxu0 0.0
    %2717 = vmatprep.subr.mxu0 0.0
    %2718 = vmatpush1.msra.mxu0 0.0
    %2719 = vmatprep.subr.mxu0 0.0
    %2720 = vmatpush1.msra.mxu0 0.0
    %2721 = vmatprep.subr.mxu0 0.0
    %2722 = vmatpush1.msra.mxu0 0.0
    %2723 = vmatprep.subr.mxu0 0.0
    %2724 = vmatpush1.msra.mxu0 0.0
    %2725 = vmatprep.subr.mxu0 0.0
    %2726 = vmatpush1.msra.mxu0 0.0
    %2727 = vmatprep.subr.mxu0 0.0
    %2728 = vmatpush1.msra.mxu0 0.0
    %2729 = vmatprep.subr.mxu0 0.0
    %2730 = vmatpush1.msra.mxu0 0.0
    %2731 = vmatprep.subr.mxu0 0.0
    %2732 = vmatpush1.msra.mxu0 0.0
    %2733 = vmatprep.subr.mxu0 0.0
    %2734 = vmatpush1.msra.mxu0 0.0
    %2735 = vmatprep.subr.mxu0 0.0
    %2736 = vmatpush1.msra.mxu0 0.0
    %2737 = vmatprep.subr.mxu0 0.0
    %2738 = vmatpush1.msra.mxu0 0.0
    %2739 = vmatprep.subr.mxu0 0.0
    %2740 = vmatpush1.msra.mxu0 0.0
    %2741 = vmatprep.subr.mxu0 0.0
    %2742 = vmatpush1.msra.mxu0 0.0
    %2743 = vmatprep.subr.mxu0 0.0
    %2744 = vmatpush1.msra.mxu0 0.0
    %2745 = vmatprep.subr.mxu0 0.0
    %2746 = vmatpush1.msra.mxu0 0.0
    %2747 = vmatprep.subr.mxu0 0.0
    %2748 = vmatpush1.msra.mxu0 0.0
    %2749 = vmatprep.subr.mxu0 0.0
    %2750 = vmatpush1.msra.mxu0 0.0
    %2751 = vmatprep.subr.mxu0 0.0
    %2752 = vmatpush1.msra.mxu0 0.0
    %2753 = vmatprep.subr.mxu0 0.0
    %2754 = vmatpush1.msra.mxu0 0.0
    %2755 = vmatprep.subr.mxu0 0.0
    %2756 = vmatpush1.msra.mxu0 0.0
    %2757 = vmatprep.subr.mxu0 0.0
    %2758 = vmatpush1.msra.mxu0 0.0
    %2759 = vmatprep.subr.mxu0 0.0
    %2760 = vmatpush1.msra.mxu0 0.0
    %2761 = vmatprep.subr.mxu0 0.0
    %2762 = vmatpush1.msra.mxu0 0.0
    %2763 = vmatprep.subr.mxu0 0.0
    %2764 = vmatpush1.msra.mxu0 0.0
    %2765 = vmatprep.subr.mxu0 0.0
    %2766 = vmatpush1.msra.mxu0 0.0
    %2767 = vmatprep.mubr.f32.mxu0 0.0
    %2768 = vmatmul.mubr.f32.gmra.mrb[0].mxu0 %v640
    %v2769 = vpop.f32.mrb[0].mxu0
    %v2770 = vadd.f32 0.0, %v2769
    %v2771 = vpop.f32.mrb[0].mxu0
    %2772 = vmatprep.mubr.f32.mxu0 0.0
    %2773 = vmatmul.mubr.f32.gmra.mrb[0].mxu0 %v643
    %v2774 = vpop.f32.mrb[0].mxu0
    %v2775 = vadd.f32 0.0, %v2774
    %v2776 = vpop.f32.mrb[0].mxu0
    %2777 = vmatprep.mubr.f32.mxu0 0.0
    %2778 = vmatmul.mubr.f32.gmra.mrb[0].mxu0 %v646
    %v2779 = vpop.f32.mrb[0].mxu0
    %v2780 = vadd.f32 0.0, %v2779
    %v2781 = vpop.f32.mrb[0].mxu0
    %2782 = vmatprep.mubr.f32.mxu0 0.0
    %2783 = vmatmul.mubr.f32.gmra.mrb[0].mxu0 %v649
    %v2784 = vpop.f32.mrb[0].mxu0
    %v2785 = vadd.f32 0.0, %v2784
    %v2786 = vpop.f32.mrb[0].mxu0
    %2787 = vdwg.mxu0
    %v2788 = vadd.f32 %v2673, %v2770
    %v2789 = vadd.f32 %v2678, %v2775
    %v2790 = vadd.f32 %v2683, %v2780
    %v2791 = vadd.f32 %v2688, %v2785
    %2792 = vmatprep.subr.mxu0 0.0
    %2793 = vmatpush1.msra.mxu0 %v308
    %2794 = vmatprep.subr.mxu0 0.0
    %2795 = vmatpush1.msra.mxu0 %v309
    %2796 = vmatprep.subr.mxu0 0.0
    %2797 = vmatpush1.msra.mxu0 %v310
    %2798 = vmatprep.subr.mxu0 0.0
    %2799 = vmatpush1.msra.mxu0 %v311
    %2800 = vmatprep.subr.mxu0 0.0
    %2801 = vmatpush1.msra.mxu0 0.0
    %2802 = vmatprep.subr.mxu0 0.0
    %2803 = vmatpush1.msra.mxu0 0.0
    %2804 = vmatprep.subr.mxu0 0.0
    %2805 = vmatpush1.msra.mxu0 0.0
    %2806 = vmatprep.subr.mxu0 0.0
    %2807 = vmatpush1.msra.mxu0 0.0
    %2808 = vmatprep.subr.mxu0 0.0
    %2809 = vmatpush1.msra.mxu0 0.0
    %2810 = vmatprep.subr.mxu0 0.0
    %2811 = vmatpush1.msra.mxu0 0.0
    %2812 = vmatprep.subr.mxu0 0.0
    %2813 = vmatpush1.msra.mxu0 0.0
    %2814 = vmatprep.subr.mxu0 0.0
    %2815 = vmatpush1.msra.mxu0 0.0
    %2816 = vmatprep.subr.mxu0 0.0
    %2817 = vmatpush1.msra.mxu0 0.0
    %2818 = vmatprep.subr.mxu0 0.0
    %2819 = vmatpush1.msra.mxu0 0.0
    %2820 = vmatprep.subr.mxu0 0.0
    %2821 = vmatpush1.msra.mxu0 0.0
    %2822 = vmatprep.subr.mxu0 0.0
    %2823 = vmatpush1.msra.mxu0 0.0
    %2824 = vmatprep.subr.mxu0 0.0
    %2825 = vmatpush1.msra.mxu0 0.0
    %2826 = vmatprep.subr.mxu0 0.0
    %2827 = vmatpush1.msra.mxu0 0.0
    %2828 = vmatprep.subr.mxu0 0.0
    %2829 = vmatpush1.msra.mxu0 0.0
    %2830 = vmatprep.subr.mxu0 0.0
    %2831 = vmatpush1.msra.mxu0 0.0
    %2832 = vmatprep.subr.mxu0 0.0
    %2833 = vmatpush1.msra.mxu0 0.0
    %2834 = vmatprep.subr.mxu0 0.0
    %2835 = vmatpush1.msra.mxu0 0.0
    %2836 = vmatprep.subr.mxu0 0.0
    %2837 = vmatpush1.msra.mxu0 0.0
    %2838 = vmatprep.subr.mxu0 0.0
    %2839 = vmatpush1.msra.mxu0 0.0
    %2840 = vmatprep.subr.mxu0 0.0
    %2841 = vmatpush1.msra.mxu0 0.0
    %2842 = vmatprep.subr.mxu0 0.0
    %2843 = vmatpush1.msra.mxu0 0.0
    %2844 = vmatprep.subr.mxu0 0.0
    %2845 = vmatpush1.msra.mxu0 0.0
    %2846 = vmatprep.subr.mxu0 0.0
    %2847 = vmatpush1.msra.mxu0 0.0
    %2848 = vmatprep.subr.mxu0 0.0
    %2849 = vmatpush1.msra.mxu0 0.0
    %2850 = vmatprep.subr.mxu0 0.0
    %2851 = vmatpush1.msra.mxu0 0.0
    %2852 = vmatprep.subr.mxu0 0.0
    %2853 = vmatpush1.msra.mxu0 0.0
    %2854 = vmatprep.subr.mxu0 0.0
    %2855 = vmatpush1.msra.mxu0 0.0
    %2856 = vmatprep.mubr.f32.mxu0 0.0
    %2857 = vmatmul.mubr.f32.gmra.mrb[0].mxu0 %v2412
    %v2858 = vpop.f32.mrb[0].mxu0
    %v2859 = vadd.f32 0.0, %v2858
    %v2860 = vpop.f32.mrb[0].mxu0
    %2861 = vmatprep.mubr.f32.mxu0 0.0
    %2862 = vmatmul.mubr.f32.gmra.mrb[0].mxu0 %v2414
    %v2863 = vpop.f32.mrb[0].mxu0
    %v2864 = vadd.f32 0.0, %v2863
    %v2865 = vpop.f32.mrb[0].mxu0
    %2866 = vmatprep.mubr.f32.mxu0 0.0
    %2867 = vmatmul.mubr.f32.gmra.mrb[0].mxu0 %v2416
    %v2868 = vpop.f32.mrb[0].mxu0
    %v2869 = vadd.f32 0.0, %v2868
    %v2870 = vpop.f32.mrb[0].mxu0
    %2871 = vmatprep.mubr.f32.mxu0 0.0
    %2872 = vmatmul.mubr.f32.gmra.mrb[0].mxu0 %v2418
    %v2873 = vpop.f32.mrb[0].mxu0
    %v2874 = vadd.f32 0.0, %v2873
    %v2875 = vpop.f32.mrb[0].mxu0
    %2876 = vdwg.mxu0
    %v2878 = vsel %vm319, %v2788, 0
    %v2881 = vsel %vm319, %v2789, 0
    %v2884 = vsel %vm319, %v2790, 0
    %v2887 = vsel %vm319, %v2791, 0
    %2889 = vmatprep.subr.mxu0 0.0
    %2890 = vmatpush1.msra.mxu0 %v304
    %2891 = vmatprep.subr.mxu0 0.0
    %2892 = vmatpush1.msra.mxu0 %v305
    %2893 = vmatprep.subr.mxu0 0.0
    %2894 = vmatpush1.msra.mxu0 %v306
    %2895 = vmatprep.subr.mxu0 0.0
    %2896 = vmatpush1.msra.mxu0 %v307
    %2897 = vmatprep.subr.mxu0 0.0
    %2898 = vmatpush1.msra.mxu0 0.0
    %2899 = vmatprep.subr.mxu0 0.0
    %2900 = vmatpush1.msra.mxu0 0.0
    %2901 = vmatprep.subr.mxu0 0.0
    %2902 = vmatpush1.msra.mxu0 0.0
    %2903 = vmatprep.subr.mxu0 0.0
    %2904 = vmatpush1.msra.mxu0 0.0
    %2905 = vmatprep.subr.mxu0 0.0
    %2906 = vmatpush1.msra.mxu0 0.0
    %2907 = vmatprep.subr.mxu0 0.0
    %2908 = vmatpush1.msra.mxu0 0.0
    %2909 = vmatprep.subr.mxu0 0.0
    %2910 = vmatpush1.msra.mxu0 0.0
    %2911 = vmatprep.subr.mxu0 0.0
    %2912 = vmatpush1.msra.mxu0 0.0
    %2913 = vmatprep.subr.mxu0 0.0
    %2914 = vmatpush1.msra.mxu0 0.0
    %2915 = vmatprep.subr.mxu0 0.0
    %2916 = vmatpush1.msra.mxu0 0.0
    %2917 = vmatprep.subr.mxu0 0.0
    %2918 = vmatpush1.msra.mxu0 0.0
    %2919 = vmatprep.subr.mxu0 0.0
    %2920 = vmatpush1.msra.mxu0 0.0
    %2921 = vmatprep.subr.mxu0 0.0
    %2922 = vmatpush1.msra.mxu0 0.0
    %2923 = vmatprep.subr.mxu0 0.0
    %2924 = vmatpush1.msra.mxu0 0.0
    %2925 = vmatprep.subr.mxu0 0.0
    %2926 = vmatpush1.msra.mxu0 0.0
    %2927 = vmatprep.subr.mxu0 0.0
    %2928 = vmatpush1.msra.mxu0 0.0
    %2929 = vmatprep.subr.mxu0 0.0
    %2930 = vmatpush1.msra.mxu0 0.0
    %2931 = vmatprep.subr.mxu0 0.0
    %2932 = vmatpush1.msra.mxu0 0.0
    %2933 = vmatprep.subr.mxu0 0.0
    %2934 = vmatpush1.msra.mxu0 0.0
    %2935 = vmatprep.subr.mxu0 0.0
    %2936 = vmatpush1.msra.mxu0 0.0
    %2937 = vmatprep.subr.mxu0 0.0
    %2938 = vmatpush1.msra.mxu0 0.0
    %2939 = vmatprep.subr.mxu0 0.0
    %2940 = vmatpush1.msra.mxu0 0.0
    %2941 = vmatprep.subr.mxu0 0.0
    %2942 = vmatpush1.msra.mxu0 0.0
    %2943 = vmatprep.subr.mxu0 0.0
    %2944 = vmatpush1.msra.mxu0 0.0
    %2945 = vmatprep.subr.mxu0 0.0
    %2946 = vmatpush1.msra.mxu0 0.0
    %2947 = vmatprep.subr.mxu0 0.0
    %2948 = vmatpush1.msra.mxu0 0.0
    %2949 = vmatprep.subr.mxu0 0.0
    %2950 = vmatpush1.msra.mxu0 0.0
    %2951 = vmatprep.subr.mxu0 0.0
    %2952 = vmatpush1.msra.mxu0 0.0
    %2953 = vmatprep.mubr.f32.mxu0 0.0
    %2954 = vmatmul.mubr.f32.gmra.mrb[0].mxu0 %v2878
    %v2955 = vpop.f32.mrb[0].mxu0
    %v2956 = vadd.f32 %v2859, %v2955
    %v2957 = vpop.f32.mrb[0].mxu0
    %2958 = vmatprep.mubr.f32.mxu0 0.0
    %2959 = vmatmul.mubr.f32.gmra.mrb[0].mxu0 %v2881
    %v2960 = vpop.f32.mrb[0].mxu0
    %v2961 = vadd.f32 %v2864, %v2960
    %v2962 = vpop.f32.mrb[0].mxu0
    %2963 = vmatprep.mubr.f32.mxu0 0.0
    %2964 = vmatmul.mubr.f32.gmra.mrb[0].mxu0 %v2884
    %v2965 = vpop.f32.mrb[0].mxu0
    %v2966 = vadd.f32 %v2869, %v2965
    %v2967 = vpop.f32.mrb[0].mxu0
    %2968 = vmatprep.mubr.f32.mxu0 0.0
    %2969 = vmatmul.mubr.f32.gmra.mrb[0].mxu0 %v2887
    %v2970 = vpop.f32.mrb[0].mxu0
    %v2971 = vadd.f32 %v2874, %v2970
    %v2972 = vpop.f32.mrb[0].mxu0
    %2973 = vdwg.mxu0
    %v2974 = vadd.f32 %v2956, %v926
    %v2975 = vadd.f32 %v2961, %v926
    %v2976 = vadd.f32 %v2966, %v926
    %v2977 = vadd.f32 %v2971, %v926
    %v2978 = vxor.u32 %v2974, 2147483648
    %v2979 = vxor.u32 %v2975, 2147483648
    %v2980 = vxor.u32 %v2976, 2147483648
    %v2981 = vxor.u32 %v2977, 2147483648
    %v2982 = vmul.f32 %v2978, 1.442695
    %v2983 = vpow.pop %v2982
    %v2984 = vmul.f32 %v2979, 1.442695
    %v2985 = vpow.pop %v2984
    %v2986 = vmul.f32 %v2980, 1.442695
    %v2987 = vpow.pop %v2986
    %v2988 = vmul.f32 %v2981, 1.442695
    %v2989 = vpow.pop %v2988
    %v2990 = vadd.f32 %v2983, 1.0
    %v2991 = vadd.f32 %v2985, 1.0
    %v2992 = vadd.f32 %v2987, 1.0
    %v2993 = vadd.f32 %v2989, 1.0
    %v2994 = vrcp.pop %v2990
    %v2995 = vmul.f32 1.0, %v2994
    %v2996 = vrcp.pop %v2991
    %v2997 = vmul.f32 1.0, %v2996
    %v2998 = vrcp.pop %v2992
    %v2999 = vmul.f32 1.0, %v2998
    %v3000 = vrcp.pop %v2993
    %v3001 = vmul.f32 1.0, %v3000
    %3006 = vrot.lane.b32.xlu0 %v2974, 32
    %v3007 = vpop.permute.xlu0 %3006
    %3008 = vrot.lane.b32.xlu0 %v2975, 32
    %v3009 = vpop.permute.xlu0 %3008
    %3010 = vrot.lane.b32.xlu0 %v2976, 32
    %v3011 = vpop.permute.xlu0 %3010
    %3012 = vrot.lane.b32.xlu0 %v2977, 32
    %v3013 = vpop.permute.xlu0 %3012
    %v3018 = vmul.f32 %v2995, %v3007
    %v3019 = vmul.f32 %v2997, %v3009
    %v3020 = vmul.f32 %v2999, %v3011
    %v3021 = vmul.f32 %v3001, %v3013
    %3026 = vrot.lane.b32.xlu0 %v3018, 64
    %v3027 = vpop.permute.xlu0 %3026
    %3028 = vrot.lane.b32.xlu0 %v3019, 64
    %v3029 = vpop.permute.xlu0 %3028
    %3030 = vrot.lane.b32.xlu0 %v3020, 64
    %v3031 = vpop.permute.xlu0 %3030
    %3032 = vrot.lane.b32.xlu0 %v3021, 64
    %v3033 = vpop.permute.xlu0 %3032
    %v3038 = vadd.f32 %v2974, %v3027
    %v3039 = vadd.f32 %v2975, %v3029
    %v3040 = vadd.f32 %v2976, %v3031
    %v3041 = vadd.f32 %v2977, %v3033
    %v3042 = vtanh.pop %v3038
    %v3043 = vtanh.pop %v3039
    %v3044 = vtanh.pop %v3040
    %v3045 = vtanh.pop %v3041
    %v3046 = vsub.f32 1.0, %v2995
    %v3047 = vsub.f32 1.0, %v2997
    %v3048 = vsub.f32 1.0, %v2999
    %v3049 = vsub.f32 1.0, %v3001
    %3054 = vrot.lane.b32.xlu0 %v3042, 96
    %v3055 = vpop.permute.xlu0 %3054
    %3056 = vrot.lane.b32.xlu0 %v3043, 96
    %v3057 = vpop.permute.xlu0 %3056
    %3058 = vrot.lane.b32.xlu0 %v3044, 96
    %v3059 = vpop.permute.xlu0 %3058
    %3060 = vrot.lane.b32.xlu0 %v3045, 96
    %v3061 = vpop.permute.xlu0 %3060
    %v3066 = vmul.f32 %v3046, %v3055
    %v3067 = vmul.f32 %v3047, %v3057
    %v3068 = vmul.f32 %v3048, %v3059
    %v3069 = vmul.f32 %v3049, %v3061
    %v3070 = vmul.f32 %v2995, %v2396
    %v3071 = vmul.f32 %v2997, %v2397
    %v3072 = vmul.f32 %v2999, %v2398
    %v3073 = vmul.f32 %v3001, %v2399
    %v3074 = vadd.f32 %v3066, %v3070
    %v3075 = vadd.f32 %v3067, %v3071
    %v3076 = vadd.f32 %v3068, %v3072
    %v3077 = vadd.f32 %v3069, %v3073
    %3082 = vrot.lane.b32.xlu0 %v3074, 96
    %v3083 = vpop.permute.xlu0 %3082
    %3084 = vrot.lane.b32.xlu0 %v3075, 96
    %v3085 = vpop.permute.xlu0 %3084
    %3086 = vrot.lane.b32.xlu0 %v3076, 96
    %v3087 = vpop.permute.xlu0 %3086
    %3088 = vrot.lane.b32.xlu0 %v3077, 96
    %v3089 = vpop.permute.xlu0 %3088
    %v3090 = vsel %vm319, %v3083, 0
    %v3092 = vsel %vm319, %v3085, 0
    %v3094 = vsel %vm319, %v3087, 0
    %v3096 = vsel %vm319, %v3089, 0
    %3098 = vmatprep.subr.mxu0 0.0
    %3099 = vmatpush1.msra.mxu0 %v299
    %3100 = vmatprep.subr.mxu0 0.0
    %3101 = vmatpush1.msra.mxu0 %v300
    %3102 = vmatprep.subr.mxu0 0.0
    %3103 = vmatpush1.msra.mxu0 %v301
    %3104 = vmatprep.subr.mxu0 0.0
    %3105 = vmatpush1.msra.mxu0 %v302
    %3106 = vmatprep.subr.mxu0 0.0
    %3107 = vmatpush1.msra.mxu0 0.0
    %3108 = vmatprep.subr.mxu0 0.0
    %3109 = vmatpush1.msra.mxu0 0.0
    %3110 = vmatprep.subr.mxu0 0.0
    %3111 = vmatpush1.msra.mxu0 0.0
    %3112 = vmatprep.subr.mxu0 0.0
    %3113 = vmatpush1.msra.mxu0 0.0
    %3114 = vmatprep.subr.mxu0 0.0
    %3115 = vmatpush1.msra.mxu0 0.0
    %3116 = vmatprep.subr.mxu0 0.0
    %3117 = vmatpush1.msra.mxu0 0.0
    %3118 = vmatprep.subr.mxu0 0.0
    %3119 = vmatpush1.msra.mxu0 0.0
    %3120 = vmatprep.subr.mxu0 0.0
    %3121 = vmatpush1.msra.mxu0 0.0
    %3122 = vmatprep.subr.mxu0 0.0
    %3123 = vmatpush1.msra.mxu0 0.0
    %3124 = vmatprep.subr.mxu0 0.0
    %3125 = vmatpush1.msra.mxu0 0.0
    %3126 = vmatprep.subr.mxu0 0.0
    %3127 = vmatpush1.msra.mxu0 0.0
    %3128 = vmatprep.subr.mxu0 0.0
    %3129 = vmatpush1.msra.mxu0 0.0
    %3130 = vmatprep.subr.mxu0 0.0
    %3131 = vmatpush1.msra.mxu0 0.0
    %3132 = vmatprep.subr.mxu0 0.0
    %3133 = vmatpush1.msra.mxu0 0.0
    %3134 = vmatprep.subr.mxu0 0.0
    %3135 = vmatpush1.msra.mxu0 0.0
    %3136 = vmatprep.subr.mxu0 0.0
    %3137 = vmatpush1.msra.mxu0 0.0
    %3138 = vmatprep.subr.mxu0 0.0
    %3139 = vmatpush1.msra.mxu0 0.0
    %3140 = vmatprep.subr.mxu0 0.0
    %3141 = vmatpush1.msra.mxu0 0.0
    %3142 = vmatprep.subr.mxu0 0.0
    %3143 = vmatpush1.msra.mxu0 0.0
    %3144 = vmatprep.subr.mxu0 0.0
    %3145 = vmatpush1.msra.mxu0 0.0
    %3146 = vmatprep.subr.mxu0 0.0
    %3147 = vmatpush1.msra.mxu0 0.0
    %3148 = vmatprep.subr.mxu0 0.0
    %3149 = vmatpush1.msra.mxu0 0.0
    %3150 = vmatprep.subr.mxu0 0.0
    %3151 = vmatpush1.msra.mxu0 0.0
    %3152 = vmatprep.subr.mxu0 0.0
    %3153 = vmatpush1.msra.mxu0 0.0
    %3154 = vmatprep.subr.mxu0 0.0
    %3155 = vmatpush1.msra.mxu0 0.0
    %3156 = vmatprep.subr.mxu0 0.0
    %3157 = vmatpush1.msra.mxu0 0.0
    %3158 = vmatprep.subr.mxu0 0.0
    %3159 = vmatpush1.msra.mxu0 0.0
    %3160 = vmatprep.subr.mxu0 0.0
    %3161 = vmatpush1.msra.mxu0 0.0
    %3162 = vmatprep.mubr.f32.mxu0 0.0
    %3163 = vmatmul.mubr.f32.gmra.mrb[0].mxu0 %v3090
    %v3164 = vpop.f32.mrb[0].mxu0
    %v3165 = vadd.f32 %v317, %v3164
    %v3166 = vpop.f32.mrb[0].mxu0
    %3167 = vmatprep.mubr.f32.mxu0 0.0
    %3168 = vmatmul.mubr.f32.gmra.mrb[0].mxu0 %v3092
    %v3169 = vpop.f32.mrb[0].mxu0
    %v3170 = vadd.f32 %v317, %v3169
    %v3171 = vpop.f32.mrb[0].mxu0
    %3172 = vmatprep.mubr.f32.mxu0 0.0
    %3173 = vmatmul.mubr.f32.gmra.mrb[0].mxu0 %v3094
    %v3174 = vpop.f32.mrb[0].mxu0
    %v3175 = vadd.f32 %v317, %v3174
    %v3176 = vpop.f32.mrb[0].mxu0
    %3177 = vmatprep.mubr.f32.mxu0 0.0
    %3178 = vmatmul.mubr.f32.gmra.mrb[0].mxu0 %v3096
    %v3179 = vpop.f32.mrb[0].mxu0
    %v3180 = vadd.f32 %v317, %v3179
    %v3181 = vpop.f32.mrb[0].mxu0
    %3182 = vdwg.mxu0
    %3187 = vrot.lane.b32.xlu0 %v3165, 96
    %v3188 = vpop.permute.xlu0 %3187
    %3189 = vrot.lane.b32.xlu0 %v3170, 96
    %v3190 = vpop.permute.xlu0 %3189
    %3191 = vrot.lane.b32.xlu0 %v3175, 96
    %v3192 = vpop.permute.xlu0 %3191
    %3193 = vrot.lane.b32.xlu0 %v3180, 96
    %v3194 = vpop.permute.xlu0 %3193
    %3199 = vmatprep.subr.mxu0 0.0
    %3200 = vmatpush1.msra.mxu0 %v3188
    %3201 = vmatprep.subr.mxu0 0.0
    %3202 = vmatpush1.msra.mxu0 %v3190
    %3203 = vmatprep.subr.mxu0 0.0
    %3204 = vmatpush1.msra.mxu0 %v3192
    %3205 = vmatprep.subr.mxu0 0.0
    %3206 = vmatpush1.msra.mxu0 %v3194
    %3207 = vmatprep.subr.mxu0 0.0
    %3208 = vmatpush1.msra.mxu0 0.0
    %3209 = vmatprep.subr.mxu0 0.0
    %3210 = vmatpush1.msra.mxu0 0.0
    %3211 = vmatprep.subr.mxu0 0.0
    %3212 = vmatpush1.msra.mxu0 0.0
    %3213 = vmatprep.subr.mxu0 0.0
    %3214 = vmatpush1.msra.mxu0 0.0
    %3215 = vmatprep.subr.mxu0 0.0
    %3216 = vmatpush1.msra.mxu0 0.0
    %3217 = vmatprep.subr.mxu0 0.0
    %3218 = vmatpush1.msra.mxu0 0.0
    %3219 = vmatprep.subr.mxu0 0.0
    %3220 = vmatpush1.msra.mxu0 0.0
    %3221 = vmatprep.subr.mxu0 0.0
    %3222 = vmatpush1.msra.mxu0 0.0
    %3223 = vmatprep.subr.mxu0 0.0
    %3224 = vmatpush1.msra.mxu0 0.0
    %3225 = vmatprep.subr.mxu0 0.0
    %3226 = vmatpush1.msra.mxu0 0.0
    %3227 = vmatprep.subr.mxu0 0.0
    %3228 = vmatpush1.msra.mxu0 0.0
    %3229 = vmatprep.subr.mxu0 0.0
    %3230 = vmatpush1.msra.mxu0 0.0
    %3231 = vmatprep.subr.mxu0 0.0
    %3232 = vmatpush1.msra.mxu0 0.0
    %3233 = vmatprep.subr.mxu0 0.0
    %3234 = vmatpush1.msra.mxu0 0.0
    %3235 = vmatprep.subr.mxu0 0.0
    %3236 = vmatpush1.msra.mxu0 0.0
    %3237 = vmatprep.subr.mxu0 0.0
    %3238 = vmatpush1.msra.mxu0 0.0
    %3239 = vmatprep.subr.mxu0 0.0
    %3240 = vmatpush1.msra.mxu0 0.0
    %3241 = vmatprep.subr.mxu0 0.0
    %3242 = vmatpush1.msra.mxu0 0.0
    %3243 = vmatprep.subr.mxu0 0.0
    %3244 = vmatpush1.msra.mxu0 0.0
    %3245 = vmatprep.subr.mxu0 0.0
    %3246 = vmatpush1.msra.mxu0 0.0
    %3247 = vmatprep.subr.mxu0 0.0
    %3248 = vmatpush1.msra.mxu0 0.0
    %3249 = vmatprep.subr.mxu0 0.0
    %3250 = vmatpush1.msra.mxu0 0.0
    %3251 = vmatprep.subr.mxu0 0.0
    %3252 = vmatpush1.msra.mxu0 0.0
    %3253 = vmatprep.subr.mxu0 0.0
    %3254 = vmatpush1.msra.mxu0 0.0
    %3255 = vmatprep.subr.mxu0 0.0
    %3256 = vmatpush1.msra.mxu0 0.0
    %3257 = vmatprep.subr.mxu0 0.0
    %3258 = vmatpush1.msra.mxu0 0.0
    %3259 = vmatprep.subr.mxu0 0.0
    %3260 = vmatpush1.msra.mxu0 0.0
    %3261 = vmatprep.subr.mxu0 0.0
    %3262 = vmatpush1.msra.mxu0 0.0
    %3263 = vmatprep.mubr.f32.mxu0 0.0
    %3264 = vmatmul.mubr.f32.gmra.mrb[0].mxu0 %v434
    %v3265 = vpop.f32.mrb[0].mxu0
    %v3266 = vadd.f32 0.0, %v3265
    %v3267 = vpop.f32.mrb[0].mxu0
    %3268 = vmatprep.mubr.f32.mxu0 0.0
    %3269 = vmatmul.mubr.f32.gmra.mrb[0].mxu0 %v437
    %v3270 = vpop.f32.mrb[0].mxu0
    %v3271 = vadd.f32 0.0, %v3270
    %v3272 = vpop.f32.mrb[0].mxu0
    %3273 = vmatprep.mubr.f32.mxu0 0.0
    %3274 = vmatmul.mubr.f32.gmra.mrb[0].mxu0 %v440
    %v3275 = vpop.f32.mrb[0].mxu0
    %v3276 = vadd.f32 0.0, %v3275
    %v3277 = vpop.f32.mrb[0].mxu0
    %3278 = vmatprep.mubr.f32.mxu0 0.0
    %3279 = vmatmul.mubr.f32.gmra.mrb[0].mxu0 %v443
    %v3280 = vpop.f32.mrb[0].mxu0
    %v3281 = vadd.f32 0.0, %v3280
    %v3282 = vpop.f32.mrb[0].mxu0
    %3283 = vdwg.mxu0
    %3284 = vmatprep.subr.mxu0 0.0
    %3285 = vmatpush1.msra.mxu0 %v3165
    %3286 = vmatprep.subr.mxu0 0.0
    %3287 = vmatpush1.msra.mxu0 %v3170
    %3288 = vmatprep.subr.mxu0 0.0
    %3289 = vmatpush1.msra.mxu0 %v3175
    %3290 = vmatprep.subr.mxu0 0.0
    %3291 = vmatpush1.msra.mxu0 %v3180
    %3292 = vmatprep.subr.mxu0 0.0
    %3293 = vmatpush1.msra.mxu0 0.0
    %3294 = vmatprep.subr.mxu0 0.0
    %3295 = vmatpush1.msra.mxu0 0.0
    %3296 = vmatprep.subr.mxu0 0.0
    %3297 = vmatpush1.msra.mxu0 0.0
    %3298 = vmatprep.subr.mxu0 0.0
    %3299 = vmatpush1.msra.mxu0 0.0
    %3300 = vmatprep.subr.mxu0 0.0
    %3301 = vmatpush1.msra.mxu0 0.0
    %3302 = vmatprep.subr.mxu0 0.0
    %3303 = vmatpush1.msra.mxu0 0.0
    %3304 = vmatprep.subr.mxu0 0.0
    %3305 = vmatpush1.msra.mxu0 0.0
    %3306 = vmatprep.subr.mxu0 0.0
    %3307 = vmatpush1.msra.mxu0 0.0
    %3308 = vmatprep.subr.mxu0 0.0
    %3309 = vmatpush1.msra.mxu0 0.0
    %3310 = vmatprep.subr.mxu0 0.0
    %3311 = vmatpush1.msra.mxu0 0.0
    %3312 = vmatprep.subr.mxu0 0.0
    %3313 = vmatpush1.msra.mxu0 0.0
    %3314 = vmatprep.subr.mxu0 0.0
    %3315 = vmatpush1.msra.mxu0 0.0
    %3316 = vmatprep.subr.mxu0 0.0
    %3317 = vmatpush1.msra.mxu0 0.0
    %3318 = vmatprep.subr.mxu0 0.0
    %3319 = vmatpush1.msra.mxu0 0.0
    %3320 = vmatprep.subr.mxu0 0.0
    %3321 = vmatpush1.msra.mxu0 0.0
    %3322 = vmatprep.subr.mxu0 0.0
    %3323 = vmatpush1.msra.mxu0 0.0
    %3324 = vmatprep.subr.mxu0 0.0
    %3325 = vmatpush1.msra.mxu0 0.0
    %3326 = vmatprep.subr.mxu0 0.0
    %3327 = vmatpush1.msra.mxu0 0.0
    %3328 = vmatprep.subr.mxu0 0.0
    %3329 = vmatpush1.msra.mxu0 0.0
    %3330 = vmatprep.subr.mxu0 0.0
    %3331 = vmatpush1.msra.mxu0 0.0
    %3332 = vmatprep.subr.mxu0 0.0
    %3333 = vmatpush1.msra.mxu0 0.0
    %3334 = vmatprep.subr.mxu0 0.0
    %3335 = vmatpush1.msra.mxu0 0.0
    %3336 = vmatprep.subr.mxu0 0.0
    %3337 = vmatpush1.msra.mxu0 0.0
    %3338 = vmatprep.subr.mxu0 0.0
    %3339 = vmatpush1.msra.mxu0 0.0
    %3340 = vmatprep.subr.mxu0 0.0
    %3341 = vmatpush1.msra.mxu0 0.0
    %3342 = vmatprep.subr.mxu0 0.0
    %3343 = vmatpush1.msra.mxu0 0.0
    %3344 = vmatprep.subr.mxu0 0.0
    %3345 = vmatpush1.msra.mxu0 0.0
    %3346 = vmatprep.subr.mxu0 0.0
    %3347 = vmatpush1.msra.mxu0 0.0
    %3348 = vmatprep.mubr.f32.mxu0 0.0
    %3349 = vmatmul.mubr.f32.gmra.mrb[0].mxu0 %v531
    %v3350 = vpop.f32.mrb[0].mxu0
    %v3351 = vadd.f32 %v3266, %v3350
    %v3352 = vpop.f32.mrb[0].mxu0
    %3353 = vmatprep.mubr.f32.mxu0 0.0
    %3354 = vmatmul.mubr.f32.gmra.mrb[0].mxu0 %v534
    %v3355 = vpop.f32.mrb[0].mxu0
    %v3356 = vadd.f32 %v3271, %v3355
    %v3357 = vpop.f32.mrb[0].mxu0
    %3358 = vmatprep.mubr.f32.mxu0 0.0
    %3359 = vmatmul.mubr.f32.gmra.mrb[0].mxu0 %v537
    %v3360 = vpop.f32.mrb[0].mxu0
    %v3361 = vadd.f32 %v3276, %v3360
    %v3362 = vpop.f32.mrb[0].mxu0
    %3363 = vmatprep.mubr.f32.mxu0 0.0
    %3364 = vmatmul.mubr.f32.gmra.mrb[0].mxu0 %v540
    %v3365 = vpop.f32.mrb[0].mxu0
    %v3366 = vadd.f32 %v3281, %v3365
    %v3367 = vpop.f32.mrb[0].mxu0
    %3368 = vdwg.mxu0
    %3369 = vrot.lane.b32.xlu0 %v3165, 64
    %v3370 = vpop.permute.xlu0 %3369
    %3371 = vrot.lane.b32.xlu0 %v3170, 64
    %v3372 = vpop.permute.xlu0 %3371
    %3373 = vrot.lane.b32.xlu0 %v3175, 64
    %v3374 = vpop.permute.xlu0 %3373
    %3375 = vrot.lane.b32.xlu0 %v3180, 64
    %v3376 = vpop.permute.xlu0 %3375
    %3381 = vmatprep.subr.mxu0 0.0
    %3382 = vmatpush1.msra.mxu0 %v3370
    %3383 = vmatprep.subr.mxu0 0.0
    %3384 = vmatpush1.msra.mxu0 %v3372
    %3385 = vmatprep.subr.mxu0 0.0
    %3386 = vmatpush1.msra.mxu0 %v3374
    %3387 = vmatprep.subr.mxu0 0.0
    %3388 = vmatpush1.msra.mxu0 %v3376
    %3389 = vmatprep.subr.mxu0 0.0
    %3390 = vmatpush1.msra.mxu0 0.0
    %3391 = vmatprep.subr.mxu0 0.0
    %3392 = vmatpush1.msra.mxu0 0.0
    %3393 = vmatprep.subr.mxu0 0.0
    %3394 = vmatpush1.msra.mxu0 0.0
    %3395 = vmatprep.subr.mxu0 0.0
    %3396 = vmatpush1.msra.mxu0 0.0
    %3397 = vmatprep.subr.mxu0 0.0
    %3398 = vmatpush1.msra.mxu0 0.0
    %3399 = vmatprep.subr.mxu0 0.0
    %3400 = vmatpush1.msra.mxu0 0.0
    %3401 = vmatprep.subr.mxu0 0.0
    %3402 = vmatpush1.msra.mxu0 0.0
    %3403 = vmatprep.subr.mxu0 0.0
    %3404 = vmatpush1.msra.mxu0 0.0
    %3405 = vmatprep.subr.mxu0 0.0
    %3406 = vmatpush1.msra.mxu0 0.0
    %3407 = vmatprep.subr.mxu0 0.0
    %3408 = vmatpush1.msra.mxu0 0.0
    %3409 = vmatprep.subr.mxu0 0.0
    %3410 = vmatpush1.msra.mxu0 0.0
    %3411 = vmatprep.subr.mxu0 0.0
    %3412 = vmatpush1.msra.mxu0 0.0
    %3413 = vmatprep.subr.mxu0 0.0
    %3414 = vmatpush1.msra.mxu0 0.0
    %3415 = vmatprep.subr.mxu0 0.0
    %3416 = vmatpush1.msra.mxu0 0.0
    %3417 = vmatprep.subr.mxu0 0.0
    %3418 = vmatpush1.msra.mxu0 0.0
    %3419 = vmatprep.subr.mxu0 0.0
    %3420 = vmatpush1.msra.mxu0 0.0
    %3421 = vmatprep.subr.mxu0 0.0
    %3422 = vmatpush1.msra.mxu0 0.0
    %3423 = vmatprep.subr.mxu0 0.0
    %3424 = vmatpush1.msra.mxu0 0.0
    %3425 = vmatprep.subr.mxu0 0.0
    %3426 = vmatpush1.msra.mxu0 0.0
    %3427 = vmatprep.subr.mxu0 0.0
    %3428 = vmatpush1.msra.mxu0 0.0
    %3429 = vmatprep.subr.mxu0 0.0
    %3430 = vmatpush1.msra.mxu0 0.0
    %3431 = vmatprep.subr.mxu0 0.0
    %3432 = vmatpush1.msra.mxu0 0.0
    %3433 = vmatprep.subr.mxu0 0.0
    %3434 = vmatpush1.msra.mxu0 0.0
    %3435 = vmatprep.subr.mxu0 0.0
    %3436 = vmatpush1.msra.mxu0 0.0
    %3437 = vmatprep.subr.mxu0 0.0
    %3438 = vmatpush1.msra.mxu0 0.0
    %3439 = vmatprep.subr.mxu0 0.0
    %3440 = vmatpush1.msra.mxu0 0.0
    %3441 = vmatprep.subr.mxu0 0.0
    %3442 = vmatpush1.msra.mxu0 0.0
    %3443 = vmatprep.subr.mxu0 0.0
    %3444 = vmatpush1.msra.mxu0 0.0
    %3445 = vmatprep.mubr.f32.mxu0 0.0
    %3446 = vmatmul.mubr.f32.gmra.mrb[0].mxu0 %v640
    %v3447 = vpop.f32.mrb[0].mxu0
    %v3448 = vadd.f32 0.0, %v3447
    %v3449 = vpop.f32.mrb[0].mxu0
    %3450 = vmatprep.mubr.f32.mxu0 0.0
    %3451 = vmatmul.mubr.f32.gmra.mrb[0].mxu0 %v643
    %v3452 = vpop.f32.mrb[0].mxu0
    %v3453 = vadd.f32 0.0, %v3452
    %v3454 = vpop.f32.mrb[0].mxu0
    %3455 = vmatprep.mubr.f32.mxu0 0.0
    %3456 = vmatmul.mubr.f32.gmra.mrb[0].mxu0 %v646
    %v3457 = vpop.f32.mrb[0].mxu0
    %v3458 = vadd.f32 0.0, %v3457
    %v3459 = vpop.f32.mrb[0].mxu0
    %3460 = vmatprep.mubr.f32.mxu0 0.0
    %3461 = vmatmul.mubr.f32.gmra.mrb[0].mxu0 %v649
    %v3462 = vpop.f32.mrb[0].mxu0
    %v3463 = vadd.f32 0.0, %v3462
    %v3464 = vpop.f32.mrb[0].mxu0
    %3465 = vdwg.mxu0
    %v3466 = vadd.f32 %v3351, %v3448
    %v3467 = vadd.f32 %v3356, %v3453
    %v3468 = vadd.f32 %v3361, %v3458
    %v3469 = vadd.f32 %v3366, %v3463
    %3470 = vmatprep.subr.mxu0 0.0
    %3471 = vmatpush1.msra.mxu0 %v308
    %3472 = vmatprep.subr.mxu0 0.0
    %3473 = vmatpush1.msra.mxu0 %v309
    %3474 = vmatprep.subr.mxu0 0.0
    %3475 = vmatpush1.msra.mxu0 %v310
    %3476 = vmatprep.subr.mxu0 0.0
    %3477 = vmatpush1.msra.mxu0 %v311
    %3478 = vmatprep.subr.mxu0 0.0
    %3479 = vmatpush1.msra.mxu0 0.0
    %3480 = vmatprep.subr.mxu0 0.0
    %3481 = vmatpush1.msra.mxu0 0.0
    %3482 = vmatprep.subr.mxu0 0.0
    %3483 = vmatpush1.msra.mxu0 0.0
    %3484 = vmatprep.subr.mxu0 0.0
    %3485 = vmatpush1.msra.mxu0 0.0
    %3486 = vmatprep.subr.mxu0 0.0
    %3487 = vmatpush1.msra.mxu0 0.0
    %3488 = vmatprep.subr.mxu0 0.0
    %3489 = vmatpush1.msra.mxu0 0.0
    %3490 = vmatprep.subr.mxu0 0.0
    %3491 = vmatpush1.msra.mxu0 0.0
    %3492 = vmatprep.subr.mxu0 0.0
    %3493 = vmatpush1.msra.mxu0 0.0
    %3494 = vmatprep.subr.mxu0 0.0
    %3495 = vmatpush1.msra.mxu0 0.0
    %3496 = vmatprep.subr.mxu0 0.0
    %3497 = vmatpush1.msra.mxu0 0.0
    %3498 = vmatprep.subr.mxu0 0.0
    %3499 = vmatpush1.msra.mxu0 0.0
    %3500 = vmatprep.subr.mxu0 0.0
    %3501 = vmatpush1.msra.mxu0 0.0
    %3502 = vmatprep.subr.mxu0 0.0
    %3503 = vmatpush1.msra.mxu0 0.0
    %3504 = vmatprep.subr.mxu0 0.0
    %3505 = vmatpush1.msra.mxu0 0.0
    %3506 = vmatprep.subr.mxu0 0.0
    %3507 = vmatpush1.msra.mxu0 0.0
    %3508 = vmatprep.subr.mxu0 0.0
    %3509 = vmatpush1.msra.mxu0 0.0
    %3510 = vmatprep.subr.mxu0 0.0
    %3511 = vmatpush1.msra.mxu0 0.0
    %3512 = vmatprep.subr.mxu0 0.0
    %3513 = vmatpush1.msra.mxu0 0.0
    %3514 = vmatprep.subr.mxu0 0.0
    %3515 = vmatpush1.msra.mxu0 0.0
    %3516 = vmatprep.subr.mxu0 0.0
    %3517 = vmatpush1.msra.mxu0 0.0
    %3518 = vmatprep.subr.mxu0 0.0
    %3519 = vmatpush1.msra.mxu0 0.0
    %3520 = vmatprep.subr.mxu0 0.0
    %3521 = vmatpush1.msra.mxu0 0.0
    %3522 = vmatprep.subr.mxu0 0.0
    %3523 = vmatpush1.msra.mxu0 0.0
    %3524 = vmatprep.subr.mxu0 0.0
    %3525 = vmatpush1.msra.mxu0 0.0
    %3526 = vmatprep.subr.mxu0 0.0
    %3527 = vmatpush1.msra.mxu0 0.0
    %3528 = vmatprep.subr.mxu0 0.0
    %3529 = vmatpush1.msra.mxu0 0.0
    %3530 = vmatprep.subr.mxu0 0.0
    %3531 = vmatpush1.msra.mxu0 0.0
    %3532 = vmatprep.subr.mxu0 0.0
    %3533 = vmatpush1.msra.mxu0 0.0
    %3534 = vmatprep.mubr.f32.mxu0 0.0
    %3535 = vmatmul.mubr.f32.gmra.mrb[0].mxu0 %v3090
    %v3536 = vpop.f32.mrb[0].mxu0
    %v3537 = vadd.f32 0.0, %v3536
    %v3538 = vpop.f32.mrb[0].mxu0
    %3539 = vmatprep.mubr.f32.mxu0 0.0
    %3540 = vmatmul.mubr.f32.gmra.mrb[0].mxu0 %v3092
    %v3541 = vpop.f32.mrb[0].mxu0
    %v3542 = vadd.f32 0.0, %v3541
    %v3543 = vpop.f32.mrb[0].mxu0
    %3544 = vmatprep.mubr.f32.mxu0 0.0
    %3545 = vmatmul.mubr.f32.gmra.mrb[0].mxu0 %v3094
    %v3546 = vpop.f32.mrb[0].mxu0
    %v3547 = vadd.f32 0.0, %v3546
    %v3548 = vpop.f32.mrb[0].mxu0
    %3549 = vmatprep.mubr.f32.mxu0 0.0
    %3550 = vmatmul.mubr.f32.gmra.mrb[0].mxu0 %v3096
    %v3551 = vpop.f32.mrb[0].mxu0
    %v3552 = vadd.f32 0.0, %v3551
    %v3553 = vpop.f32.mrb[0].mxu0
    %3554 = vdwg.mxu0
    %v3556 = vsel %vm319, %v3466, 0
    %v3559 = vsel %vm319, %v3467, 0
    %v3562 = vsel %vm319, %v3468, 0
    %v3565 = vsel %vm319, %v3469, 0
    %3567 = vmatprep.subr.mxu0 0.0
    %3568 = vmatpush1.msra.mxu0 %v304
    %3569 = vmatprep.subr.mxu0 0.0
    %3570 = vmatpush1.msra.mxu0 %v305
    %3571 = vmatprep.subr.mxu0 0.0
    %3572 = vmatpush1.msra.mxu0 %v306
    %3573 = vmatprep.subr.mxu0 0.0
    %3574 = vmatpush1.msra.mxu0 %v307
    %3575 = vmatprep.subr.mxu0 0.0
    %3576 = vmatpush1.msra.mxu0 0.0
    %3577 = vmatprep.subr.mxu0 0.0
    %3578 = vmatpush1.msra.mxu0 0.0
    %3579 = vmatprep.subr.mxu0 0.0
    %3580 = vmatpush1.msra.mxu0 0.0
    %3581 = vmatprep.subr.mxu0 0.0
    %3582 = vmatpush1.msra.mxu0 0.0
    %3583 = vmatprep.subr.mxu0 0.0
    %3584 = vmatpush1.msra.mxu0 0.0
    %3585 = vmatprep.subr.mxu0 0.0
    %3586 = vmatpush1.msra.mxu0 0.0
    %3587 = vmatprep.subr.mxu0 0.0
    %3588 = vmatpush1.msra.mxu0 0.0
    %3589 = vmatprep.subr.mxu0 0.0
    %3590 = vmatpush1.msra.mxu0 0.0
    %3591 = vmatprep.subr.mxu0 0.0
    %3592 = vmatpush1.msra.mxu0 0.0
    %3593 = vmatprep.subr.mxu0 0.0
    %3594 = vmatpush1.msra.mxu0 0.0
    %3595 = vmatprep.subr.mxu0 0.0
    %3596 = vmatpush1.msra.mxu0 0.0
    %3597 = vmatprep.subr.mxu0 0.0
    %3598 = vmatpush1.msra.mxu0 0.0
    %3599 = vmatprep.subr.mxu0 0.0
    %3600 = vmatpush1.msra.mxu0 0.0
    %3601 = vmatprep.subr.mxu0 0.0
    %3602 = vmatpush1.msra.mxu0 0.0
    %3603 = vmatprep.subr.mxu0 0.0
    %3604 = vmatpush1.msra.mxu0 0.0
    %3605 = vmatprep.subr.mxu0 0.0
    %3606 = vmatpush1.msra.mxu0 0.0
    %3607 = vmatprep.subr.mxu0 0.0
    %3608 = vmatpush1.msra.mxu0 0.0
    %3609 = vmatprep.subr.mxu0 0.0
    %3610 = vmatpush1.msra.mxu0 0.0
    %3611 = vmatprep.subr.mxu0 0.0
    %3612 = vmatpush1.msra.mxu0 0.0
    %3613 = vmatprep.subr.mxu0 0.0
    %3614 = vmatpush1.msra.mxu0 0.0
    %3615 = vmatprep.subr.mxu0 0.0
    %3616 = vmatpush1.msra.mxu0 0.0
    %3617 = vmatprep.subr.mxu0 0.0
    %3618 = vmatpush1.msra.mxu0 0.0
    %3619 = vmatprep.subr.mxu0 0.0
    %3620 = vmatpush1.msra.mxu0 0.0
    %3621 = vmatprep.subr.mxu0 0.0
    %3622 = vmatpush1.msra.mxu0 0.0
    %3623 = vmatprep.subr.mxu0 0.0
    %3624 = vmatpush1.msra.mxu0 0.0
    %3625 = vmatprep.subr.mxu0 0.0
    %3626 = vmatpush1.msra.mxu0 0.0
    %3627 = vmatprep.subr.mxu0 0.0
    %3628 = vmatpush1.msra.mxu0 0.0
    %3629 = vmatprep.subr.mxu0 0.0
    %3630 = vmatpush1.msra.mxu0 0.0
    %3631 = vmatprep.mubr.f32.mxu0 0.0
    %3632 = vmatmul.mubr.f32.gmra.mrb[0].mxu0 %v3556
    %v3633 = vpop.f32.mrb[0].mxu0
    %v3634 = vadd.f32 %v3537, %v3633
    %v3635 = vpop.f32.mrb[0].mxu0
    %3636 = vmatprep.mubr.f32.mxu0 0.0
    %3637 = vmatmul.mubr.f32.gmra.mrb[0].mxu0 %v3559
    %v3638 = vpop.f32.mrb[0].mxu0
    %v3639 = vadd.f32 %v3542, %v3638
    %v3640 = vpop.f32.mrb[0].mxu0
    %3641 = vmatprep.mubr.f32.mxu0 0.0
    %3642 = vmatmul.mubr.f32.gmra.mrb[0].mxu0 %v3562
    %v3643 = vpop.f32.mrb[0].mxu0
    %v3644 = vadd.f32 %v3547, %v3643
    %v3645 = vpop.f32.mrb[0].mxu0
    %3646 = vmatprep.mubr.f32.mxu0 0.0
    %3647 = vmatmul.mubr.f32.gmra.mrb[0].mxu0 %v3565
    %v3648 = vpop.f32.mrb[0].mxu0
    %v3649 = vadd.f32 %v3552, %v3648
    %v3650 = vpop.f32.mrb[0].mxu0
    %3651 = vdwg.mxu0
    %v3652 = vadd.f32 %v3634, %v926
    %v3653 = vadd.f32 %v3639, %v926
    %v3654 = vadd.f32 %v3644, %v926
    %v3655 = vadd.f32 %v3649, %v926
    %v3656 = vxor.u32 %v3652, 2147483648
    %v3657 = vxor.u32 %v3653, 2147483648
    %v3658 = vxor.u32 %v3654, 2147483648
    %v3659 = vxor.u32 %v3655, 2147483648
    %v3660 = vmul.f32 %v3656, 1.442695
    %v3661 = vpow.pop %v3660
    %v3662 = vmul.f32 %v3657, 1.442695
    %v3663 = vpow.pop %v3662
    %v3664 = vmul.f32 %v3658, 1.442695
    %v3665 = vpow.pop %v3664
    %v3666 = vmul.f32 %v3659, 1.442695
    %v3667 = vpow.pop %v3666
    %v3668 = vadd.f32 %v3661, 1.0
    %v3669 = vadd.f32 %v3663, 1.0
    %v3670 = vadd.f32 %v3665, 1.0
    %v3671 = vadd.f32 %v3667, 1.0
    %v3672 = vrcp.pop %v3668
    %v3673 = vmul.f32 1.0, %v3672
    %v3674 = vrcp.pop %v3669
    %v3675 = vmul.f32 1.0, %v3674
    %v3676 = vrcp.pop %v3670
    %v3677 = vmul.f32 1.0, %v3676
    %v3678 = vrcp.pop %v3671
    %v3679 = vmul.f32 1.0, %v3678
    %3684 = vrot.lane.b32.xlu0 %v3652, 32
    %v3685 = vpop.permute.xlu0 %3684
    %3686 = vrot.lane.b32.xlu0 %v3653, 32
    %v3687 = vpop.permute.xlu0 %3686
    %3688 = vrot.lane.b32.xlu0 %v3654, 32
    %v3689 = vpop.permute.xlu0 %3688
    %3690 = vrot.lane.b32.xlu0 %v3655, 32
    %v3691 = vpop.permute.xlu0 %3690
    %v3696 = vmul.f32 %v3673, %v3685
    %v3697 = vmul.f32 %v3675, %v3687
    %v3698 = vmul.f32 %v3677, %v3689
    %v3699 = vmul.f32 %v3679, %v3691
    %3704 = vrot.lane.b32.xlu0 %v3696, 64
    %v3705 = vpop.permute.xlu0 %3704
    %3706 = vrot.lane.b32.xlu0 %v3697, 64
    %v3707 = vpop.permute.xlu0 %3706
    %3708 = vrot.lane.b32.xlu0 %v3698, 64
    %v3709 = vpop.permute.xlu0 %3708
    %3710 = vrot.lane.b32.xlu0 %v3699, 64
    %v3711 = vpop.permute.xlu0 %3710
    %v3716 = vadd.f32 %v3652, %v3705
    %v3717 = vadd.f32 %v3653, %v3707
    %v3718 = vadd.f32 %v3654, %v3709
    %v3719 = vadd.f32 %v3655, %v3711
    %v3720 = vtanh.pop %v3716
    %v3721 = vtanh.pop %v3717
    %v3722 = vtanh.pop %v3718
    %v3723 = vtanh.pop %v3719
    %v3724 = vsub.f32 1.0, %v3673
    %v3725 = vsub.f32 1.0, %v3675
    %v3726 = vsub.f32 1.0, %v3677
    %v3727 = vsub.f32 1.0, %v3679
    %3732 = vrot.lane.b32.xlu0 %v3720, 96
    %v3733 = vpop.permute.xlu0 %3732
    %3734 = vrot.lane.b32.xlu0 %v3721, 96
    %v3735 = vpop.permute.xlu0 %3734
    %3736 = vrot.lane.b32.xlu0 %v3722, 96
    %v3737 = vpop.permute.xlu0 %3736
    %3738 = vrot.lane.b32.xlu0 %v3723, 96
    %v3739 = vpop.permute.xlu0 %3738
    %v3744 = vmul.f32 %v3724, %v3733
    %v3745 = vmul.f32 %v3725, %v3735
    %v3746 = vmul.f32 %v3726, %v3737
    %v3747 = vmul.f32 %v3727, %v3739
    %v3748 = vmul.f32 %v3673, %v3074
    %v3749 = vmul.f32 %v3675, %v3075
    %v3750 = vmul.f32 %v3677, %v3076
    %v3751 = vmul.f32 %v3679, %v3077
    %v3752 = vadd.f32 %v3744, %v3748
    %v3753 = vadd.f32 %v3745, %v3749
    %v3754 = vadd.f32 %v3746, %v3750
    %v3755 = vadd.f32 %v3747, %v3751
    %3760 = vrot.lane.b32.xlu0 %v3752, 96
    %v3761 = vpop.permute.xlu0 %3760
    %3762 = vrot.lane.b32.xlu0 %v3753, 96
    %v3763 = vpop.permute.xlu0 %3762
    %3764 = vrot.lane.b32.xlu0 %v3754, 96
    %v3765 = vpop.permute.xlu0 %3764
    %3766 = vrot.lane.b32.xlu0 %v3755, 96
    %v3767 = vpop.permute.xlu0 %3766
    %v3768 = vsel %vm319, %v3761, 0
    %v3770 = vsel %vm319, %v3763, 0
    %v3772 = vsel %vm319, %v3765, 0
    %v3774 = vsel %vm319, %v3767, 0
    %3776 = vmatprep.subr.mxu0 0.0
    %3777 = vmatpush1.msra.mxu0 %v299
    %3778 = vmatprep.subr.mxu0 0.0
    %3779 = vmatpush1.msra.mxu0 %v300
    %3780 = vmatprep.subr.mxu0 0.0
    %3781 = vmatpush1.msra.mxu0 %v301
    %3782 = vmatprep.subr.mxu0 0.0
    %3783 = vmatpush1.msra.mxu0 %v302
    %3784 = vmatprep.subr.mxu0 0.0
    %3785 = vmatpush1.msra.mxu0 0.0
    %3786 = vmatprep.subr.mxu0 0.0
    %3787 = vmatpush1.msra.mxu0 0.0
    %3788 = vmatprep.subr.mxu0 0.0
    %3789 = vmatpush1.msra.mxu0 0.0
    %3790 = vmatprep.subr.mxu0 0.0
    %3791 = vmatpush1.msra.mxu0 0.0
    %3792 = vmatprep.subr.mxu0 0.0
    %3793 = vmatpush1.msra.mxu0 0.0
    %3794 = vmatprep.subr.mxu0 0.0
    %3795 = vmatpush1.msra.mxu0 0.0
    %3796 = vmatprep.subr.mxu0 0.0
    %3797 = vmatpush1.msra.mxu0 0.0
    %3798 = vmatprep.subr.mxu0 0.0
    %3799 = vmatpush1.msra.mxu0 0.0
    %3800 = vmatprep.subr.mxu0 0.0
    %3801 = vmatpush1.msra.mxu0 0.0
    %3802 = vmatprep.subr.mxu0 0.0
    %3803 = vmatpush1.msra.mxu0 0.0
    %3804 = vmatprep.subr.mxu0 0.0
    %3805 = vmatpush1.msra.mxu0 0.0
    %3806 = vmatprep.subr.mxu0 0.0
    %3807 = vmatpush1.msra.mxu0 0.0
    %3808 = vmatprep.subr.mxu0 0.0
    %3809 = vmatpush1.msra.mxu0 0.0
    %3810 = vmatprep.subr.mxu0 0.0
    %3811 = vmatpush1.msra.mxu0 0.0
    %3812 = vmatprep.subr.mxu0 0.0
    %3813 = vmatpush1.msra.mxu0 0.0
    %3814 = vmatprep.subr.mxu0 0.0
    %3815 = vmatpush1.msra.mxu0 0.0
    %3816 = vmatprep.subr.mxu0 0.0
    %3817 = vmatpush1.msra.mxu0 0.0
    %3818 = vmatprep.subr.mxu0 0.0
    %3819 = vmatpush1.msra.mxu0 0.0
    %3820 = vmatprep.subr.mxu0 0.0
    %3821 = vmatpush1.msra.mxu0 0.0
    %3822 = vmatprep.subr.mxu0 0.0
    %3823 = vmatpush1.msra.mxu0 0.0
    %3824 = vmatprep.subr.mxu0 0.0
    %3825 = vmatpush1.msra.mxu0 0.0
    %3826 = vmatprep.subr.mxu0 0.0
    %3827 = vmatpush1.msra.mxu0 0.0
    %3828 = vmatprep.subr.mxu0 0.0
    %3829 = vmatpush1.msra.mxu0 0.0
    %3830 = vmatprep.subr.mxu0 0.0
    %3831 = vmatpush1.msra.mxu0 0.0
    %3832 = vmatprep.subr.mxu0 0.0
    %3833 = vmatpush1.msra.mxu0 0.0
    %3834 = vmatprep.subr.mxu0 0.0
    %3835 = vmatpush1.msra.mxu0 0.0
    %3836 = vmatprep.subr.mxu0 0.0
    %3837 = vmatpush1.msra.mxu0 0.0
    %3838 = vmatprep.subr.mxu0 0.0
    %3839 = vmatpush1.msra.mxu0 0.0
    %3840 = vmatprep.mubr.f32.mxu0 0.0
    %3841 = vmatmul.mubr.f32.gmra.mrb[0].mxu0 %v3768
    %v3842 = vpop.f32.mrb[0].mxu0
    %v3843 = vadd.f32 %v317, %v3842
    %v3844 = vpop.f32.mrb[0].mxu0
    %3845 = vmatprep.mubr.f32.mxu0 0.0
    %3846 = vmatmul.mubr.f32.gmra.mrb[0].mxu0 %v3770
    %v3847 = vpop.f32.mrb[0].mxu0
    %v3848 = vadd.f32 %v317, %v3847
    %v3849 = vpop.f32.mrb[0].mxu0
    %3850 = vmatprep.mubr.f32.mxu0 0.0
    %3851 = vmatmul.mubr.f32.gmra.mrb[0].mxu0 %v3772
    %v3852 = vpop.f32.mrb[0].mxu0
    %v3853 = vadd.f32 %v317, %v3852
    %v3854 = vpop.f32.mrb[0].mxu0
    %3855 = vmatprep.mubr.f32.mxu0 0.0
    %3856 = vmatmul.mubr.f32.gmra.mrb[0].mxu0 %v3774
    %v3857 = vpop.f32.mrb[0].mxu0
    %v3858 = vadd.f32 %v317, %v3857
    %v3859 = vpop.f32.mrb[0].mxu0
    %3860 = vdwg.mxu0
    %3865 = vrot.lane.b32.xlu0 %v3843, 96
    %v3866 = vpop.permute.xlu0 %3865
    %3867 = vrot.lane.b32.xlu0 %v3848, 96
    %v3868 = vpop.permute.xlu0 %3867
    %3869 = vrot.lane.b32.xlu0 %v3853, 96
    %v3870 = vpop.permute.xlu0 %3869
    %3871 = vrot.lane.b32.xlu0 %v3858, 96
    %v3872 = vpop.permute.xlu0 %3871
    %3877 = vmatprep.subr.mxu0 0.0
    %3878 = vmatpush1.msra.mxu0 %v3866
    %3879 = vmatprep.subr.mxu0 0.0
    %3880 = vmatpush1.msra.mxu0 %v3868
    %3881 = vmatprep.subr.mxu0 0.0
    %3882 = vmatpush1.msra.mxu0 %v3870
    %3883 = vmatprep.subr.mxu0 0.0
    %3884 = vmatpush1.msra.mxu0 %v3872
    %3885 = vmatprep.subr.mxu0 0.0
    %3886 = vmatpush1.msra.mxu0 0.0
    %3887 = vmatprep.subr.mxu0 0.0
    %3888 = vmatpush1.msra.mxu0 0.0
    %3889 = vmatprep.subr.mxu0 0.0
    %3890 = vmatpush1.msra.mxu0 0.0
    %3891 = vmatprep.subr.mxu0 0.0
    %3892 = vmatpush1.msra.mxu0 0.0
    %3893 = vmatprep.subr.mxu0 0.0
    %3894 = vmatpush1.msra.mxu0 0.0
    %3895 = vmatprep.subr.mxu0 0.0
    %3896 = vmatpush1.msra.mxu0 0.0
    %3897 = vmatprep.subr.mxu0 0.0
    %3898 = vmatpush1.msra.mxu0 0.0
    %3899 = vmatprep.subr.mxu0 0.0
    %3900 = vmatpush1.msra.mxu0 0.0
    %3901 = vmatprep.subr.mxu0 0.0
    %3902 = vmatpush1.msra.mxu0 0.0
    %3903 = vmatprep.subr.mxu0 0.0
    %3904 = vmatpush1.msra.mxu0 0.0
    %3905 = vmatprep.subr.mxu0 0.0
    %3906 = vmatpush1.msra.mxu0 0.0
    %3907 = vmatprep.subr.mxu0 0.0
    %3908 = vmatpush1.msra.mxu0 0.0
    %3909 = vmatprep.subr.mxu0 0.0
    %3910 = vmatpush1.msra.mxu0 0.0
    %3911 = vmatprep.subr.mxu0 0.0
    %3912 = vmatpush1.msra.mxu0 0.0
    %3913 = vmatprep.subr.mxu0 0.0
    %3914 = vmatpush1.msra.mxu0 0.0
    %3915 = vmatprep.subr.mxu0 0.0
    %3916 = vmatpush1.msra.mxu0 0.0
    %3917 = vmatprep.subr.mxu0 0.0
    %3918 = vmatpush1.msra.mxu0 0.0
    %3919 = vmatprep.subr.mxu0 0.0
    %3920 = vmatpush1.msra.mxu0 0.0
    %3921 = vmatprep.subr.mxu0 0.0
    %3922 = vmatpush1.msra.mxu0 0.0
    %3923 = vmatprep.subr.mxu0 0.0
    %3924 = vmatpush1.msra.mxu0 0.0
    %3925 = vmatprep.subr.mxu0 0.0
    %3926 = vmatpush1.msra.mxu0 0.0
    %3927 = vmatprep.subr.mxu0 0.0
    %3928 = vmatpush1.msra.mxu0 0.0
    %3929 = vmatprep.subr.mxu0 0.0
    %3930 = vmatpush1.msra.mxu0 0.0
    %3931 = vmatprep.subr.mxu0 0.0
    %3932 = vmatpush1.msra.mxu0 0.0
    %3933 = vmatprep.subr.mxu0 0.0
    %3934 = vmatpush1.msra.mxu0 0.0
    %3935 = vmatprep.subr.mxu0 0.0
    %3936 = vmatpush1.msra.mxu0 0.0
    %3937 = vmatprep.subr.mxu0 0.0
    %3938 = vmatpush1.msra.mxu0 0.0
    %3939 = vmatprep.subr.mxu0 0.0
    %3940 = vmatpush1.msra.mxu0 0.0
    %3941 = vmatprep.mubr.f32.mxu0 0.0
    %3942 = vmatmul.mubr.f32.gmra.mrb[0].mxu0 %v434
    %v3943 = vpop.f32.mrb[0].mxu0
    %v3944 = vadd.f32 0.0, %v3943
    %v3945 = vpop.f32.mrb[0].mxu0
    %3946 = vmatprep.mubr.f32.mxu0 0.0
    %3947 = vmatmul.mubr.f32.gmra.mrb[0].mxu0 %v437
    %v3948 = vpop.f32.mrb[0].mxu0
    %v3949 = vadd.f32 0.0, %v3948
    %v3950 = vpop.f32.mrb[0].mxu0
    %3951 = vmatprep.mubr.f32.mxu0 0.0
    %3952 = vmatmul.mubr.f32.gmra.mrb[0].mxu0 %v440
    %v3953 = vpop.f32.mrb[0].mxu0
    %v3954 = vadd.f32 0.0, %v3953
    %v3955 = vpop.f32.mrb[0].mxu0
    %3956 = vmatprep.mubr.f32.mxu0 0.0
    %3957 = vmatmul.mubr.f32.gmra.mrb[0].mxu0 %v443
    %v3958 = vpop.f32.mrb[0].mxu0
    %v3959 = vadd.f32 0.0, %v3958
    %v3960 = vpop.f32.mrb[0].mxu0
    %3961 = vdwg.mxu0
    %3962 = vmatprep.subr.mxu0 0.0
    %3963 = vmatpush1.msra.mxu0 %v3843
    %3964 = vmatprep.subr.mxu0 0.0
    %3965 = vmatpush1.msra.mxu0 %v3848
    %3966 = vmatprep.subr.mxu0 0.0
    %3967 = vmatpush1.msra.mxu0 %v3853
    %3968 = vmatprep.subr.mxu0 0.0
    %3969 = vmatpush1.msra.mxu0 %v3858
    %3970 = vmatprep.subr.mxu0 0.0
    %3971 = vmatpush1.msra.mxu0 0.0
    %3972 = vmatprep.subr.mxu0 0.0
    %3973 = vmatpush1.msra.mxu0 0.0
    %3974 = vmatprep.subr.mxu0 0.0
    %3975 = vmatpush1.msra.mxu0 0.0
    %3976 = vmatprep.subr.mxu0 0.0
    %3977 = vmatpush1.msra.mxu0 0.0
    %3978 = vmatprep.subr.mxu0 0.0
    %3979 = vmatpush1.msra.mxu0 0.0
    %3980 = vmatprep.subr.mxu0 0.0
    %3981 = vmatpush1.msra.mxu0 0.0
    %3982 = vmatprep.subr.mxu0 0.0
    %3983 = vmatpush1.msra.mxu0 0.0
    %3984 = vmatprep.subr.mxu0 0.0
    %3985 = vmatpush1.msra.mxu0 0.0
    %3986 = vmatprep.subr.mxu0 0.0
    %3987 = vmatpush1.msra.mxu0 0.0
    %3988 = vmatprep.subr.mxu0 0.0
    %3989 = vmatpush1.msra.mxu0 0.0
    %3990 = vmatprep.subr.mxu0 0.0
    %3991 = vmatpush1.msra.mxu0 0.0
    %3992 = vmatprep.subr.mxu0 0.0
    %3993 = vmatpush1.msra.mxu0 0.0
    %3994 = vmatprep.subr.mxu0 0.0
    %3995 = vmatpush1.msra.mxu0 0.0
    %3996 = vmatprep.subr.mxu0 0.0
    %3997 = vmatpush1.msra.mxu0 0.0
    %3998 = vmatprep.subr.mxu0 0.0
    %3999 = vmatpush1.msra.mxu0 0.0
    %4000 = vmatprep.subr.mxu0 0.0
    %4001 = vmatpush1.msra.mxu0 0.0
    %4002 = vmatprep.subr.mxu0 0.0
    %4003 = vmatpush1.msra.mxu0 0.0
    %4004 = vmatprep.subr.mxu0 0.0
    %4005 = vmatpush1.msra.mxu0 0.0
    %4006 = vmatprep.subr.mxu0 0.0
    %4007 = vmatpush1.msra.mxu0 0.0
    %4008 = vmatprep.subr.mxu0 0.0
    %4009 = vmatpush1.msra.mxu0 0.0
    %4010 = vmatprep.subr.mxu0 0.0
    %4011 = vmatpush1.msra.mxu0 0.0
    %4012 = vmatprep.subr.mxu0 0.0
    %4013 = vmatpush1.msra.mxu0 0.0
    %4014 = vmatprep.subr.mxu0 0.0
    %4015 = vmatpush1.msra.mxu0 0.0
    %4016 = vmatprep.subr.mxu0 0.0
    %4017 = vmatpush1.msra.mxu0 0.0
    %4018 = vmatprep.subr.mxu0 0.0
    %4019 = vmatpush1.msra.mxu0 0.0
    %4020 = vmatprep.subr.mxu0 0.0
    %4021 = vmatpush1.msra.mxu0 0.0
    %4022 = vmatprep.subr.mxu0 0.0
    %4023 = vmatpush1.msra.mxu0 0.0
    %4024 = vmatprep.subr.mxu0 0.0
    %4025 = vmatpush1.msra.mxu0 0.0
    %4026 = vmatprep.mubr.f32.mxu0 0.0
    %4027 = vmatmul.mubr.f32.gmra.mrb[0].mxu0 %v531
    %v4028 = vpop.f32.mrb[0].mxu0
    %v4029 = vadd.f32 %v3944, %v4028
    %v4030 = vpop.f32.mrb[0].mxu0
    %4031 = vmatprep.mubr.f32.mxu0 0.0
    %4032 = vmatmul.mubr.f32.gmra.mrb[0].mxu0 %v534
    %v4033 = vpop.f32.mrb[0].mxu0
    %v4034 = vadd.f32 %v3949, %v4033
    %v4035 = vpop.f32.mrb[0].mxu0
    %4036 = vmatprep.mubr.f32.mxu0 0.0
    %4037 = vmatmul.mubr.f32.gmra.mrb[0].mxu0 %v537
    %v4038 = vpop.f32.mrb[0].mxu0
    %v4039 = vadd.f32 %v3954, %v4038
    %v4040 = vpop.f32.mrb[0].mxu0
    %4041 = vmatprep.mubr.f32.mxu0 0.0
    %4042 = vmatmul.mubr.f32.gmra.mrb[0].mxu0 %v540
    %v4043 = vpop.f32.mrb[0].mxu0
    %v4044 = vadd.f32 %v3959, %v4043
    %v4045 = vpop.f32.mrb[0].mxu0
    %4046 = vdwg.mxu0
    %4047 = vrot.lane.b32.xlu0 %v3843, 64
    %v4048 = vpop.permute.xlu0 %4047
    %4049 = vrot.lane.b32.xlu0 %v3848, 64
    %v4050 = vpop.permute.xlu0 %4049
    %4051 = vrot.lane.b32.xlu0 %v3853, 64
    %v4052 = vpop.permute.xlu0 %4051
    %4053 = vrot.lane.b32.xlu0 %v3858, 64
    %v4054 = vpop.permute.xlu0 %4053
    %4059 = vmatprep.subr.mxu0 0.0
    %4060 = vmatpush1.msra.mxu0 %v4048
    %4061 = vmatprep.subr.mxu0 0.0
    %4062 = vmatpush1.msra.mxu0 %v4050
    %4063 = vmatprep.subr.mxu0 0.0
    %4064 = vmatpush1.msra.mxu0 %v4052
    %4065 = vmatprep.subr.mxu0 0.0
    %4066 = vmatpush1.msra.mxu0 %v4054
    %4067 = vmatprep.subr.mxu0 0.0
    %4068 = vmatpush1.msra.mxu0 0.0
    %4069 = vmatprep.subr.mxu0 0.0
    %4070 = vmatpush1.msra.mxu0 0.0
    %4071 = vmatprep.subr.mxu0 0.0
    %4072 = vmatpush1.msra.mxu0 0.0
    %4073 = vmatprep.subr.mxu0 0.0
    %4074 = vmatpush1.msra.mxu0 0.0
    %4075 = vmatprep.subr.mxu0 0.0
    %4076 = vmatpush1.msra.mxu0 0.0
    %4077 = vmatprep.subr.mxu0 0.0
    %4078 = vmatpush1.msra.mxu0 0.0
    %4079 = vmatprep.subr.mxu0 0.0
    %4080 = vmatpush1.msra.mxu0 0.0
    %4081 = vmatprep.subr.mxu0 0.0
    %4082 = vmatpush1.msra.mxu0 0.0
    %4083 = vmatprep.subr.mxu0 0.0
    %4084 = vmatpush1.msra.mxu0 0.0
    %4085 = vmatprep.subr.mxu0 0.0
    %4086 = vmatpush1.msra.mxu0 0.0
    %4087 = vmatprep.subr.mxu0 0.0
    %4088 = vmatpush1.msra.mxu0 0.0
    %4089 = vmatprep.subr.mxu0 0.0
    %4090 = vmatpush1.msra.mxu0 0.0
    %4091 = vmatprep.subr.mxu0 0.0
    %4092 = vmatpush1.msra.mxu0 0.0
    %4093 = vmatprep.subr.mxu0 0.0
    %4094 = vmatpush1.msra.mxu0 0.0
    %4095 = vmatprep.subr.mxu0 0.0
    %4096 = vmatpush1.msra.mxu0 0.0
    %4097 = vmatprep.subr.mxu0 0.0
    %4098 = vmatpush1.msra.mxu0 0.0
    %4099 = vmatprep.subr.mxu0 0.0
    %4100 = vmatpush1.msra.mxu0 0.0
    %4101 = vmatprep.subr.mxu0 0.0
    %4102 = vmatpush1.msra.mxu0 0.0
    %4103 = vmatprep.subr.mxu0 0.0
    %4104 = vmatpush1.msra.mxu0 0.0
    %4105 = vmatprep.subr.mxu0 0.0
    %4106 = vmatpush1.msra.mxu0 0.0
    %4107 = vmatprep.subr.mxu0 0.0
    %4108 = vmatpush1.msra.mxu0 0.0
    %4109 = vmatprep.subr.mxu0 0.0
    %4110 = vmatpush1.msra.mxu0 0.0
    %4111 = vmatprep.subr.mxu0 0.0
    %4112 = vmatpush1.msra.mxu0 0.0
    %4113 = vmatprep.subr.mxu0 0.0
    %4114 = vmatpush1.msra.mxu0 0.0
    %4115 = vmatprep.subr.mxu0 0.0
    %4116 = vmatpush1.msra.mxu0 0.0
    %4117 = vmatprep.subr.mxu0 0.0
    %4118 = vmatpush1.msra.mxu0 0.0
    %4119 = vmatprep.subr.mxu0 0.0
    %4120 = vmatpush1.msra.mxu0 0.0
    %4121 = vmatprep.subr.mxu0 0.0
    %4122 = vmatpush1.msra.mxu0 0.0
    %4123 = vmatprep.mubr.f32.mxu0 0.0
    %4124 = vmatmul.mubr.f32.gmra.mrb[0].mxu0 %v640
    %v4125 = vpop.f32.mrb[0].mxu0
    %v4126 = vadd.f32 0.0, %v4125
    %v4127 = vpop.f32.mrb[0].mxu0
    %4128 = vmatprep.mubr.f32.mxu0 0.0
    %4129 = vmatmul.mubr.f32.gmra.mrb[0].mxu0 %v643
    %v4130 = vpop.f32.mrb[0].mxu0
    %v4131 = vadd.f32 0.0, %v4130
    %v4132 = vpop.f32.mrb[0].mxu0
    %4133 = vmatprep.mubr.f32.mxu0 0.0
    %4134 = vmatmul.mubr.f32.gmra.mrb[0].mxu0 %v646
    %v4135 = vpop.f32.mrb[0].mxu0
    %v4136 = vadd.f32 0.0, %v4135
    %v4137 = vpop.f32.mrb[0].mxu0
    %4138 = vmatprep.mubr.f32.mxu0 0.0
    %4139 = vmatmul.mubr.f32.gmra.mrb[0].mxu0 %v649
    %v4140 = vpop.f32.mrb[0].mxu0
    %v4141 = vadd.f32 0.0, %v4140
    %v4142 = vpop.f32.mrb[0].mxu0
    %4143 = vdwg.mxu0
    %v4144 = vadd.f32 %v4029, %v4126
    %v4145 = vadd.f32 %v4034, %v4131
    %v4146 = vadd.f32 %v4039, %v4136
    %v4147 = vadd.f32 %v4044, %v4141
    %4148 = vmatprep.subr.mxu0 0.0
    %4149 = vmatpush1.msra.mxu0 %v308
    %4150 = vmatprep.subr.mxu0 0.0
    %4151 = vmatpush1.msra.mxu0 %v309
    %4152 = vmatprep.subr.mxu0 0.0
    %4153 = vmatpush1.msra.mxu0 %v310
    %4154 = vmatprep.subr.mxu0 0.0
    %4155 = vmatpush1.msra.mxu0 %v311
    %4156 = vmatprep.subr.mxu0 0.0
    %4157 = vmatpush1.msra.mxu0 0.0
    %4158 = vmatprep.subr.mxu0 0.0
    %4159 = vmatpush1.msra.mxu0 0.0
    %4160 = vmatprep.subr.mxu0 0.0
    %4161 = vmatpush1.msra.mxu0 0.0
    %4162 = vmatprep.subr.mxu0 0.0
    %4163 = vmatpush1.msra.mxu0 0.0
    %4164 = vmatprep.subr.mxu0 0.0
    %4165 = vmatpush1.msra.mxu0 0.0
    %4166 = vmatprep.subr.mxu0 0.0
    %4167 = vmatpush1.msra.mxu0 0.0
    %4168 = vmatprep.subr.mxu0 0.0
    %4169 = vmatpush1.msra.mxu0 0.0
    %4170 = vmatprep.subr.mxu0 0.0
    %4171 = vmatpush1.msra.mxu0 0.0
    %4172 = vmatprep.subr.mxu0 0.0
    %4173 = vmatpush1.msra.mxu0 0.0
    %4174 = vmatprep.subr.mxu0 0.0
    %4175 = vmatpush1.msra.mxu0 0.0
    %4176 = vmatprep.subr.mxu0 0.0
    %4177 = vmatpush1.msra.mxu0 0.0
    %4178 = vmatprep.subr.mxu0 0.0
    %4179 = vmatpush1.msra.mxu0 0.0
    %4180 = vmatprep.subr.mxu0 0.0
    %4181 = vmatpush1.msra.mxu0 0.0
    %4182 = vmatprep.subr.mxu0 0.0
    %4183 = vmatpush1.msra.mxu0 0.0
    %4184 = vmatprep.subr.mxu0 0.0
    %4185 = vmatpush1.msra.mxu0 0.0
    %4186 = vmatprep.subr.mxu0 0.0
    %4187 = vmatpush1.msra.mxu0 0.0
    %4188 = vmatprep.subr.mxu0 0.0
    %4189 = vmatpush1.msra.mxu0 0.0
    %4190 = vmatprep.subr.mxu0 0.0
    %4191 = vmatpush1.msra.mxu0 0.0
    %4192 = vmatprep.subr.mxu0 0.0
    %4193 = vmatpush1.msra.mxu0 0.0
    %4194 = vmatprep.subr.mxu0 0.0
    %4195 = vmatpush1.msra.mxu0 0.0
    %4196 = vmatprep.subr.mxu0 0.0
    %4197 = vmatpush1.msra.mxu0 0.0
    %4198 = vmatprep.subr.mxu0 0.0
    %4199 = vmatpush1.msra.mxu0 0.0
    %4200 = vmatprep.subr.mxu0 0.0
    %4201 = vmatpush1.msra.mxu0 0.0
    %4202 = vmatprep.subr.mxu0 0.0
    %4203 = vmatpush1.msra.mxu0 0.0
    %4204 = vmatprep.subr.mxu0 0.0
    %4205 = vmatpush1.msra.mxu0 0.0
    %4206 = vmatprep.subr.mxu0 0.0
    %4207 = vmatpush1.msra.mxu0 0.0
    %4208 = vmatprep.subr.mxu0 0.0
    %4209 = vmatpush1.msra.mxu0 0.0
    %4210 = vmatprep.subr.mxu0 0.0
    %4211 = vmatpush1.msra.mxu0 0.0
    %4212 = vmatprep.mubr.f32.mxu0 0.0
    %4213 = vmatmul.mubr.f32.gmra.mrb[0].mxu0 %v3768
    %v4214 = vpop.f32.mrb[0].mxu0
    %v4215 = vadd.f32 0.0, %v4214
    %v4216 = vpop.f32.mrb[0].mxu0
    %4217 = vmatprep.mubr.f32.mxu0 0.0
    %4218 = vmatmul.mubr.f32.gmra.mrb[0].mxu0 %v3770
    %v4219 = vpop.f32.mrb[0].mxu0
    %v4220 = vadd.f32 0.0, %v4219
    %v4221 = vpop.f32.mrb[0].mxu0
    %4222 = vmatprep.mubr.f32.mxu0 0.0
    %4223 = vmatmul.mubr.f32.gmra.mrb[0].mxu0 %v3772
    %v4224 = vpop.f32.mrb[0].mxu0
    %v4225 = vadd.f32 0.0, %v4224
    %v4226 = vpop.f32.mrb[0].mxu0
    %4227 = vmatprep.mubr.f32.mxu0 0.0
    %4228 = vmatmul.mubr.f32.gmra.mrb[0].mxu0 %v3774
    %v4229 = vpop.f32.mrb[0].mxu0
    %v4230 = vadd.f32 0.0, %v4229
    %v4231 = vpop.f32.mrb[0].mxu0
    %4232 = vdwg.mxu0
    %v4234 = vsel %vm319, %v4144, 0
    %v4237 = vsel %vm319, %v4145, 0
    %v4240 = vsel %vm319, %v4146, 0
    %v4243 = vsel %vm319, %v4147, 0
    %4245 = vmatprep.subr.mxu0 0.0
    %4246 = vmatpush1.msra.mxu0 %v304
    %4247 = vmatprep.subr.mxu0 0.0
    %4248 = vmatpush1.msra.mxu0 %v305
    %4249 = vmatprep.subr.mxu0 0.0
    %4250 = vmatpush1.msra.mxu0 %v306
    %4251 = vmatprep.subr.mxu0 0.0
    %4252 = vmatpush1.msra.mxu0 %v307
    %4253 = vmatprep.subr.mxu0 0.0
    %4254 = vmatpush1.msra.mxu0 0.0
    %4255 = vmatprep.subr.mxu0 0.0
    %4256 = vmatpush1.msra.mxu0 0.0
    %4257 = vmatprep.subr.mxu0 0.0
    %4258 = vmatpush1.msra.mxu0 0.0
    %4259 = vmatprep.subr.mxu0 0.0
    %4260 = vmatpush1.msra.mxu0 0.0
    %4261 = vmatprep.subr.mxu0 0.0
    %4262 = vmatpush1.msra.mxu0 0.0
    %4263 = vmatprep.subr.mxu0 0.0
    %4264 = vmatpush1.msra.mxu0 0.0
    %4265 = vmatprep.subr.mxu0 0.0
    %4266 = vmatpush1.msra.mxu0 0.0
    %4267 = vmatprep.subr.mxu0 0.0
    %4268 = vmatpush1.msra.mxu0 0.0
    %4269 = vmatprep.subr.mxu0 0.0
    %4270 = vmatpush1.msra.mxu0 0.0
    %4271 = vmatprep.subr.mxu0 0.0
    %4272 = vmatpush1.msra.mxu0 0.0
    %4273 = vmatprep.subr.mxu0 0.0
    %4274 = vmatpush1.msra.mxu0 0.0
    %4275 = vmatprep.subr.mxu0 0.0
    %4276 = vmatpush1.msra.mxu0 0.0
    %4277 = vmatprep.subr.mxu0 0.0
    %4278 = vmatpush1.msra.mxu0 0.0
    %4279 = vmatprep.subr.mxu0 0.0
    %4280 = vmatpush1.msra.mxu0 0.0
    %4281 = vmatprep.subr.mxu0 0.0
    %4282 = vmatpush1.msra.mxu0 0.0
    %4283 = vmatprep.subr.mxu0 0.0
    %4284 = vmatpush1.msra.mxu0 0.0
    %4285 = vmatprep.subr.mxu0 0.0
    %4286 = vmatpush1.msra.mxu0 0.0
    %4287 = vmatprep.subr.mxu0 0.0
    %4288 = vmatpush1.msra.mxu0 0.0
    %4289 = vmatprep.subr.mxu0 0.0
    %4290 = vmatpush1.msra.mxu0 0.0
    %4291 = vmatprep.subr.mxu0 0.0
    %4292 = vmatpush1.msra.mxu0 0.0
    %4293 = vmatprep.subr.mxu0 0.0
    %4294 = vmatpush1.msra.mxu0 0.0
    %4295 = vmatprep.subr.mxu0 0.0
    %4296 = vmatpush1.msra.mxu0 0.0
    %4297 = vmatprep.subr.mxu0 0.0
    %4298 = vmatpush1.msra.mxu0 0.0
    %4299 = vmatprep.subr.mxu0 0.0
    %4300 = vmatpush1.msra.mxu0 0.0
    %4301 = vmatprep.subr.mxu0 0.0
    %4302 = vmatpush1.msra.mxu0 0.0
    %4303 = vmatprep.subr.mxu0 0.0
    %4304 = vmatpush1.msra.mxu0 0.0
    %4305 = vmatprep.subr.mxu0 0.0
    %4306 = vmatpush1.msra.mxu0 0.0
    %4307 = vmatprep.subr.mxu0 0.0
    %4308 = vmatpush1.msra.mxu0 0.0
    %4309 = vmatprep.mubr.f32.mxu0 0.0
    %4310 = vmatmul.mubr.f32.gmra.mrb[0].mxu0 %v4234
    %v4311 = vpop.f32.mrb[0].mxu0
    %v4312 = vadd.f32 %v4215, %v4311
    %v4313 = vpop.f32.mrb[0].mxu0
    %4314 = vmatprep.mubr.f32.mxu0 0.0
    %4315 = vmatmul.mubr.f32.gmra.mrb[0].mxu0 %v4237
    %v4316 = vpop.f32.mrb[0].mxu0
    %v4317 = vadd.f32 %v4220, %v4316
    %v4318 = vpop.f32.mrb[0].mxu0
    %4319 = vmatprep.mubr.f32.mxu0 0.0
    %4320 = vmatmul.mubr.f32.gmra.mrb[0].mxu0 %v4240
    %v4321 = vpop.f32.mrb[0].mxu0
    %v4322 = vadd.f32 %v4225, %v4321
    %v4323 = vpop.f32.mrb[0].mxu0
    %4324 = vmatprep.mubr.f32.mxu0 0.0
    %4325 = vmatmul.mubr.f32.gmra.mrb[0].mxu0 %v4243
    %v4326 = vpop.f32.mrb[0].mxu0
    %v4327 = vadd.f32 %v4230, %v4326
    %v4328 = vpop.f32.mrb[0].mxu0
    %4329 = vdwg.mxu0
    %v4330 = vadd.f32 %v4312, %v926
    %v4331 = vadd.f32 %v4317, %v926
    %v4332 = vadd.f32 %v4322, %v926
    %v4333 = vadd.f32 %v4327, %v926
    %v4334 = vxor.u32 %v4330, 2147483648
    %v4335 = vxor.u32 %v4331, 2147483648
    %v4336 = vxor.u32 %v4332, 2147483648
    %v4337 = vxor.u32 %v4333, 2147483648
    %v4338 = vmul.f32 %v4334, 1.442695
    %v4339 = vpow.pop %v4338
    %v4340 = vmul.f32 %v4335, 1.442695
    %v4341 = vpow.pop %v4340
    %v4342 = vmul.f32 %v4336, 1.442695
    %v4343 = vpow.pop %v4342
    %v4344 = vmul.f32 %v4337, 1.442695
    %v4345 = vpow.pop %v4344
    %v4346 = vadd.f32 %v4339, 1.0
    %v4347 = vadd.f32 %v4341, 1.0
    %v4348 = vadd.f32 %v4343, 1.0
    %v4349 = vadd.f32 %v4345, 1.0
    %v4350 = vrcp.pop %v4346
    %v4351 = vmul.f32 1.0, %v4350
    %v4352 = vrcp.pop %v4347
    %v4353 = vmul.f32 1.0, %v4352
    %v4354 = vrcp.pop %v4348
    %v4355 = vmul.f32 1.0, %v4354
    %v4356 = vrcp.pop %v4349
    %v4357 = vmul.f32 1.0, %v4356
    %4362 = vrot.lane.b32.xlu0 %v4330, 32
    %v4363 = vpop.permute.xlu0 %4362
    %4364 = vrot.lane.b32.xlu0 %v4331, 32
    %v4365 = vpop.permute.xlu0 %4364
    %4366 = vrot.lane.b32.xlu0 %v4332, 32
    %v4367 = vpop.permute.xlu0 %4366
    %4368 = vrot.lane.b32.xlu0 %v4333, 32
    %v4369 = vpop.permute.xlu0 %4368
    %v4374 = vmul.f32 %v4351, %v4363
    %v4375 = vmul.f32 %v4353, %v4365
    %v4376 = vmul.f32 %v4355, %v4367
    %v4377 = vmul.f32 %v4357, %v4369
    %4382 = vrot.lane.b32.xlu0 %v4374, 64
    %v4383 = vpop.permute.xlu0 %4382
    %4384 = vrot.lane.b32.xlu0 %v4375, 64
    %v4385 = vpop.permute.xlu0 %4384
    %4386 = vrot.lane.b32.xlu0 %v4376, 64
    %v4387 = vpop.permute.xlu0 %4386
    %4388 = vrot.lane.b32.xlu0 %v4377, 64
    %v4389 = vpop.permute.xlu0 %4388
    %v4394 = vadd.f32 %v4330, %v4383
    %v4395 = vadd.f32 %v4331, %v4385
    %v4396 = vadd.f32 %v4332, %v4387
    %v4397 = vadd.f32 %v4333, %v4389
    %v4398 = vtanh.pop %v4394
    %v4399 = vtanh.pop %v4395
    %v4400 = vtanh.pop %v4396
    %v4401 = vtanh.pop %v4397
    %v4402 = vsub.f32 1.0, %v4351
    %v4403 = vsub.f32 1.0, %v4353
    %v4404 = vsub.f32 1.0, %v4355
    %v4405 = vsub.f32 1.0, %v4357
    %4410 = vrot.lane.b32.xlu0 %v4398, 96
    %v4411 = vpop.permute.xlu0 %4410
    %4412 = vrot.lane.b32.xlu0 %v4399, 96
    %v4413 = vpop.permute.xlu0 %4412
    %4414 = vrot.lane.b32.xlu0 %v4400, 96
    %v4415 = vpop.permute.xlu0 %4414
    %4416 = vrot.lane.b32.xlu0 %v4401, 96
    %v4417 = vpop.permute.xlu0 %4416
    %v4422 = vmul.f32 %v4402, %v4411
    %v4423 = vmul.f32 %v4403, %v4413
    %v4424 = vmul.f32 %v4404, %v4415
    %v4425 = vmul.f32 %v4405, %v4417
    %v4426 = vmul.f32 %v4351, %v3752
    %v4427 = vmul.f32 %v4353, %v3753
    %v4428 = vmul.f32 %v4355, %v3754
    %v4429 = vmul.f32 %v4357, %v3755
    %v4430 = vadd.f32 %v4422, %v4426
    %v4431 = vadd.f32 %v4423, %v4427
    %v4432 = vadd.f32 %v4424, %v4428
    %v4433 = vadd.f32 %v4425, %v4429
    %v4434 = vmul.f32 %v4430, %v220
    %v4435 = vmul.f32 %v4431, %v225
    %v4436 = vmul.f32 %v4432, %v230
    %v4437 = vmul.f32 %v4433, %v235
    %4442 = vrot.lane.b32.xlu0 %v4434, 96
    %v4443 = vpop.permute.xlu0 %4442
    %4444 = vrot.lane.b32.xlu0 %v4435, 96
    %v4445 = vpop.permute.xlu0 %4444
    %4446 = vrot.lane.b32.xlu0 %v4436, 96
    %v4447 = vpop.permute.xlu0 %4446
    %4448 = vrot.lane.b32.xlu0 %v4437, 96
    %v4449 = vpop.permute.xlu0 %4448
    %4458 = vrot.lane.b32.xlu0 %v237, 64
    %v4459 = vpop.permute.xlu0 %4458
    %4460 = vrot.lane.b32.xlu0 %v238, 64
    %v4461 = vpop.permute.xlu0 %4460
    %4462 = vrot.lane.b32.xlu0 %v239, 64
    %v4463 = vpop.permute.xlu0 %4462
    %4464 = vrot.lane.b32.xlu0 %v240, 64
    %v4465 = vpop.permute.xlu0 %4464
    %v4470 = vsel %vm319, %v4443, %v4434
    %v4471 = vsel %vm319, %v4445, %v4435
    %v4472 = vsel %vm319, %v4447, %v4436
    %v4473 = vsel %vm319, %v4449, %v4437
    %vm4474 = vcmask 523264
    %v4475 = vsel %vm4474, %v4470, %v4459
    %v4476 = vsel %vm4474, %v4471, %v4461
    %v4477 = vsel %vm4474, %v4472, %v4463
    %v4478 = vsel %vm4474, %v4473, %v4465
    %v4479 = vld [vmem:[#allocation10] sm:$0xff]
    %v4480 = vld [vmem:[#allocation10 + $0x8] sm:$0xff]
    %v4481 = vld [vmem:[#allocation10 + $0x10] sm:$0xff]
    %v4482 = vld [vmem:[#allocation10 + $0x18] sm:$0xff]
    %v4483 = vld [vmem:[#allocation10 + $0x20] sm:$0xff]
    %v4484 = vld [vmem:[#allocation10 + $0x28] sm:$0xff]
    %v4485 = vld [vmem:[#allocation10 + $0x30] sm:$0xff]
    %v4486 = vld [vmem:[#allocation10 + $0x38] sm:$0xff]
    %v4487 = vld [vmem:[#allocation10 + $0x40] sm:$0xff]
    %v4488 = vld [vmem:[#allocation10 + $0x48] sm:$0xff]
    %s4489 = scalar_lea.vmem [#allocation10], 80
    %v4490 = vld [vmem:[%s4489] sm:$0xff]
    %v4491 = vld [vmem:[%s4489 + $0x8] sm:$0xff]
    %v4492 = vld [vmem:[%s4489 + $0x10] sm:$0xff]
    %v4493 = vld [vmem:[%s4489 + $0x18] sm:$0xff]
    %v4494 = vld [vmem:[%s4489 + $0x20] sm:$0xff]
    %v4495 = vld [vmem:[%s4489 + $0x28] sm:$0xff]
    %v4496 = vld [vmem:[%s4489 + $0x30] sm:$0xff]
    %v4497 = vld [vmem:[%s4489 + $0x38] sm:$0xff]
    %v4498 = vld [vmem:[%s4489 + $0x40] sm:$0xff]
    %v4499 = vld [vmem:[%s4489 + $0x48] sm:$0xff]
    %vm4504 = vcmask 1046528
    %v4505 = vrot.slane %v4475, 1
    %v4506 = vrot.slane %v4476, 1
    %v4507 = vsel %vm4504, %v4505, %v4506
    %v4508 = vrot.slane %v4477, 1
    %v4509 = vsel %vm4504, %v4506, %v4508
    %v4510 = vrot.slane %v4478, 1
    %v4511 = vsel %vm4504, %v4508, %v4510
    %vm4512 = vcmask 654336
    %v4513 = vsel %vm4512, %v4507, 0
    %v4515 = vsel %vm4512, %v4509, 0
    %v4517 = vsel %vm4512, %v4511, 0
    %v4519 = vsel %vm4512, %v4510, 0
    %4521 = vmatprep.subr.mxu0 0.0
    %4522 = vmatpush1.msra.mxu0 %v4490
    %4523 = vmatprep.subr.mxu0 0.0
    %4524 = vmatpush1.msra.mxu0 %v4491
    %4525 = vmatprep.subr.mxu0 0.0
    %4526 = vmatpush1.msra.mxu0 %v4492
    %4527 = vmatprep.subr.mxu0 0.0
    %4528 = vmatpush1.msra.mxu0 %v4493
    %4529 = vmatprep.subr.mxu0 0.0
    %4530 = vmatpush1.msra.mxu0 %v4494
    %4531 = vmatprep.subr.mxu0 0.0
    %4532 = vmatpush1.msra.mxu0 %v4495
    %4533 = vmatprep.subr.mxu0 0.0
    %4534 = vmatpush1.msra.mxu0 %v4496
    %4535 = vmatprep.subr.mxu0 0.0
    %4536 = vmatpush1.msra.mxu0 %v4497
    %4537 = vmatprep.subr.mxu0 0.0
    %4538 = vmatpush1.msra.mxu0 %v4498
    %4539 = vmatprep.subr.mxu0 0.0
    %4540 = vmatpush1.msra.mxu0 %v4499
    %4541 = vmatprep.subr.mxu0 0.0
    %4542 = vmatpush1.msra.mxu0 0.0
    %4543 = vmatprep.subr.mxu0 0.0
    %4544 = vmatpush1.msra.mxu0 0.0
    %4545 = vmatprep.subr.mxu0 0.0
    %4546 = vmatpush1.msra.mxu0 0.0
    %4547 = vmatprep.subr.mxu0 0.0
    %4548 = vmatpush1.msra.mxu0 0.0
    %4549 = vmatprep.subr.mxu0 0.0
    %4550 = vmatpush1.msra.mxu0 0.0
    %4551 = vmatprep.subr.mxu0 0.0
    %4552 = vmatpush1.msra.mxu0 0.0
    %4553 = vmatprep.subr.mxu0 0.0
    %4554 = vmatpush1.msra.mxu0 0.0
    %4555 = vmatprep.subr.mxu0 0.0
    %4556 = vmatpush1.msra.mxu0 0.0
    %4557 = vmatprep.subr.mxu0 0.0
    %4558 = vmatpush1.msra.mxu0 0.0
    %4559 = vmatprep.subr.mxu0 0.0
    %4560 = vmatpush1.msra.mxu0 0.0
    %4561 = vmatprep.subr.mxu0 0.0
    %4562 = vmatpush1.msra.mxu0 0.0
    %4563 = vmatprep.subr.mxu0 0.0
    %4564 = vmatpush1.msra.mxu0 0.0
    %4565 = vmatprep.subr.mxu0 0.0
    %4566 = vmatpush1.msra.mxu0 0.0
    %4567 = vmatprep.subr.mxu0 0.0
    %4568 = vmatpush1.msra.mxu0 0.0
    %4569 = vmatprep.subr.mxu0 0.0
    %4570 = vmatpush1.msra.mxu0 0.0
    %4571 = vmatprep.subr.mxu0 0.0
    %4572 = vmatpush1.msra.mxu0 0.0
    %4573 = vmatprep.subr.mxu0 0.0
    %4574 = vmatpush1.msra.mxu0 0.0
    %4575 = vmatprep.subr.mxu0 0.0
    %4576 = vmatpush1.msra.mxu0 0.0
    %4577 = vmatprep.subr.mxu0 0.0
    %4578 = vmatpush1.msra.mxu0 0.0
    %4579 = vmatprep.subr.mxu0 0.0
    %4580 = vmatpush1.msra.mxu0 0.0
    %4581 = vmatprep.subr.mxu0 0.0
    %4582 = vmatpush1.msra.mxu0 0.0
    %4583 = vmatprep.subr.mxu0 0.0
    %4584 = vmatpush1.msra.mxu0 0.0
    %4585 = vmatprep.mubr.f32.mxu0 0.0
    %4586 = vmatmul.mubr.f32.gmra.mrb[0].mxu0 %v4513
    %v4587 = vpop.f32.mrb[0].mxu0
    %v4588 = vadd.f32 0.0, %v4587
    %v4589 = vpop.f32.mrb[0].mxu0
    %4590 = vmatprep.mubr.f32.mxu0 0.0
    %4591 = vmatmul.mubr.f32.gmra.mrb[0].mxu0 %v4515
    %v4592 = vpop.f32.mrb[0].mxu0
    %v4593 = vadd.f32 0.0, %v4592
    %v4594 = vpop.f32.mrb[0].mxu0
    %4595 = vmatprep.mubr.f32.mxu0 0.0
    %4596 = vmatmul.mubr.f32.gmra.mrb[0].mxu0 %v4517
    %v4597 = vpop.f32.mrb[0].mxu0
    %v4598 = vadd.f32 0.0, %v4597
    %v4599 = vpop.f32.mrb[0].mxu0
    %4600 = vmatprep.mubr.f32.mxu0 0.0
    %4601 = vmatmul.mubr.f32.gmra.mrb[0].mxu0 %v4519
    %v4602 = vpop.f32.mrb[0].mxu0
    %v4603 = vadd.f32 0.0, %v4602
    %v4604 = vpop.f32.mrb[0].mxu0
    %4605 = vdwg.mxu0
    %v4606 = vsel %vm4512, %v4475, 0
    %v4608 = vsel %vm4512, %v4476, 0
    %v4610 = vsel %vm4512, %v4477, 0
    %v4612 = vsel %vm4512, %v4478, 0
    %4614 = vmatprep.subr.mxu0 0.0
    %4615 = vmatpush1.msra.mxu0 %v4479
    %4616 = vmatprep.subr.mxu0 0.0
    %4617 = vmatpush1.msra.mxu0 %v4480
    %4618 = vmatprep.subr.mxu0 0.0
    %4619 = vmatpush1.msra.mxu0 %v4481
    %4620 = vmatprep.subr.mxu0 0.0
    %4621 = vmatpush1.msra.mxu0 %v4482
    %4622 = vmatprep.subr.mxu0 0.0
    %4623 = vmatpush1.msra.mxu0 %v4483
    %4624 = vmatprep.subr.mxu0 0.0
    %4625 = vmatpush1.msra.mxu0 %v4484
    %4626 = vmatprep.subr.mxu0 0.0
    %4627 = vmatpush1.msra.mxu0 %v4485
    %4628 = vmatprep.subr.mxu0 0.0
    %4629 = vmatpush1.msra.mxu0 %v4486
    %4630 = vmatprep.subr.mxu0 0.0
    %4631 = vmatpush1.msra.mxu0 %v4487
    %4632 = vmatprep.subr.mxu0 0.0
    %4633 = vmatpush1.msra.mxu0 %v4488
    %4634 = vmatprep.subr.mxu0 0.0
    %4635 = vmatpush1.msra.mxu0 0.0
    %4636 = vmatprep.subr.mxu0 0.0
    %4637 = vmatpush1.msra.mxu0 0.0
    %4638 = vmatprep.subr.mxu0 0.0
    %4639 = vmatpush1.msra.mxu0 0.0
    %4640 = vmatprep.subr.mxu0 0.0
    %4641 = vmatpush1.msra.mxu0 0.0
    %4642 = vmatprep.subr.mxu0 0.0
    %4643 = vmatpush1.msra.mxu0 0.0
    %4644 = vmatprep.subr.mxu0 0.0
    %4645 = vmatpush1.msra.mxu0 0.0
    %4646 = vmatprep.subr.mxu0 0.0
    %4647 = vmatpush1.msra.mxu0 0.0
    %4648 = vmatprep.subr.mxu0 0.0
    %4649 = vmatpush1.msra.mxu0 0.0
    %4650 = vmatprep.subr.mxu0 0.0
    %4651 = vmatpush1.msra.mxu0 0.0
    %4652 = vmatprep.subr.mxu0 0.0
    %4653 = vmatpush1.msra.mxu0 0.0
    %4654 = vmatprep.subr.mxu0 0.0
    %4655 = vmatpush1.msra.mxu0 0.0
    %4656 = vmatprep.subr.mxu0 0.0
    %4657 = vmatpush1.msra.mxu0 0.0
    %4658 = vmatprep.subr.mxu0 0.0
    %4659 = vmatpush1.msra.mxu0 0.0
    %4660 = vmatprep.subr.mxu0 0.0
    %4661 = vmatpush1.msra.mxu0 0.0
    %4662 = vmatprep.subr.mxu0 0.0
    %4663 = vmatpush1.msra.mxu0 0.0
    %4664 = vmatprep.subr.mxu0 0.0
    %4665 = vmatpush1.msra.mxu0 0.0
    %4666 = vmatprep.subr.mxu0 0.0
    %4667 = vmatpush1.msra.mxu0 0.0
    %4668 = vmatprep.subr.mxu0 0.0
    %4669 = vmatpush1.msra.mxu0 0.0
    %4670 = vmatprep.subr.mxu0 0.0
    %4671 = vmatpush1.msra.mxu0 0.0
    %4672 = vmatprep.subr.mxu0 0.0
    %4673 = vmatpush1.msra.mxu0 0.0
    %4674 = vmatprep.subr.mxu0 0.0
    %4675 = vmatpush1.msra.mxu0 0.0
    %4676 = vmatprep.subr.mxu0 0.0
    %4677 = vmatpush1.msra.mxu0 0.0
    %4678 = vmatprep.mubr.f32.mxu0 0.0
    %4679 = vmatmul.mubr.f32.gmra.mrb[0].mxu0 %v4606
    %v4680 = vpop.f32.mrb[0].mxu0
    %v4681 = vadd.f32 %v4588, %v4680
    %v4682 = vpop.f32.mrb[0].mxu0
    %4683 = vmatprep.mubr.f32.mxu0 0.0
    %4684 = vmatmul.mubr.f32.gmra.mrb[0].mxu0 %v4608
    %v4685 = vpop.f32.mrb[0].mxu0
    %v4686 = vadd.f32 %v4593, %v4685
    %v4687 = vpop.f32.mrb[0].mxu0
    %4688 = vmatprep.mubr.f32.mxu0 0.0
    %4689 = vmatmul.mubr.f32.gmra.mrb[0].mxu0 %v4610
    %v4690 = vpop.f32.mrb[0].mxu0
    %v4691 = vadd.f32 %v4598, %v4690
    %v4692 = vpop.f32.mrb[0].mxu0
    %4693 = vmatprep.mubr.f32.mxu0 0.0
    %4694 = vmatmul.mubr.f32.gmra.mrb[0].mxu0 %v4612
    %v4695 = vpop.f32.mrb[0].mxu0
    %v4696 = vadd.f32 %v4603, %v4695
    %v4697 = vpop.f32.mrb[0].mxu0
    %4698 = vdwg.mxu0
    %s4699 = scalar_lea.vmem [#allocation10], 160
    %v4700 = vld [vmem:[%s4699] sm:$0xff]
    %v4701 = vld [vmem:[%s4699 + $0x8] sm:$0xff]
    %v4702 = vld [vmem:[%s4699 + $0x10] sm:$0xff]
    %v4703 = vld [vmem:[%s4699 + $0x18] sm:$0xff]
    %v4704 = vld [vmem:[%s4699 + $0x20] sm:$0xff]
    %v4705 = vld [vmem:[%s4699 + $0x28] sm:$0xff]
    %v4706 = vld [vmem:[%s4699 + $0x30] sm:$0xff]
    %v4707 = vld [vmem:[%s4699 + $0x38] sm:$0xff]
    %v4708 = vld [vmem:[%s4699 + $0x40] sm:$0xff]
    %v4709 = vld [vmem:[%s4699 + $0x48] sm:$0xff]
    %vm4710 = vcmask 1045504
    %v4711 = vrot.slane %v4475, 2
    %v4712 = vrot.slane %v4476, 2
    %v4713 = vsel %vm4710, %v4711, %v4712
    %v4714 = vrot.slane %v4477, 2
    %v4715 = vsel %vm4710, %v4712, %v4714
    %v4716 = vrot.slane %v4478, 2
    %v4717 = vsel %vm4710, %v4714, %v4716
    %v4718 = vsel %vm4512, %v4713, 0
    %v4720 = vsel %vm4512, %v4715, 0
    %v4722 = vsel %vm4512, %v4717, 0
    %v4724 = vsel %vm4512, %v4716, 0
    %4726 = vmatprep.subr.mxu0 0.0
    %4727 = vmatpush1.msra.mxu0 %v4700
    %4728 = vmatprep.subr.mxu0 0.0
    %4729 = vmatpush1.msra.mxu0 %v4701
    %4730 = vmatprep.subr.mxu0 0.0
    %4731 = vmatpush1.msra.mxu0 %v4702
    %4732 = vmatprep.subr.mxu0 0.0
    %4733 = vmatpush1.msra.mxu0 %v4703
    %4734 = vmatprep.subr.mxu0 0.0
    %4735 = vmatpush1.msra.mxu0 %v4704
    %4736 = vmatprep.subr.mxu0 0.0
    %4737 = vmatpush1.msra.mxu0 %v4705
    %4738 = vmatprep.subr.mxu0 0.0
    %4739 = vmatpush1.msra.mxu0 %v4706
    %4740 = vmatprep.subr.mxu0 0.0
    %4741 = vmatpush1.msra.mxu0 %v4707
    %4742 = vmatprep.subr.mxu0 0.0
    %4743 = vmatpush1.msra.mxu0 %v4708
    %4744 = vmatprep.subr.mxu0 0.0
    %4745 = vmatpush1.msra.mxu0 %v4709
    %4746 = vmatprep.subr.mxu0 0.0
    %4747 = vmatpush1.msra.mxu0 0.0
    %4748 = vmatprep.subr.mxu0 0.0
    %4749 = vmatpush1.msra.mxu0 0.0
    %4750 = vmatprep.subr.mxu0 0.0
    %4751 = vmatpush1.msra.mxu0 0.0
    %4752 = vmatprep.subr.mxu0 0.0
    %4753 = vmatpush1.msra.mxu0 0.0
    %4754 = vmatprep.subr.mxu0 0.0
    %4755 = vmatpush1.msra.mxu0 0.0
    %4756 = vmatprep.subr.mxu0 0.0
    %4757 = vmatpush1.msra.mxu0 0.0
    %4758 = vmatprep.subr.mxu0 0.0
    %4759 = vmatpush1.msra.mxu0 0.0
    %4760 = vmatprep.subr.mxu0 0.0
    %4761 = vmatpush1.msra.mxu0 0.0
    %4762 = vmatprep.subr.mxu0 0.0
    %4763 = vmatpush1.msra.mxu0 0.0
    %4764 = vmatprep.subr.mxu0 0.0
    %4765 = vmatpush1.msra.mxu0 0.0
    %4766 = vmatprep.subr.mxu0 0.0
    %4767 = vmatpush1.msra.mxu0 0.0
    %4768 = vmatprep.subr.mxu0 0.0
    %4769 = vmatpush1.msra.mxu0 0.0
    %4770 = vmatprep.subr.mxu0 0.0
    %4771 = vmatpush1.msra.mxu0 0.0
    %4772 = vmatprep.subr.mxu0 0.0
    %4773 = vmatpush1.msra.mxu0 0.0
    %4774 = vmatprep.subr.mxu0 0.0
    %4775 = vmatpush1.msra.mxu0 0.0
    %4776 = vmatprep.subr.mxu0 0.0
    %4777 = vmatpush1.msra.mxu0 0.0
    %4778 = vmatprep.subr.mxu0 0.0
    %4779 = vmatpush1.msra.mxu0 0.0
    %4780 = vmatprep.subr.mxu0 0.0
    %4781 = vmatpush1.msra.mxu0 0.0
    %4782 = vmatprep.subr.mxu0 0.0
    %4783 = vmatpush1.msra.mxu0 0.0
    %4784 = vmatprep.subr.mxu0 0.0
    %4785 = vmatpush1.msra.mxu0 0.0
    %4786 = vmatprep.subr.mxu0 0.0
    %4787 = vmatpush1.msra.mxu0 0.0
    %4788 = vmatprep.subr.mxu0 0.0
    %4789 = vmatpush1.msra.mxu0 0.0
    %4790 = vmatprep.mubr.f32.mxu0 0.0
    %4791 = vmatmul.mubr.f32.gmra.mrb[0].mxu0 %v4718
    %v4792 = vpop.f32.mrb[0].mxu0
    %v4793 = vadd.f32 0.0, %v4792
    %v4794 = vpop.f32.mrb[0].mxu0
    %4795 = vmatprep.mubr.f32.mxu0 0.0
    %4796 = vmatmul.mubr.f32.gmra.mrb[0].mxu0 %v4720
    %v4797 = vpop.f32.mrb[0].mxu0
    %v4798 = vadd.f32 0.0, %v4797
    %v4799 = vpop.f32.mrb[0].mxu0
    %4800 = vmatprep.mubr.f32.mxu0 0.0
    %4801 = vmatmul.mubr.f32.gmra.mrb[0].mxu0 %v4722
    %v4802 = vpop.f32.mrb[0].mxu0
    %v4803 = vadd.f32 0.0, %v4802
    %v4804 = vpop.f32.mrb[0].mxu0
    %4805 = vmatprep.mubr.f32.mxu0 0.0
    %4806 = vmatmul.mubr.f32.gmra.mrb[0].mxu0 %v4724
    %v4807 = vpop.f32.mrb[0].mxu0
    %v4808 = vadd.f32 0.0, %v4807
    %v4809 = vpop.f32.mrb[0].mxu0
    %4810 = vdwg.mxu0
    %v4811 = vadd.f32 %v4681, %v4793
    %v4812 = vadd.f32 %v4686, %v4798
    %v4813 = vadd.f32 %v4691, %v4803
    %v4814 = vadd.f32 %v4696, %v4808
    %v4815 = vld [vmem:[#allocation11] sm:$0x1]
    %v4817 = vlaneseq
    %v4818 = vshrl.u32 %v4817, 7
    %v4819 = vsub.s32 0, %v4818
    %v4820 = vrot.slane %v4815, %v4819
    %v4822 = vadd.f32 %v4811, %v4820
    %v4823 = vadd.f32 %v4812, %v4820
    %v4824 = vadd.f32 %v4813, %v4820
    %v4825 = vadd.f32 %v4814, %v4820
    %v4826 = vmax.f32 %v4822, 0.0
    %v4827 = vmax.f32 %v4823, 0.0
    %v4828 = vmax.f32 %v4824, 0.0
    %v4829 = vmax.f32 %v4825, 0.0
    %v4834 = vrot.slane %v4826, 1
    %v4835 = vrot.slane %v4827, 1
    %v4836 = vsel %vm4504, %v4834, %v4835
    %v4837 = vrot.slane %v4828, 1
    %v4838 = vsel %vm4504, %v4835, %v4837
    %v4839 = vrot.slane %v4829, 1
    %v4840 = vsel %vm4504, %v4837, %v4839
    %v4845 = vmax.f32 %v4826, %v4836
    %v4846 = vmax.f32 %v4827, %v4838
    %v4847 = vmax.f32 %v4828, %v4840
    %v4848 = vmax.f32 %v4829, %v4839
    %v4849 = vrot.slane %v4826, 2
    %v4850 = vrot.slane %v4827, 2
    %v4851 = vsel %vm4710, %v4849, %v4850
    %v4852 = vrot.slane %v4828, 2
    %v4853 = vsel %vm4710, %v4850, %v4852
    %v4854 = vrot.slane %v4829, 2
    %v4855 = vsel %vm4710, %v4852, %v4854
    %v4860 = vmax.f32 %v4845, %v4851
    %v4861 = vmax.f32 %v4846, %v4853
    %v4862 = vmax.f32 %v4847, %v4855
    %v4863 = vmax.f32 %v4848, %v4854
    %v4864 = vld [vmem:[#allocation17] sm:$0xff]
    %v4865 = vld [vmem:[#allocation17 + $0x8] sm:$0xf]
    %vm4866 = vcmask 228352
    %v4868 = vsel %vm4866, %v4864, 0
    %v4871 = vsel %vm4866, %v4865, 0
    %vm4873 = vcmask 1043456
    %v4875 = vsel %vm4873, %v4863, 0
    %4877 = vmatprep.subr.mxu0 0.0
    %4878 = vmatpush1.msra.mxu0 %v4860
    %4879 = vmatprep.subr.mxu0 0.0
    %4880 = vmatpush1.msra.mxu0 %v4861
    %4881 = vmatprep.subr.mxu0 0.0
    %4882 = vmatpush1.msra.mxu0 %v4862
    %4883 = vmatprep.subr.mxu0 0.0
    %4884 = vmatpush1.msra.mxu0 %v4875
    %4885 = vmatprep.subr.mxu0 0.0
    %4886 = vmatpush1.msra.mxu0 0.0
    %4887 = vmatprep.subr.mxu0 0.0
    %4888 = vmatpush1.msra.mxu0 0.0
    %4889 = vmatprep.subr.mxu0 0.0
    %4890 = vmatpush1.msra.mxu0 0.0
    %4891 = vmatprep.subr.mxu0 0.0
    %4892 = vmatpush1.msra.mxu0 0.0
    %4893 = vmatprep.subr.mxu0 0.0
    %4894 = vmatpush1.msra.mxu0 0.0
    %4895 = vmatprep.subr.mxu0 0.0
    %4896 = vmatpush1.msra.mxu0 0.0
    %4897 = vmatprep.subr.mxu0 0.0
    %4898 = vmatpush1.msra.mxu0 0.0
    %4899 = vmatprep.subr.mxu0 0.0
    %4900 = vmatpush1.msra.mxu0 0.0
    %4901 = vmatprep.subr.mxu0 0.0
    %4902 = vmatpush1.msra.mxu0 0.0
    %4903 = vmatprep.subr.mxu0 0.0
    %4904 = vmatpush1.msra.mxu0 0.0
    %4905 = vmatprep.subr.mxu0 0.0
    %4906 = vmatpush1.msra.mxu0 0.0
    %4907 = vmatprep.subr.mxu0 0.0
    %4908 = vmatpush1.msra.mxu0 0.0
    %4909 = vmatprep.subr.mxu0 0.0
    %4910 = vmatpush1.msra.mxu0 0.0
    %4911 = vmatprep.subr.mxu0 0.0
    %4912 = vmatpush1.msra.mxu0 0.0
    %4913 = vmatprep.subr.mxu0 0.0
    %4914 = vmatpush1.msra.mxu0 0.0
    %4915 = vmatprep.subr.mxu0 0.0
    %4916 = vmatpush1.msra.mxu0 0.0
    %4917 = vmatprep.subr.mxu0 0.0
    %4918 = vmatpush1.msra.mxu0 0.0
    %4919 = vmatprep.subr.mxu0 0.0
    %4920 = vmatpush1.msra.mxu0 0.0
    %4921 = vmatprep.subr.mxu0 0.0
    %4922 = vmatpush1.msra.mxu0 0.0
    %4923 = vmatprep.subr.mxu0 0.0
    %4924 = vmatpush1.msra.mxu0 0.0
    %4925 = vmatprep.subr.mxu0 0.0
    %4926 = vmatpush1.msra.mxu0 0.0
    %4927 = vmatprep.subr.mxu0 0.0
    %4928 = vmatpush1.msra.mxu0 0.0
    %4929 = vmatprep.subr.mxu0 0.0
    %4930 = vmatpush1.msra.mxu0 0.0
    %4931 = vmatprep.subr.mxu0 0.0
    %4932 = vmatpush1.msra.mxu0 0.0
    %4933 = vmatprep.subr.mxu0 0.0
    %4934 = vmatpush1.msra.mxu0 0.0
    %4935 = vmatprep.subr.mxu0 0.0
    %4936 = vmatpush1.msra.mxu0 0.0
    %4937 = vmatprep.subr.mxu0 0.0
    %4938 = vmatpush1.msra.mxu0 0.0
    %4939 = vmatprep.subr.mxu0 0.0
    %4940 = vmatpush1.msra.mxu0 0.0
    %4941 = vmatprep.mubr.f32.mxu0 0.0
    %4942 = vmatmul.mubr.f32.gmra.mrb[0].mxu0 %v4868
    %v4943 = vpop.f32.mrb[0].mxu0
    %v4944 = vadd.f32 0.0, %v4943
    %v4945 = vpop.f32.mrb[0].mxu0
    %4946 = vmatprep.mubr.f32.mxu0 0.0
    %4947 = vmatmul.mubr.f32.gmra.mrb[0].mxu0 %v4871
    %v4948 = vpop.f32.mrb[0].mxu0
    %v4949 = vadd.f32 0.0, %v4948
    %v4950 = vpop.f32.mrb[0].mxu0
    %4951 = vdwg.mxu0
    %v4952 = vld [vmem:[#allocation13] sm:$0xff]
    %v4953 = vld [vmem:[#allocation13 + $0x8] sm:$0xff]
    %v4954 = vld [vmem:[#allocation13 + $0x10] sm:$0xff]
    %v4955 = vld [vmem:[#allocation13 + $0x18] sm:$0xff]
    %v4956 = vld [vmem:[#allocation13 + $0x20] sm:$0xff]
    %v4957 = vld [vmem:[#allocation13 + $0x28] sm:$0xff]
    %v4958 = vld [vmem:[#allocation13 + $0x30] sm:$0xff]
    %v4959 = vld [vmem:[#allocation13 + $0x38] sm:$0xff]
    %v4960 = vld [vmem:[#allocation13 + $0x40] sm:$0xff]
    %v4961 = vld [vmem:[#allocation13 + $0x48] sm:$0xff]
    %v4962 = vld [vmem:[#allocation14] sm:$0x1]
    %v4964 = vlaneseq
    %v4965 = vshrl.u32 %v4964, 7
    %v4966 = vsub.s32 0, %v4965
    %v4967 = vrot.slane %v4962, %v4966
    %v4970 = vsel %vm4512, %v4944, 0
    %v4973 = vsel %vm4512, %v4949, 0
    %4975 = vmatprep.subr.mxu0 0.0
    %4976 = vmatpush1.msra.mxu0 %v4952
    %4977 = vmatprep.subr.mxu0 0.0
    %4978 = vmatpush1.msra.mxu0 %v4953
    %4979 = vmatprep.subr.mxu0 0.0
    %4980 = vmatpush1.msra.mxu0 %v4954
    %4981 = vmatprep.subr.mxu0 0.0
    %4982 = vmatpush1.msra.mxu0 %v4955
    %4983 = vmatprep.subr.mxu0 0.0
    %4984 = vmatpush1.msra.mxu0 %v4956
    %4985 = vmatprep.subr.mxu0 0.0
    %4986 = vmatpush1.msra.mxu0 %v4957
    %4987 = vmatprep.subr.mxu0 0.0
    %4988 = vmatpush1.msra.mxu0 %v4958
    %4989 = vmatprep.subr.mxu0 0.0
    %4990 = vmatpush1.msra.mxu0 %v4959
    %4991 = vmatprep.subr.mxu0 0.0
    %4992 = vmatpush1.msra.mxu0 %v4960
    %4993 = vmatprep.subr.mxu0 0.0
    %4994 = vmatpush1.msra.mxu0 %v4961
    %4995 = vmatprep.subr.mxu0 0.0
    %4996 = vmatpush1.msra.mxu0 0.0
    %4997 = vmatprep.subr.mxu0 0.0
    %4998 = vmatpush1.msra.mxu0 0.0
    %4999 = vmatprep.subr.mxu0 0.0
    %5000 = vmatpush1.msra.mxu0 0.0
    %5001 = vmatprep.subr.mxu0 0.0
    %5002 = vmatpush1.msra.mxu0 0.0
    %5003 = vmatprep.subr.mxu0 0.0
    %5004 = vmatpush1.msra.mxu0 0.0
    %5005 = vmatprep.subr.mxu0 0.0
    %5006 = vmatpush1.msra.mxu0 0.0
    %5007 = vmatprep.subr.mxu0 0.0
    %5008 = vmatpush1.msra.mxu0 0.0
    %5009 = vmatprep.subr.mxu0 0.0
    %5010 = vmatpush1.msra.mxu0 0.0
    %5011 = vmatprep.subr.mxu0 0.0
    %5012 = vmatpush1.msra.mxu0 0.0
    %5013 = vmatprep.subr.mxu0 0.0
    %5014 = vmatpush1.msra.mxu0 0.0
    %5015 = vmatprep.subr.mxu0 0.0
    %5016 = vmatpush1.msra.mxu0 0.0
    %5017 = vmatprep.subr.mxu0 0.0
    %5018 = vmatpush1.msra.mxu0 0.0
    %5019 = vmatprep.subr.mxu0 0.0
    %5020 = vmatpush1.msra.mxu0 0.0
    %5021 = vmatprep.subr.mxu0 0.0
    %5022 = vmatpush1.msra.mxu0 0.0
    %5023 = vmatprep.subr.mxu0 0.0
    %5024 = vmatpush1.msra.mxu0 0.0
    %5025 = vmatprep.subr.mxu0 0.0
    %5026 = vmatpush1.msra.mxu0 0.0
    %5027 = vmatprep.subr.mxu0 0.0
    %5028 = vmatpush1.msra.mxu0 0.0
    %5029 = vmatprep.subr.mxu0 0.0
    %5030 = vmatpush1.msra.mxu0 0.0
    %5031 = vmatprep.subr.mxu0 0.0
    %5032 = vmatpush1.msra.mxu0 0.0
    %5033 = vmatprep.subr.mxu0 0.0
    %5034 = vmatpush1.msra.mxu0 0.0
    %5035 = vmatprep.subr.mxu0 0.0
    %5036 = vmatpush1.msra.mxu0 0.0
    %5037 = vmatprep.subr.mxu0 0.0
    %5038 = vmatpush1.msra.mxu0 0.0
    %5039 = vmatprep.mubr.f32.mxu0 0.0
    %5040 = vmatmul.mubr.f32.gmra.mrb[0].mxu0 %v4970
    %v5041 = vpop.f32.mrb[0].mxu0
    %v5042 = vadd.f32 %v4967, %v5041
    %v5043 = vpop.f32.mrb[0].mxu0
    %5044 = vmatprep.mubr.f32.mxu0 0.0
    %5045 = vmatmul.mubr.f32.gmra.mrb[0].mxu0 %v4973
    %v5046 = vpop.f32.mrb[0].mxu0
    %v5047 = vadd.f32 %v4967, %v5046
    %v5048 = vpop.f32.mrb[0].mxu0
    %5049 = vdwg.mxu0
    %v5050 = vmax.f32 %v5042, 0.0
    %v5051 = vmax.f32 %v5047, 0.0
    %v5054 = vrot.slane %v5050, 1
    %v5055 = vrot.slane %v5051, 1
    %v5056 = vsel %vm4504, %v5054, %v5055
    %v5059 = vmax.f32 %v5050, %v5056
    %v5060 = vmax.f32 %v5051, %v5055
    %v5061 = vld [vmem:[#allocation19] sm:$0x3f]
    %vm5062 = vcmask 89088
    %v5064 = vsel %vm5062, %v5061, 0
    %vm5066 = vcmask 1042432
    %v5068 = vsel %vm5066, %v5060, 0
    %5070 = vmatprep.subr.mxu0 0.0
    %5071 = vmatpush1.msra.mxu0 %v5059
    %5072 = vmatprep.subr.mxu0 0.0
    %5073 = vmatpush1.msra.mxu0 %v5068
    %5074 = vmatprep.subr.mxu0 0.0
    %5075 = vmatpush1.msra.mxu0 0.0
    %5076 = vmatprep.subr.mxu0 0.0
    %5077 = vmatpush1.msra.mxu0 0.0
    %5078 = vmatprep.subr.mxu0 0.0
    %5079 = vmatpush1.msra.mxu0 0.0
    %5080 = vmatprep.subr.mxu0 0.0
    %5081 = vmatpush1.msra.mxu0 0.0
    %5082 = vmatprep.subr.mxu0 0.0
    %5083 = vmatpush1.msra.mxu0 0.0
    %5084 = vmatprep.subr.mxu0 0.0
    %5085 = vmatpush1.msra.mxu0 0.0
    %5086 = vmatprep.subr.mxu0 0.0
    %5087 = vmatpush1.msra.mxu0 0.0
    %5088 = vmatprep.subr.mxu0 0.0
    %5089 = vmatpush1.msra.mxu0 0.0
    %5090 = vmatprep.subr.mxu0 0.0
    %5091 = vmatpush1.msra.mxu0 0.0
    %5092 = vmatprep.subr.mxu0 0.0
    %5093 = vmatpush1.msra.mxu0 0.0
    %5094 = vmatprep.subr.mxu0 0.0
    %5095 = vmatpush1.msra.mxu0 0.0
    %5096 = vmatprep.subr.mxu0 0.0
    %5097 = vmatpush1.msra.mxu0 0.0
    %5098 = vmatprep.subr.mxu0 0.0
    %5099 = vmatpush1.msra.mxu0 0.0
    %5100 = vmatprep.subr.mxu0 0.0
    %5101 = vmatpush1.msra.mxu0 0.0
    %5102 = vmatprep.subr.mxu0 0.0
    %5103 = vmatpush1.msra.mxu0 0.0
    %5104 = vmatprep.subr.mxu0 0.0
    %5105 = vmatpush1.msra.mxu0 0.0
    %5106 = vmatprep.subr.mxu0 0.0
    %5107 = vmatpush1.msra.mxu0 0.0
    %5108 = vmatprep.subr.mxu0 0.0
    %5109 = vmatpush1.msra.mxu0 0.0
    %5110 = vmatprep.subr.mxu0 0.0
    %5111 = vmatpush1.msra.mxu0 0.0
    %5112 = vmatprep.subr.mxu0 0.0
    %5113 = vmatpush1.msra.mxu0 0.0
    %5114 = vmatprep.subr.mxu0 0.0
    %5115 = vmatpush1.msra.mxu0 0.0
    %5116 = vmatprep.subr.mxu0 0.0
    %5117 = vmatpush1.msra.mxu0 0.0
    %5118 = vmatprep.subr.mxu0 0.0
    %5119 = vmatpush1.msra.mxu0 0.0
    %5120 = vmatprep.subr.mxu0 0.0
    %5121 = vmatpush1.msra.mxu0 0.0
    %5122 = vmatprep.subr.mxu0 0.0
    %5123 = vmatpush1.msra.mxu0 0.0
    %5124 = vmatprep.subr.mxu0 0.0
    %5125 = vmatpush1.msra.mxu0 0.0
    %5126 = vmatprep.subr.mxu0 0.0
    %5127 = vmatpush1.msra.mxu0 0.0
    %5128 = vmatprep.subr.mxu0 0.0
    %5129 = vmatpush1.msra.mxu0 0.0
    %5130 = vmatprep.subr.mxu0 0.0
    %5131 = vmatpush1.msra.mxu0 0.0
    %5132 = vmatprep.subr.mxu0 0.0
    %5133 = vmatpush1.msra.mxu0 0.0
    %5134 = vmatprep.mubr.f32.mxu0 0.0
    %5135 = vmatmul.mubr.f32.gmra.mrb[0].mxu0 %v5064
    %v5136 = vpop.f32.mrb[0].mxu0
    %v5137 = vadd.f32 0.0, %v5136
    %v5138 = vpop.f32.mrb[0].mxu0
    %5139 = vdwg.mxu0
    %v5140 = vld [vmem:[%s12] sm:$0xff]
    %v5141 = vld [vmem:[%s12 + $0x8] sm:$0xff]
    %v5142 = vld [vmem:[%s12 + $0x10] sm:$0xff]
    %v5143 = vld [vmem:[%s12 + $0x18] sm:$0xff]
    %v5144 = vld [vmem:[%s12 + $0x20] sm:$0xff]
    %v5145 = vld [vmem:[%s12 + $0x28] sm:$0xff]
    %v5146 = vld [vmem:[%s12 + $0x30] sm:$0xff]
    %v5147 = vld [vmem:[%s12 + $0x38] sm:$0xff]
    %v5148 = vld [vmem:[%s12 + $0x40] sm:$0xff]
    %v5149 = vld [vmem:[%s12 + $0x48] sm:$0xff]
    %v5150 = vld [vmem:[#allocation16] sm:$0x1]
    %v5152 = vlaneseq
    %v5153 = vshrl.u32 %v5152, 7
    %v5154 = vsub.s32 0, %v5153
    %v5155 = vrot.slane %v5150, %v5154
    %v5158 = vsel %vm4512, %v5137, 0
    %5160 = vmatprep.subr.mxu0 0.0
    %5161 = vmatpush1.msra.mxu0 %v5140
    %5162 = vmatprep.subr.mxu0 0.0
    %5163 = vmatpush1.msra.mxu0 %v5141
    %5164 = vmatprep.subr.mxu0 0.0
    %5165 = vmatpush1.msra.mxu0 %v5142
    %5166 = vmatprep.subr.mxu0 0.0
    %5167 = vmatpush1.msra.mxu0 %v5143
    %5168 = vmatprep.subr.mxu0 0.0
    %5169 = vmatpush1.msra.mxu0 %v5144
    %5170 = vmatprep.subr.mxu0 0.0
    %5171 = vmatpush1.msra.mxu0 %v5145
    %5172 = vmatprep.subr.mxu0 0.0
    %5173 = vmatpush1.msra.mxu0 %v5146
    %5174 = vmatprep.subr.mxu0 0.0
    %5175 = vmatpush1.msra.mxu0 %v5147
    %5176 = vmatprep.subr.mxu0 0.0
    %5177 = vmatpush1.msra.mxu0 %v5148
    %5178 = vmatprep.subr.mxu0 0.0
    %5179 = vmatpush1.msra.mxu0 %v5149
    %5180 = vmatprep.subr.mxu0 0.0
    %5181 = vmatpush1.msra.mxu0 0.0
    %5182 = vmatprep.subr.mxu0 0.0
    %5183 = vmatpush1.msra.mxu0 0.0
    %5184 = vmatprep.subr.mxu0 0.0
    %5185 = vmatpush1.msra.mxu0 0.0
    %5186 = vmatprep.subr.mxu0 0.0
    %5187 = vmatpush1.msra.mxu0 0.0
    %5188 = vmatprep.subr.mxu0 0.0
    %5189 = vmatpush1.msra.mxu0 0.0
    %5190 = vmatprep.subr.mxu0 0.0
    %5191 = vmatpush1.msra.mxu0 0.0
    %5192 = vmatprep.subr.mxu0 0.0
    %5193 = vmatpush1.msra.mxu0 0.0
    %5194 = vmatprep.subr.mxu0 0.0
    %5195 = vmatpush1.msra.mxu0 0.0
    %5196 = vmatprep.subr.mxu0 0.0
    %5197 = vmatpush1.msra.mxu0 0.0
    %5198 = vmatprep.subr.mxu0 0.0
    %5199 = vmatpush1.msra.mxu0 0.0
    %5200 = vmatprep.subr.mxu0 0.0
    %5201 = vmatpush1.msra.mxu0 0.0
    %5202 = vmatprep.subr.mxu0 0.0
    %5203 = vmatpush1.msra.mxu0 0.0
    %5204 = vmatprep.subr.mxu0 0.0
    %5205 = vmatpush1.msra.mxu0 0.0
    %5206 = vmatprep.subr.mxu0 0.0
    %5207 = vmatpush1.msra.mxu0 0.0
    %5208 = vmatprep.subr.mxu0 0.0
    %5209 = vmatpush1.msra.mxu0 0.0
    %5210 = vmatprep.subr.mxu0 0.0
    %5211 = vmatpush1.msra.mxu0 0.0
    %5212 = vmatprep.subr.mxu0 0.0
    %5213 = vmatpush1.msra.mxu0 0.0
    %5214 = vmatprep.subr.mxu0 0.0
    %5215 = vmatpush1.msra.mxu0 0.0
    %5216 = vmatprep.subr.mxu0 0.0
    %5217 = vmatpush1.msra.mxu0 0.0
    %5218 = vmatprep.subr.mxu0 0.0
    %5219 = vmatpush1.msra.mxu0 0.0
    %5220 = vmatprep.subr.mxu0 0.0
    %5221 = vmatpush1.msra.mxu0 0.0
    %5222 = vmatprep.subr.mxu0 0.0
    %5223 = vmatpush1.msra.mxu0 0.0
    %5224 = vmatprep.mubr.f32.mxu0 0.0
    %5225 = vmatmul.mubr.f32.gmra.mrb[0].mxu0 %v5158
    %v5226 = vpop.f32.mrb[0].mxu0
    %v5227 = vadd.f32 %v5155, %v5226
    %v5228 = vpop.f32.mrb[0].mxu0
    %5229 = vdwg.mxu0
    %5231 = vrot.lane.b32.xlu0 %v5227, 127
    %v5232 = vpop.permute.xlu0 %5231
    %v5234 = vmul.f32 %v5227, %v5232
    %v5235 = vld [vmem:[#allocation20] sm:$0x3]
    %vm5236 = vcmask 48128
    %v5238 = vsel %vm5236, %v5235, 0
    %v5240 = vsel %vm4710, %v5137, 0
    %5242 = vmatprep.subr.mxu0 0.0
    %5243 = vmatpush1.msra.mxu0 %v5240
    %5244 = vmatprep.subr.mxu0 0.0
    %5245 = vmatpush1.msra.mxu0 0.0
    %5246 = vmatprep.subr.mxu0 0.0
    %5247 = vmatpush1.msra.mxu0 0.0
    %5248 = vmatprep.subr.mxu0 0.0
    %5249 = vmatpush1.msra.mxu0 0.0
    %5250 = vmatprep.subr.mxu0 0.0
    %5251 = vmatpush1.msra.mxu0 0.0
    %5252 = vmatprep.subr.mxu0 0.0
    %5253 = vmatpush1.msra.mxu0 0.0
    %5254 = vmatprep.subr.mxu0 0.0
    %5255 = vmatpush1.msra.mxu0 0.0
    %5256 = vmatprep.subr.mxu0 0.0
    %5257 = vmatpush1.msra.mxu0 0.0
    %5258 = vmatprep.subr.mxu0 0.0
    %5259 = vmatpush1.msra.mxu0 0.0
    %5260 = vmatprep.subr.mxu0 0.0
    %5261 = vmatpush1.msra.mxu0 0.0
    %5262 = vmatprep.subr.mxu0 0.0
    %5263 = vmatpush1.msra.mxu0 0.0
    %5264 = vmatprep.subr.mxu0 0.0
    %5265 = vmatpush1.msra.mxu0 0.0
    %5266 = vmatprep.subr.mxu0 0.0
    %5267 = vmatpush1.msra.mxu0 0.0
    %5268 = vmatprep.subr.mxu0 0.0
    %5269 = vmatpush1.msra.mxu0 0.0
    %5270 = vmatprep.subr.mxu0 0.0
    %5271 = vmatpush1.msra.mxu0 0.0
    %5272 = vmatprep.subr.mxu0 0.0
    %5273 = vmatpush1.msra.mxu0 0.0
    %5274 = vmatprep.subr.mxu0 0.0
    %5275 = vmatpush1.msra.mxu0 0.0
    %5276 = vmatprep.subr.mxu0 0.0
    %5277 = vmatpush1.msra.mxu0 0.0
    %5278 = vmatprep.subr.mxu0 0.0
    %5279 = vmatpush1.msra.mxu0 0.0
    %5280 = vmatprep.subr.mxu0 0.0
    %5281 = vmatpush1.msra.mxu0 0.0
    %5282 = vmatprep.subr.mxu0 0.0
    %5283 = vmatpush1.msra.mxu0 0.0
    %5284 = vmatprep.subr.mxu0 0.0
    %5285 = vmatpush1.msra.mxu0 0.0
    %5286 = vmatprep.subr.mxu0 0.0
    %5287 = vmatpush1.msra.mxu0 0.0
    %5288 = vmatprep.subr.mxu0 0.0
    %5289 = vmatpush1.msra.mxu0 0.0
    %5290 = vmatprep.subr.mxu0 0.0
    %5291 = vmatpush1.msra.mxu0 0.0
    %5292 = vmatprep.subr.mxu0 0.0
    %5293 = vmatpush1.msra.mxu0 0.0
    %5294 = vmatprep.subr.mxu0 0.0
    %5295 = vmatpush1.msra.mxu0 0.0
    %5296 = vmatprep.subr.mxu0 0.0
    %5297 = vmatpush1.msra.mxu0 0.0
    %5298 = vmatprep.subr.mxu0 0.0
    %5299 = vmatpush1.msra.mxu0 0.0
    %5300 = vmatprep.subr.mxu0 0.0
    %5301 = vmatpush1.msra.mxu0 0.0
    %5302 = vmatprep.subr.mxu0 0.0
    %5303 = vmatpush1.msra.mxu0 0.0
    %5304 = vmatprep.subr.mxu0 0.0
    %5305 = vmatpush1.msra.mxu0 0.0
    %5306 = vmatprep.mubr.f32.mxu0 0.0
    %5307 = vmatmul.mubr.f32.gmra.mrb[0].mxu0 %v5238
    %v5308 = vpop.f32.mrb[0].mxu0
    %v5309 = vadd.f32 0.0, %v5308
    %v5310 = vpop.f32.mrb[0].mxu0
    %5311 = vdwg.mxu0
    %vm5312 = vcmask 648192
    %5313 = vst.msk [vmem:[#allocation22] sm:$0x3] %vm5312, %v5309
    %v5315 = vsel %vm4710, %v5234, 0
    %5317 = vmatprep.subr.mxu0 0.0
    %5318 = vmatpush1.msra.mxu0 %v5315
    %5319 = vmatprep.subr.mxu0 0.0
    %5320 = vmatpush1.msra.mxu0 0.0
    %5321 = vmatprep.subr.mxu0 0.0
    %5322 = vmatpush1.msra.mxu0 0.0
    %5323 = vmatprep.subr.mxu0 0.0
    %5324 = vmatpush1.msra.mxu0 0.0
    %5325 = vmatprep.subr.mxu0 0.0
    %5326 = vmatpush1.msra.mxu0 0.0
    %5327 = vmatprep.subr.mxu0 0.0
    %5328 = vmatpush1.msra.mxu0 0.0
    %5329 = vmatprep.subr.mxu0 0.0
    %5330 = vmatpush1.msra.mxu0 0.0
    %5331 = vmatprep.subr.mxu0 0.0
    %5332 = vmatpush1.msra.mxu0 0.0
    %5333 = vmatprep.subr.mxu0 0.0
    %5334 = vmatpush1.msra.mxu0 0.0
    %5335 = vmatprep.subr.mxu0 0.0
    %5336 = vmatpush1.msra.mxu0 0.0
    %5337 = vmatprep.subr.mxu0 0.0
    %5338 = vmatpush1.msra.mxu0 0.0
    %5339 = vmatprep.subr.mxu0 0.0
    %5340 = vmatpush1.msra.mxu0 0.0
    %5341 = vmatprep.subr.mxu0 0.0
    %5342 = vmatpush1.msra.mxu0 0.0
    %5343 = vmatprep.subr.mxu0 0.0
    %5344 = vmatpush1.msra.mxu0 0.0
    %5345 = vmatprep.subr.mxu0 0.0
    %5346 = vmatpush1.msra.mxu0 0.0
    %5347 = vmatprep.subr.mxu0 0.0
    %5348 = vmatpush1.msra.mxu0 0.0
    %5349 = vmatprep.subr.mxu0 0.0
    %5350 = vmatpush1.msra.mxu0 0.0
    %5351 = vmatprep.subr.mxu0 0.0
    %5352 = vmatpush1.msra.mxu0 0.0
    %5353 = vmatprep.subr.mxu0 0.0
    %5354 = vmatpush1.msra.mxu0 0.0
    %5355 = vmatprep.subr.mxu0 0.0
    %5356 = vmatpush1.msra.mxu0 0.0
    %5357 = vmatprep.subr.mxu0 0.0
    %5358 = vmatpush1.msra.mxu0 0.0
    %5359 = vmatprep.subr.mxu0 0.0
    %5360 = vmatpush1.msra.mxu0 0.0
    %5361 = vmatprep.subr.mxu0 0.0
    %5362 = vmatpush1.msra.mxu0 0.0
    %5363 = vmatprep.subr.mxu0 0.0
    %5364 = vmatpush1.msra.mxu0 0.0
    %5365 = vmatprep.subr.mxu0 0.0
    %5366 = vmatpush1.msra.mxu0 0.0
    %5367 = vmatprep.subr.mxu0 0.0
    %5368 = vmatpush1.msra.mxu0 0.0
    %5369 = vmatprep.subr.mxu0 0.0
    %5370 = vmatpush1.msra.mxu0 0.0
    %5371 = vmatprep.subr.mxu0 0.0
    %5372 = vmatpush1.msra.mxu0 0.0
    %5373 = vmatprep.subr.mxu0 0.0
    %5374 = vmatpush1.msra.mxu0 0.0
    %5375 = vmatprep.subr.mxu0 0.0
    %5376 = vmatpush1.msra.mxu0 0.0
    %5377 = vmatprep.subr.mxu0 0.0
    %5378 = vmatpush1.msra.mxu0 0.0
    %5379 = vmatprep.subr.mxu0 0.0
    %5380 = vmatpush1.msra.mxu0 0.0
    %5381 = vmatprep.mubr.f32.mxu0 0.0
    %5382 = vmatmul.mubr.f32.gmra.mrb[0].mxu0 %v5238
    %v5383 = vpop.f32.mrb[0].mxu0
    %v5384 = vadd.f32 0.0, %v5383
    %v5385 = vpop.f32.mrb[0].mxu0
    %5386 = vdwg.mxu0
    %v5387 = vmul.f32 %v5384, 0.33333334
    %vm5388 = vcmask 1024
    %5389 = vst.msk [vmem:[%s18] sm:$0x3] %vm5388, %v5387
    %v5390 = vxor.u32 %v5387, 2147483648
    %v5391 = vmul.f32 %v5390, 1.442695
    %v5392 = vpow.pop %v5391
    %v5393 = vadd.f32 %v5392, 1.0
    %v5394 = vrcp.pop %v5393
    %v5395 = vmul.f32 1.0, %v5394
    %5396 = vst.msk [vmem:[%s17] sm:$0x3] %vm5388, %v5395
    // Predicated region
    $region118: #{devign_forward.1} parent=1 // pred_check
      _
    $region119: #{devign_forward.1} parent=1 // pred_check_branch
      %5398 = sbr.rel (0) target = $region121
    $region120: #{devign_forward.1} parent=1 // pred_region
      _
    $region121: #{devign_forward.1} parent=1 // pred_fallthru
      _
    // Predicated region
    $region122: #{devign_forward.1} parent=1 // pred_check
      _
    $region123: #{devign_forward.1} parent=1 // pred_check_branch
      %5400 = sbr.rel (0) target = $region125
    $region124: #{devign_forward.1} parent=1 // pred_region
      _
    $region125: #{devign_forward.1} parent=1 // pred_fallthru
      _
    // Predicated region
    $region126: #{devign_forward.1} parent=1 // pred_check
      _
    $region127: #{devign_forward.1} parent=1 // pred_check_branch
      %5402 = sbr.rel (0) target = $region129
    $region128: #{devign_forward.1} parent=1 // pred_region
      %s5404 = ssub.s32 32, 32
      %5405 = vsyncadd [#allocation4], %s5404
      %s5407 = sshll.u32 [#allocation22], 4
      %s5408 = int_to_ptr.vmem [resolvable:$true] %s5407
      %5410 = dma.vmem_to_hbm [thread:$0]  %s5408, 32, %s19, [#allocation4]
    $region129: #{devign_forward.1} parent=1 // pred_fallthru
      _
    // Predicated region
    $region130: #{devign_forward.1} parent=1 // pred_check
      _
    $region131: #{devign_forward.1} parent=1 // pred_check_branch
      %5412 = sbr.rel (0) target = $region133
    $region132: #{devign_forward.1} parent=1 // pred_region
      _
    $region133: #{devign_forward.1} parent=1 // pred_fallthru
      _
    // Predicated region
    $region134: #{devign_forward.1} parent=1 // pred_check
      _
    $region135: #{devign_forward.1} parent=1 // pred_check_branch
      %5414 = sbr.rel (0) target = $region137
    $region136: #{devign_forward.1} parent=1 // pred_region
      _
    $region137: #{devign_forward.1} parent=1 // pred_fallthru
      _
    // Predicated region
    $region138: #{devign_forward.1} parent=1 // pred_check
      _
    $region139: #{devign_forward.1} parent=1 // pred_check_branch
      %5416 = sbr.rel (0) target = $region141
    $region140: #{devign_forward.1} parent=1 // pred_region
      %5417 = dma.done [#allocation4], 32
    $region141: #{devign_forward.1} parent=1 // pred_fallthru
      _
    %5418 = vsyncpa [#allocation3], 1
    %5419 = vsyncpa [#allocation6], 1
    %5420 = vsyncpa [#allocation9], 1
    %5421 = vsyncpa [#allocation12], 1
    %5422 = vsyncpa [#allocation15], 1
    %5423 = vsyncpa [#allocation18], 1
    %5424 = vsyncpa [#allocation21], 1
    %5425 = vsyncpa [#allocation4], 1

</llo_original>
